<compile_context>
chip_gen: v6e
topology: v6e:2x2x1
jax: 0.10.0
libtpu: 0.0.40
codegen_flags: <defaults>
</compile_context>

<pallas_src>
import functools

import jax
import jax.numpy as jnp
from jax import lax
from jax.experimental import pallas as pl
from jax.experimental.pallas import tpu as pltpu


def _pick_batch_block(B, H, T):
    """Batch block size: full B when the state fits; else a multiple of 8 dividing B."""
    budget = 40 << 20                               # per-core state budget (v7x-safe)
    per_b = 4 * (H * H + 2 * T * H + 8 * H)         # hebb + pre/hactiv rows + hidden
    if B * per_b <= budget or B % 8 != 0 or B <= 8:
        return B
    bb = min(B, max(8, (budget // per_b) // 8 * 8))
    while B % bb:
        bb -= 8
    return bb


def _plastic_rnn_kernel(T, bb, unroll,
                        pre_ref, h0_ref, hebb0_hbm,
                        wrT_ref, alpha_ref, wda_ref, bda_ref,
                        hact_ref, hid_ref, hebb_ref,
                        dma_sem):
    b = pl.program_id(0)

    # Seed resident state. hebb0 stays in HBM (memory_space=pl.ANY): one DMA
    # straight into the resident output block -> a single VMEM copy of the trace.
    hid_ref[...] = h0_ref[...]
    cp = pltpu.make_async_copy(hebb0_hbm.at[pl.ds(b * bb, bb)], hebb_ref, dma_sem)
    cp.start()
    cp.wait()

    # Loop-invariant weights, hoisted once (tiny next to the trace).
    wrT = wrT_ref[...]           # (H, H)  shared recurrent weight, transposed
    alpha = alpha_ref[...]       # (H, H)  plasticity coefficients
    wda = wda_ref[...]           # (1, H)  DA head weights (channel 0)
    bda = bda_ref[...]           # (1, 1)  DA head bias    (channel 0)

    def step(t, carry):
        hidden = hid_ref[...]                               # (bb, H)
        hebb = hebb_ref[...]                                # (bb, H, H)

        # Recurrent term, split: shared weight on the MXU, plastic part on VPU/XLU;
        # the (bb, H, H) matrix w + alpha*hebb is never materialized.
        rec_w = jnp.dot(hidden, wrT, preferred_element_type=jnp.float32)
        rec_p = jnp.sum((alpha[None, :, :] * hebb) * hidden[:, None, :], axis=-1)
        hactiv = jnp.tanh(pre_ref[t] + rec_w + rec_p)       # (bb, H)
        hact_ref[t] = hactiv                                # lane-dense resident slab

        # DA head on the VPU/XLU: a (bb,H)x(H,1) matvec would waste the MXU and
        # put its result-pop latency directly on the hebb-update critical path.
        da = jnp.tanh(jnp.sum(hactiv * wda, axis=-1, keepdims=True) + bda)  # (bb, 1)

        # Hebbian trace update with the modulator folded into hactiv first.
        # TODO(synk): NBDA > 1 has no well-defined rule in the torch module (its
        # DAout.view(B,1,1) requires NBDA == 1); only channel 0 modulates here.
        hebb_ref[...] = jnp.clip(
            hebb + (da * hactiv)[:, :, None] * hidden[:, None, :], -1.0, 1.0)
        hid_ref[...] = hactiv
        return carry

    lax.fori_loop(0, T, step, 0, unroll=unroll)


def plastic_rnn_rollout(xs, hidden0, hebb0, p):
    """Run T plastic-RNN steps.

    xs: (T, B, I); hidden0: (B, H); hebb0: (B, H, H).
    Returns (activout (T,B,O), valueout (T,B,1), (hidden_T, hebb_T)).
    """
    T, B, I = xs.shape
    H = hidden0.shape[1]
    O = p["w_h2o"].shape[1]

    # --- hoisted out of the recurrent loop: one big, well-shaped MXU matmul ------
    pre_all = (xs.reshape(T * B, I) @ p["w_i2h"] + p["b_i2h"]).reshape(T, B, H)
    wrT = p["w"].T                                        # (H, H)
    wda = p["w_h2da"][:, 0].reshape(1, H)                 # DA channel-0 weights
    bda = p["b_h2da"][:, 0].reshape(1, 1)                 # DA channel-0 bias

    bb = _pick_batch_block(B, H, T)
    grid = (B // bb,)
    unroll = True if T <= 32 else 8

    # Resident per-grid-step footprint (f32): pre + hactiv slabs, one hebb copy,
    # small weights; + margin.  Keep under the 64 MiB/TC budget on v7x.
    vmem_bytes = 4 * (4 * T * bb * H + 2 * bb * H * H + 4 * H * H + 8 * bb * H) + (4 << 20)
    vmem_limit = int(min(max(vmem_bytes, 32 << 20), 100 << 20))

    kernel = functools.partial(_plastic_rnn_kernel, T, bb, unroll)

    out_shapes = (
        jax.ShapeDtypeStruct((T, B, H), jnp.float32),     # hactiv for every step
        jax.ShapeDtypeStruct((B, H), jnp.float32),        # hidden_T
        jax.ShapeDtypeStruct((B, H, H), jnp.float32),     # hebb_T
    )
    in_specs = [
        pl.BlockSpec((T, bb, H), lambda b: (0, b, 0)),    # pre-activation slab
        pl.BlockSpec((bb, H), lambda b: (b, 0)),          # hidden0
        pl.BlockSpec(memory_space=pl.ANY),                # hebb0 stays in HBM
        pl.BlockSpec((H, H), lambda b: (0, 0)),           # w.T
        pl.BlockSpec((H, H), lambda b: (0, 0)),           # alpha
        pl.BlockSpec((1, H), lambda b: (0, 0)),           # DA head weights
        pl.BlockSpec((1, 1), lambda b: (0, 0)),           # DA head bias
    ]
    out_specs = (
        pl.BlockSpec((T, bb, H), lambda b: (0, b, 0)),    # resident hactiv slab
        pl.BlockSpec((bb, H), lambda b: (b, 0)),          # resident hidden
        pl.BlockSpec((bb, H, H), lambda b: (b, 0, 0)),    # resident hebb
    )

    hact_all, hidden_T, hebb_T = pl.pallas_call(
        kernel,
        out_shape=out_shapes,
        grid=grid,
        in_specs=in_specs,
        out_specs=out_specs,
        scratch_shapes=[pltpu.SemaphoreType.DMA(())],
        compiler_params=pltpu.CompilerParams(
            dimension_semantics=("parallel",),            # batch blocks independent
            vmem_limit_bytes=vmem_limit),
    )(pre_all, hidden0, hebb0, wrT, p["alpha"], wda, bda)

    # --- deferred output heads: one lane-dense matmul over all T*B rows ----------
    wh = jnp.concatenate([p["w_h2o"], p["w_h2v"]], axis=1)      # (H, O+1)
    bh = jnp.concatenate([p["b_h2o"], p["b_h2v"]], axis=1)      # (1, O+1)
    heads = (hact_all.reshape(T * B, H) @ wh + bh).reshape(T, B, O + 1)
    return heads[..., :O], heads[..., O:O + 1], (hidden_T, hebb_T)


def plastic_rnn_forward(x, hidden, hebb, p):
    """Single-step API matching the torch module's forward signature."""
    a, v, cache = plastic_rnn_rollout(x[None], hidden, hebb, p)
    return a[0], v[0], cache


# ----------------------------- pure-JAX reference -----------------------------
def reference_forward(x, hidden, hebb, p):
    pre = x @ p["w_i2h"] + p["b_i2h"]
    M = p["w"][None] + p["alpha"][None] * hebb
    rec = jnp.einsum("bij,bj->bi", M, hidden)
    hactiv = jnp.tanh(pre + rec)
    activout = hactiv @ p["w_h2o"] + p["b_h2o"]
    valueout = hactiv @ p["w_h2v"] + p["b_h2v"]
    da = jnp.tanh(hactiv @ p["w_h2da"] + p["b_h2da"])
    delta = jnp.einsum("bi,bj->bij", hactiv, hidden)
    hebb_new = jnp.clip(hebb + da.reshape(-1, 1, 1) * delta, -1.0, 1.0)
    return activout, valueout, (hactiv, hebb_new)


def reference_rollout(xs, hidden, hebb, p):
    a_all, v_all = [], []
    for t in range(xs.shape[0]):
        a, v, (hidden, hebb) = reference_forward(xs[t], hidden, hebb, p)
        a_all.append(a)
        v_all.append(v)
    return jnp.stack(a_all), jnp.stack(v_all), (hidden, hebb)


if __name__ == "__main__":
    # Small shapes consistent with the module's forward (NBDA must be 1 in torch).
    T, B, I, H, O, NBDA = 8, 4, 8, 32, 4, 1

    key = jax.random.PRNGKey(0)
    ks = jax.random.split(key, 12)

    # Deterministic synthetic parameters (Linear weights stored as (in, out);
    # w/alpha as 0.01 * uniform(H, H) like the torch __init__).
    params = {
        "w_i2h":  jax.random.normal(ks[0], (I, H), jnp.float32) * 0.1,
        "b_i2h":  jax.random.normal(ks[1], (1, H), jnp.float32) * 0.1,
        "w":      0.01 * jax.random.uniform(ks[2], (H, H), jnp.float32),
        "alpha":  0.01 * jax.random.uniform(ks[3], (H, H), jnp.float32),
        "w_h2o":  jax.random.normal(ks[4], (H, O), jnp.float32) * 0.1,
        "b_h2o":  jax.random.normal(ks[5], (1, O), jnp.float32) * 0.1,
        "w_h2v":  jax.random.normal(ks[6], (H, 1), jnp.float32) * 0.1,
        "b_h2v":  jax.random.normal(ks[7], (1, 1), jnp.float32) * 0.1,
        "w_h2da": jax.random.normal(ks[8], (H, NBDA), jnp.float32) * 0.1,
        "b_h2da": jax.random.normal(ks[9], (1, NBDA), jnp.float32) * 0.1,
    }

    xs = jax.random.normal(ks[10], (T, B, I), jnp.float32)
    hidden0 = jnp.zeros((B, H), jnp.float32)
    hebb0 = jnp.zeros((B, H, H), jnp.float32)

    # Pure-JAX reference rollout.
    ra, rv, (rh, rheb) = reference_rollout(xs, hidden0, hebb0, params)

    # Pallas kernel rollout: whole recurrence inside one kernel, state in VMEM.
    a, v, (h, heb) = plastic_rnn_rollout(xs, hidden0, hebb0, params)
    jax.block_until_ready((a, v, h, heb))

    for got, want in [(a, ra), (v, rv), (h, rh), (heb, rheb)]:
        assert jnp.allclose(got, want, atol=2e-3, rtol=2e-3), "mismatch vs reference"

    # Single-step API (exactly the torch forward), continuing from the rollout state.
    a1, v1, (h1, heb1) = plastic_rnn_forward(xs[0], h, heb, params)
    jax.block_until_ready((a1, v1, h1, heb1))
    ra1, rv1, (rh1, rheb1) = reference_forward(xs[0], rh, rheb, params)
    for got, want in [(a1, ra1), (v1, rv1), (h1, rh1), (heb1, rheb1)]:
        assert jnp.allclose(got, want, atol=2e-3, rtol=2e-3), \
            "mismatch vs reference (single step)"

    print("KERNEL_OK")
</pallas_src>

<mosaic_0001>
module attributes {stable_mosaic.version = 11 : i64} {
  func.func @_plastic_rnn_kernel(%arg0: i32, %arg1: memref<8x4x32xf32, #tpu.memory_space<vmem>>, %arg2: memref<4x32xf32, #tpu.memory_space<vmem>>, %arg3: memref<4x32x32xf32, #tpu.memory_space<any>>, %arg4: memref<32x32xf32, #tpu.memory_space<vmem>>, %arg5: memref<32x32xf32, #tpu.memory_space<vmem>>, %arg6: memref<1x32xf32, #tpu.memory_space<vmem>>, %arg7: memref<1x1xf32, #tpu.memory_space<vmem>>, %arg8: memref<8x4x32xf32, #tpu.memory_space<vmem>>, %arg9: memref<4x32xf32, #tpu.memory_space<vmem>>, %arg10: memref<4x32x32xf32, #tpu.memory_space<vmem>>, %arg11: memref<!tpu.dma_semaphore, #tpu.memory_space<semaphore_mem>>) attributes {dimension_semantics = [#tpu.dimension_semantics<parallel>], iteration_bounds = array<i64: 1>, scalar_prefetch = 0 : i64, scratch_operands = 1 : i64, tpu.core_type = #tpu.core_type<tc>, window_params = [{transform_indices = @transform_0, window_bounds = array<i64: 8, 4, 32>}, {transform_indices = @transform_1, window_bounds = array<i64: 4, 32>}, {}, {pipeline_mode = #tpu.pipeline_mode<synchronous>, transform_indices = @transform_3, window_bounds = array<i64: 32, 32>}, {pipeline_mode = #tpu.pipeline_mode<synchronous>, transform_indices = @transform_4, window_bounds = array<i64: 32, 32>}, {pipeline_mode = #tpu.pipeline_mode<synchronous>, transform_indices = @transform_5, window_bounds = array<i64: 1, 32>}, {pipeline_mode = #tpu.pipeline_mode<synchronous>, transform_indices = @transform_6, window_bounds = array<i64: 1, 1>}, {transform_indices = @transform_7, window_bounds = array<i64: 8, 4, 32>}, {transform_indices = @transform_8, window_bounds = array<i64: 4, 32>}, {transform_indices = @transform_9, window_bounds = array<i64: 4, 32, 32>}]} {
    %c0 = arith.constant 0 : index
    %c0_0 = arith.constant 0 : index
    %0 = vector.load %arg2[%c0, %c0_0] : memref<4x32xf32, #tpu.memory_space<vmem>>, vector<4x32xf32>
    %c0_1 = arith.constant 0 : index
    %c0_2 = arith.constant 0 : index
    %1 = vector.load %arg9[%c0_1, %c0_2] : memref<4x32xf32, #tpu.memory_space<vmem>>, vector<4x32xf32>
    tpu.vector_store %arg9[%c0_1, %c0_2], %0 {strides = array<i32>} : memref<4x32xf32, #tpu.memory_space<vmem>>, vector<4x32xf32>,
    %c4_i32 = arith.constant 4 : i32
    %2 = arith.muli %arg0, %c4_i32 : i32
    %c0_i32 = arith.constant 0 : i32
    %c0_i32_3 = arith.constant 0 : i32
    %3 = tpu.memref_slice %arg3[%2, %c0_i32, %c0_i32_3] : memref<4x32x32xf32, #tpu.memory_space<any>> -> memref<4x32x32xf32, #tpu.memory_space<any>>
    tpu.enqueue_dma source(%3 : memref<4x32x32xf32, #tpu.memory_space<any>>) target(%arg10 : memref<4x32x32xf32, #tpu.memory_space<vmem>>) target_semaphore(%arg11 : memref<!tpu.dma_semaphore, #tpu.memory_space<semaphore_mem>>)
    %c0_i32_4 = arith.constant 0 : i32
    %c0_i32_5 = arith.constant 0 : i32
    %4 = tpu.memref_slice %arg3[%2, %c0_i32_4, %c0_i32_5] : memref<4x32x32xf32, #tpu.memory_space<any>> -> memref<4x32x32xf32, #tpu.memory_space<any>>
    tpu.wait_dma2 semaphore(%arg11 : memref<!tpu.dma_semaphore, #tpu.memory_space<semaphore_mem>>) src(%4 : memref<4x32x32xf32, #tpu.memory_space<any>>) dst(%arg10 : memref<4x32x32xf32, #tpu.memory_space<vmem>>)
    %c0_6 = arith.constant 0 : index
    %c0_7 = arith.constant 0 : index
    %5 = vector.load %arg4[%c0_6, %c0_7] : memref<32x32xf32, #tpu.memory_space<vmem>>, vector<32x32xf32>
    %c0_8 = arith.constant 0 : index
    %c0_9 = arith.constant 0 : index
    %6 = vector.load %arg5[%c0_8, %c0_9] : memref<32x32xf32, #tpu.memory_space<vmem>>, vector<32x32xf32>
    %c0_10 = arith.constant 0 : index
    %c0_11 = arith.constant 0 : index
    %7 = vector.load %arg6[%c0_10, %c0_11] : memref<1x32xf32, #tpu.memory_space<vmem>>, vector<1x32xf32>
    %c0_12 = arith.constant 0 : index
    %c0_13 = arith.constant 0 : index
    %8 = vector.load %arg7[%c0_12, %c0_13] : memref<1x1xf32, #tpu.memory_space<vmem>>, vector<1x1xf32>
    %c0_i32_14 = arith.constant 0 : i32
    %c0_15 = arith.constant 0 : index
    %c0_16 = arith.constant 0 : index
    %9 = vector.load %arg9[%c0_15, %c0_16] : memref<4x32xf32, #tpu.memory_space<vmem>>, vector<4x32xf32>
    %c0_17 = arith.constant 0 : index
    %c0_18 = arith.constant 0 : index
    %c0_19 = arith.constant 0 : index
    %10 = vector.load %arg10[%c0_17, %c0_18, %c0_19] : memref<4x32x32xf32, #tpu.memory_space<vmem>>, vector<4x32x32xf32>
    %cst = arith.constant dense<0.000000e+00> : vector<4x32xf32>
    %11 = tpu.matmul %9, %5, %cst {dimension_numbers = #tpu.dot_dimension_numbers<[1], [0], [0], [1], [0, 0, 1, 1], [], []>} : vector<4x32xf32>, vector<32x32xf32>, vector<4x32xf32> -> vector<4x32xf32>
    %12 = vector.shape_cast %6 : vector<32x32xf32> to vector<1x32x32xf32>
    %13 = vector.broadcast %12 : vector<1x32x32xf32> to vector<4x32x32xf32>
    %14 = arith.mulf %13, %10 : vector<4x32x32xf32>
    %15 = vector.shape_cast %9 : vector<4x32xf32> to vector<4x1x32xf32>
    %16 = vector.broadcast %15 : vector<4x1x32xf32> to vector<4x32x32xf32>
    %17 = arith.mulf %14, %16 : vector<4x32x32xf32>
    %cst_20 = arith.constant dense<0.000000e+00> : vector<4x32xf32>
    %18 = vector.multi_reduction <add>, %17, %cst_20 [2] : vector<4x32x32xf32> to vector<4x32xf32>
    %19 = arith.index_cast %c0_i32_14 : i32 to index
    %c0_21 = arith.constant 0 : index
    %c0_22 = arith.constant 0 : index
    %20 = vector.load %arg1[%19, %c0_21, %c0_22] : memref<8x4x32xf32, #tpu.memory_space<vmem>>, vector<1x4x32xf32>
    %21 = vector.shape_cast %20 : vector<1x4x32xf32> to vector<4x32xf32>
    %22 = arith.addf %21, %11 : vector<4x32xf32>
    %23 = arith.addf %22, %18 : vector<4x32xf32>
    %24 = math.tanh %23 : vector<4x32xf32>
    %25 = arith.index_cast %c0_i32_14 : i32 to index
    %c0_23 = arith.constant 0 : index
    %c0_24 = arith.constant 0 : index
    %26 = vector.load %arg8[%25, %c0_23, %c0_24] : memref<8x4x32xf32, #tpu.memory_space<vmem>>, vector<1x4x32xf32>
    %27 = vector.shape_cast %26 : vector<1x4x32xf32> to vector<4x32xf32>
    %28 = vector.shape_cast %24 : vector<4x32xf32> to vector<1x4x32xf32>
    tpu.vector_store %arg8[%25, %c0_23, %c0_24], %28 {strides = array<i32>} : memref<8x4x32xf32, #tpu.memory_space<vmem>>, vector<1x4x32xf32>,
    %29 = vector.broadcast %7 : vector<1x32xf32> to vector<4x32xf32>
    %30 = arith.mulf %24, %29 : vector<4x32xf32>
    %cst_25 = arith.constant dense<0.000000e+00> : vector<4xf32>
    %31 = vector.multi_reduction <add>, %30, %cst_25 [1] : vector<4x32xf32> to vector<4xf32>
    %32 = vector.shape_cast %31 : vector<4xf32> to vector<4x1xf32>
    %33 = vector.broadcast %8 : vector<1x1xf32> to vector<4x1xf32>
    %34 = arith.addf %32, %33 : vector<4x1xf32>
    %35 = math.tanh %34 : vector<4x1xf32>
    %36 = vector.broadcast %35 : vector<4x1xf32> to vector<4x32xf32>
    %37 = arith.mulf %36, %24 : vector<4x32xf32>
    %38 = vector.shape_cast %37 : vector<4x32xf32> to vector<4x32x1xf32>
    %39 = vector.shape_cast %9 : vector<4x32xf32> to vector<4x1x32xf32>
    %40 = vector.broadcast %38 : vector<4x32x1xf32> to vector<4x32x32xf32>
    %41 = vector.broadcast %39 : vector<4x1x32xf32> to vector<4x32x32xf32>
    %42 = arith.mulf %40, %41 : vector<4x32x32xf32>
    %43 = arith.addf %10, %42 : vector<4x32x32xf32>
    %cst_26 = arith.constant -1.000000e+00 : f32
    %cst_27 = arith.constant 1.000000e+00 : f32
    %44 = vector.broadcast %cst_26 : f32 to vector<4x32x32xf32>
    %45 = arith.maximumf %44, %43 : vector<4x32x32xf32>
    %46 = vector.broadcast %cst_27 : f32 to vector<4x32x32xf32>
    %47 = arith.minimumf %46, %45 : vector<4x32x32xf32>
    %c0_28 = arith.constant 0 : index
    %c0_29 = arith.constant 0 : index
    %c0_30 = arith.constant 0 : index
    %48 = vector.load %arg10[%c0_28, %c0_29, %c0_30] : memref<4x32x32xf32, #tpu.memory_space<vmem>>, vector<4x32x32xf32>
    tpu.vector_store %arg10[%c0_28, %c0_29, %c0_30], %47 {strides = array<i32>} : memref<4x32x32xf32, #tpu.memory_space<vmem>>, vector<4x32x32xf32>,
    %c0_31 = arith.constant 0 : index
    %c0_32 = arith.constant 0 : index
    %49 = vector.load %arg9[%c0_31, %c0_32] : memref<4x32xf32, #tpu.memory_space<vmem>>, vector<4x32xf32>
    tpu.vector_store %arg9[%c0_31, %c0_32], %24 {strides = array<i32>} : memref<4x32xf32, #tpu.memory_space<vmem>>, vector<4x32xf32>,
    %c1_i32 = arith.constant 1 : i32
    %c0_33 = arith.constant 0 : index
    %c0_34 = arith.constant 0 : index
    %50 = vector.load %arg9[%c0_33, %c0_34] : memref<4x32xf32, #tpu.memory_space<vmem>>, vector<4x32xf32>
    %c0_35 = arith.constant 0 : index
    %c0_36 = arith.constant 0 : index
    %c0_37 = arith.constant 0 : index
    %51 = vector.load %arg10[%c0_35, %c0_36, %c0_37] : memref<4x32x32xf32, #tpu.memory_space<vmem>>, vector<4x32x32xf32>
    %cst_38 = arith.constant dense<0.000000e+00> : vector<4x32xf32>
    %52 = tpu.matmul %50, %5, %cst_38 {dimension_numbers = #tpu.dot_dimension_numbers<[1], [0], [0], [1], [0, 0, 1, 1], [], []>} : vector<4x32xf32>, vector<32x32xf32>, vector<4x32xf32> -> vector<4x32xf32>
    %53 = vector.shape_cast %6 : vector<32x32xf32> to vector<1x32x32xf32>
    %54 = vector.broadcast %53 : vector<1x32x32xf32> to vector<4x32x32xf32>
    %55 = arith.mulf %54, %51 : vector<4x32x32xf32>
    %56 = vector.shape_cast %50 : vector<4x32xf32> to vector<4x1x32xf32>
    %57 = vector.broadcast %56 : vector<4x1x32xf32> to vector<4x32x32xf32>
    %58 = arith.mulf %55, %57 : vector<4x32x32xf32>
    %cst_39 = arith.constant dense<0.000000e+00> : vector<4x32xf32>
    %59 = vector.multi_reduction <add>, %58, %cst_39 [2] : vector<4x32x32xf32> to vector<4x32xf32>
    %60 = arith.index_cast %c1_i32 : i32 to index
    %c0_40 = arith.constant 0 : index
    %c0_41 = arith.constant 0 : index
    %61 = vector.load %arg1[%60, %c0_40, %c0_41] : memref<8x4x32xf32, #tpu.memory_space<vmem>>, vector<1x4x32xf32>
    %62 = vector.shape_cast %61 : vector<1x4x32xf32> to vector<4x32xf32>
    %63 = arith.addf %62, %52 : vector<4x32xf32>
    %64 = arith.addf %63, %59 : vector<4x32xf32>
    %65 = math.tanh %64 : vector<4x32xf32>
    %66 = arith.index_cast %c1_i32 : i32 to index
    %c0_42 = arith.constant 0 : index
    %c0_43 = arith.constant 0 : index
    %67 = vector.load %arg8[%66, %c0_42, %c0_43] : memref<8x4x32xf32, #tpu.memory_space<vmem>>, vector<1x4x32xf32>
    %68 = vector.shape_cast %67 : vector<1x4x32xf32> to vector<4x32xf32>
    %69 = vector.shape_cast %65 : vector<4x32xf32> to vector<1x4x32xf32>
    tpu.vector_store %arg8[%66, %c0_42, %c0_43], %69 {strides = array<i32>} : memref<8x4x32xf32, #tpu.memory_space<vmem>>, vector<1x4x32xf32>,
    %70 = vector.broadcast %7 : vector<1x32xf32> to vector<4x32xf32>
    %71 = arith.mulf %65, %70 : vector<4x32xf32>
    %cst_44 = arith.constant dense<0.000000e+00> : vector<4xf32>
    %72 = vector.multi_reduction <add>, %71, %cst_44 [1] : vector<4x32xf32> to vector<4xf32>
    %73 = vector.shape_cast %72 : vector<4xf32> to vector<4x1xf32>
    %74 = vector.broadcast %8 : vector<1x1xf32> to vector<4x1xf32>
    %75 = arith.addf %73, %74 : vector<4x1xf32>
    %76 = math.tanh %75 : vector<4x1xf32>
    %77 = vector.broadcast %76 : vector<4x1xf32> to vector<4x32xf32>
    %78 = arith.mulf %77, %65 : vector<4x32xf32>
    %79 = vector.shape_cast %78 : vector<4x32xf32> to vector<4x32x1xf32>
    %80 = vector.shape_cast %50 : vector<4x32xf32> to vector<4x1x32xf32>
    %81 = vector.broadcast %79 : vector<4x32x1xf32> to vector<4x32x32xf32>
    %82 = vector.broadcast %80 : vector<4x1x32xf32> to vector<4x32x32xf32>
    %83 = arith.mulf %81, %82 : vector<4x32x32xf32>
    %84 = arith.addf %51, %83 : vector<4x32x32xf32>
    %cst_45 = arith.constant -1.000000e+00 : f32
    %cst_46 = arith.constant 1.000000e+00 : f32
    %85 = vector.broadcast %cst_45 : f32 to vector<4x32x32xf32>
    %86 = arith.maximumf %85, %84 : vector<4x32x32xf32>
    %87 = vector.broadcast %cst_46 : f32 to vector<4x32x32xf32>
    %88 = arith.minimumf %87, %86 : vector<4x32x32xf32>
    %c0_47 = arith.constant 0 : index
    %c0_48 = arith.constant 0 : index
    %c0_49 = arith.constant 0 : index
    %89 = vector.load %arg10[%c0_47, %c0_48, %c0_49] : memref<4x32x32xf32, #tpu.memory_space<vmem>>, vector<4x32x32xf32>
    tpu.vector_store %arg10[%c0_47, %c0_48, %c0_49], %88 {strides = array<i32>} : memref<4x32x32xf32, #tpu.memory_space<vmem>>, vector<4x32x32xf32>,
    %c0_50 = arith.constant 0 : index
    %c0_51 = arith.constant 0 : index
    %90 = vector.load %arg9[%c0_50, %c0_51] : memref<4x32xf32, #tpu.memory_space<vmem>>, vector<4x32xf32>
    tpu.vector_store %arg9[%c0_50, %c0_51], %65 {strides = array<i32>} : memref<4x32xf32, #tpu.memory_space<vmem>>, vector<4x32xf32>,
    %c2_i32 = arith.constant 2 : i32
    %c0_52 = arith.constant 0 : index
    %c0_53 = arith.constant 0 : index
    %91 = vector.load %arg9[%c0_52, %c0_53] : memref<4x32xf32, #tpu.memory_space<vmem>>, vector<4x32xf32>
    %c0_54 = arith.constant 0 : index
    %c0_55 = arith.constant 0 : index
    %c0_56 = arith.constant 0 : index
    %92 = vector.load %arg10[%c0_54, %c0_55, %c0_56] : memref<4x32x32xf32, #tpu.memory_space<vmem>>, vector<4x32x32xf32>
    %cst_57 = arith.constant dense<0.000000e+00> : vector<4x32xf32>
    %93 = tpu.matmul %91, %5, %cst_57 {dimension_numbers = #tpu.dot_dimension_numbers<[1], [0], [0], [1], [0, 0, 1, 1], [], []>} : vector<4x32xf32>, vector<32x32xf32>, vector<4x32xf32> -> vector<4x32xf32>
    %94 = vector.shape_cast %6 : vector<32x32xf32> to vector<1x32x32xf32>
    %95 = vector.broadcast %94 : vector<1x32x32xf32> to vector<4x32x32xf32>
    %96 = arith.mulf %95, %92 : vector<4x32x32xf32>
    %97 = vector.shape_cast %91 : vector<4x32xf32> to vector<4x1x32xf32>
    %98 = vector.broadcast %97 : vector<4x1x32xf32> to vector<4x32x32xf32>
    %99 = arith.mulf %96, %98 : vector<4x32x32xf32>
    %cst_58 = arith.constant dense<0.000000e+00> : vector<4x32xf32>
    %100 = vector.multi_reduction <add>, %99, %cst_58 [2] : vector<4x32x32xf32> to vector<4x32xf32>
    %101 = arith.index_cast %c2_i32 : i32 to index
    %c0_59 = arith.constant 0 : index
    %c0_60 = arith.constant 0 : index
    %102 = vector.load %arg1[%101, %c0_59, %c0_60] : memref<8x4x32xf32, #tpu.memory_space<vmem>>, vector<1x4x32xf32>
    %103 = vector.shape_cast %102 : vector<1x4x32xf32> to vector<4x32xf32>
    %104 = arith.addf %103, %93 : vector<4x32xf32>
    %105 = arith.addf %104, %100 : vector<4x32xf32>
    %106 = math.tanh %105 : vector<4x32xf32>
    %107 = arith.index_cast %c2_i32 : i32 to index
    %c0_61 = arith.constant 0 : index
    %c0_62 = arith.constant 0 : index
    %108 = vector.load %arg8[%107, %c0_61, %c0_62] : memref<8x4x32xf32, #tpu.memory_space<vmem>>, vector<1x4x32xf32>
    %109 = vector.shape_cast %108 : vector<1x4x32xf32> to vector<4x32xf32>
    %110 = vector.shape_cast %106 : vector<4x32xf32> to vector<1x4x32xf32>
    tpu.vector_store %arg8[%107, %c0_61, %c0_62], %110 {strides = array<i32>} : memref<8x4x32xf32, #tpu.memory_space<vmem>>, vector<1x4x32xf32>,
    %111 = vector.broadcast %7 : vector<1x32xf32> to vector<4x32xf32>
    %112 = arith.mulf %106, %111 : vector<4x32xf32>
    %cst_63 = arith.constant dense<0.000000e+00> : vector<4xf32>
    %113 = vector.multi_reduction <add>, %112, %cst_63 [1] : vector<4x32xf32> to vector<4xf32>
    %114 = vector.shape_cast %113 : vector<4xf32> to vector<4x1xf32>
    %115 = vector.broadcast %8 : vector<1x1xf32> to vector<4x1xf32>
    %116 = arith.addf %114, %115 : vector<4x1xf32>
    %117 = math.tanh %116 : vector<4x1xf32>
    %118 = vector.broadcast %117 : vector<4x1xf32> to vector<4x32xf32>
    %119 = arith.mulf %118, %106 : vector<4x32xf32>
    %120 = vector.shape_cast %119 : vector<4x32xf32> to vector<4x32x1xf32>
    %121 = vector.shape_cast %91 : vector<4x32xf32> to vector<4x1x32xf32>
    %122 = vector.broadcast %120 : vector<4x32x1xf32> to vector<4x32x32xf32>
    %123 = vector.broadcast %121 : vector<4x1x32xf32> to vector<4x32x32xf32>
    %124 = arith.mulf %122, %123 : vector<4x32x32xf32>
    %125 = arith.addf %92, %124 : vector<4x32x32xf32>
    %cst_64 = arith.constant -1.000000e+00 : f32
    %cst_65 = arith.constant 1.000000e+00 : f32
    %126 = vector.broadcast %cst_64 : f32 to vector<4x32x32xf32>
    %127 = arith.maximumf %126, %125 : vector<4x32x32xf32>
    %128 = vector.broadcast %cst_65 : f32 to vector<4x32x32xf32>
    %129 = arith.minimumf %128, %127 : vector<4x32x32xf32>
    %c0_66 = arith.constant 0 : index
    %c0_67 = arith.constant 0 : index
    %c0_68 = arith.constant 0 : index
    %130 = vector.load %arg10[%c0_66, %c0_67, %c0_68] : memref<4x32x32xf32, #tpu.memory_space<vmem>>, vector<4x32x32xf32>
    tpu.vector_store %arg10[%c0_66, %c0_67, %c0_68], %129 {strides = array<i32>} : memref<4x32x32xf32, #tpu.memory_space<vmem>>, vector<4x32x32xf32>,
    %c0_69 = arith.constant 0 : index
    %c0_70 = arith.constant 0 : index
    %131 = vector.load %arg9[%c0_69, %c0_70] : memref<4x32xf32, #tpu.memory_space<vmem>>, vector<4x32xf32>
    tpu.vector_store %arg9[%c0_69, %c0_70], %106 {strides = array<i32>} : memref<4x32xf32, #tpu.memory_space<vmem>>, vector<4x32xf32>,
    %c3_i32 = arith.constant 3 : i32
    %c0_71 = arith.constant 0 : index
    %c0_72 = arith.constant 0 : index
    %132 = vector.load %arg9[%c0_71, %c0_72] : memref<4x32xf32, #tpu.memory_space<vmem>>, vector<4x32xf32>
    %c0_73 = arith.constant 0 : index
    %c0_74 = arith.constant 0 : index
    %c0_75 = arith.constant 0 : index
    %133 = vector.load %arg10[%c0_73, %c0_74, %c0_75] : memref<4x32x32xf32, #tpu.memory_space<vmem>>, vector<4x32x32xf32>
    %cst_76 = arith.constant dense<0.000000e+00> : vector<4x32xf32>
    %134 = tpu.matmul %132, %5, %cst_76 {dimension_numbers = #tpu.dot_dimension_numbers<[1], [0], [0], [1], [0, 0, 1, 1], [], []>} : vector<4x32xf32>, vector<32x32xf32>, vector<4x32xf32> -> vector<4x32xf32>
    %135 = vector.shape_cast %6 : vector<32x32xf32> to vector<1x32x32xf32>
    %136 = vector.broadcast %135 : vector<1x32x32xf32> to vector<4x32x32xf32>
    %137 = arith.mulf %136, %133 : vector<4x32x32xf32>
    %138 = vector.shape_cast %132 : vector<4x32xf32> to vector<4x1x32xf32>
    %139 = vector.broadcast %138 : vector<4x1x32xf32> to vector<4x32x32xf32>
    %140 = arith.mulf %137, %139 : vector<4x32x32xf32>
    %cst_77 = arith.constant dense<0.000000e+00> : vector<4x32xf32>
    %141 = vector.multi_reduction <add>, %140, %cst_77 [2] : vector<4x32x32xf32> to vector<4x32xf32>
    %142 = arith.index_cast %c3_i32 : i32 to index
    %c0_78 = arith.constant 0 : index
    %c0_79 = arith.constant 0 : index
    %143 = vector.load %arg1[%142, %c0_78, %c0_79] : memref<8x4x32xf32, #tpu.memory_space<vmem>>, vector<1x4x32xf32>
    %144 = vector.shape_cast %143 : vector<1x4x32xf32> to vector<4x32xf32>
    %145 = arith.addf %144, %134 : vector<4x32xf32>
    %146 = arith.addf %145, %141 : vector<4x32xf32>
    %147 = math.tanh %146 : vector<4x32xf32>
    %148 = arith.index_cast %c3_i32 : i32 to index
    %c0_80 = arith.constant 0 : index
    %c0_81 = arith.constant 0 : index
    %149 = vector.load %arg8[%148, %c0_80, %c0_81] : memref<8x4x32xf32, #tpu.memory_space<vmem>>, vector<1x4x32xf32>
    %150 = vector.shape_cast %149 : vector<1x4x32xf32> to vector<4x32xf32>
    %151 = vector.shape_cast %147 : vector<4x32xf32> to vector<1x4x32xf32>
    tpu.vector_store %arg8[%148, %c0_80, %c0_81], %151 {strides = array<i32>} : memref<8x4x32xf32, #tpu.memory_space<vmem>>, vector<1x4x32xf32>,
    %152 = vector.broadcast %7 : vector<1x32xf32> to vector<4x32xf32>
    %153 = arith.mulf %147, %152 : vector<4x32xf32>
    %cst_82 = arith.constant dense<0.000000e+00> : vector<4xf32>
    %154 = vector.multi_reduction <add>, %153, %cst_82 [1] : vector<4x32xf32> to vector<4xf32>
    %155 = vector.shape_cast %154 : vector<4xf32> to vector<4x1xf32>
    %156 = vector.broadcast %8 : vector<1x1xf32> to vector<4x1xf32>
    %157 = arith.addf %155, %156 : vector<4x1xf32>
    %158 = math.tanh %157 : vector<4x1xf32>
    %159 = vector.broadcast %158 : vector<4x1xf32> to vector<4x32xf32>
    %160 = arith.mulf %159, %147 : vector<4x32xf32>
    %161 = vector.shape_cast %160 : vector<4x32xf32> to vector<4x32x1xf32>
    %162 = vector.shape_cast %132 : vector<4x32xf32> to vector<4x1x32xf32>
    %163 = vector.broadcast %161 : vector<4x32x1xf32> to vector<4x32x32xf32>
    %164 = vector.broadcast %162 : vector<4x1x32xf32> to vector<4x32x32xf32>
    %165 = arith.mulf %163, %164 : vector<4x32x32xf32>
    %166 = arith.addf %133, %165 : vector<4x32x32xf32>
    %cst_83 = arith.constant -1.000000e+00 : f32
    %cst_84 = arith.constant 1.000000e+00 : f32
    %167 = vector.broadcast %cst_83 : f32 to vector<4x32x32xf32>
    %168 = arith.maximumf %167, %166 : vector<4x32x32xf32>
    %169 = vector.broadcast %cst_84 : f32 to vector<4x32x32xf32>
    %170 = arith.minimumf %169, %168 : vector<4x32x32xf32>
    %c0_85 = arith.constant 0 : index
    %c0_86 = arith.constant 0 : index
    %c0_87 = arith.constant 0 : index
    %171 = vector.load %arg10[%c0_85, %c0_86, %c0_87] : memref<4x32x32xf32, #tpu.memory_space<vmem>>, vector<4x32x32xf32>
    tpu.vector_store %arg10[%c0_85, %c0_86, %c0_87], %170 {strides = array<i32>} : memref<4x32x32xf32, #tpu.memory_space<vmem>>, vector<4x32x32xf32>,
    %c0_88 = arith.constant 0 : index
    %c0_89 = arith.constant 0 : index
    %172 = vector.load %arg9[%c0_88, %c0_89] : memref<4x32xf32, #tpu.memory_space<vmem>>, vector<4x32xf32>
    tpu.vector_store %arg9[%c0_88, %c0_89], %147 {strides = array<i32>} : memref<4x32xf32, #tpu.memory_space<vmem>>, vector<4x32xf32>,
    %c4_i32_90 = arith.constant 4 : i32
    %c0_91 = arith.constant 0 : index
    %c0_92 = arith.constant 0 : index
    %173 = vector.load %arg9[%c0_91, %c0_92] : memref<4x32xf32, #tpu.memory_space<vmem>>, vector<4x32xf32>
    %c0_93 = arith.constant 0 : index
    %c0_94 = arith.constant 0 : index
    %c0_95 = arith.constant 0 : index
    %174 = vector.load %arg10[%c0_93, %c0_94, %c0_95] : memref<4x32x32xf32, #tpu.memory_space<vmem>>, vector<4x32x32xf32>
    %cst_96 = arith.constant dense<0.000000e+00> : vector<4x32xf32>
    %175 = tpu.matmul %173, %5, %cst_96 {dimension_numbers = #tpu.dot_dimension_numbers<[1], [0], [0], [1], [0, 0, 1, 1], [], []>} : vector<4x32xf32>, vector<32x32xf32>, vector<4x32xf32> -> vector<4x32xf32>
    %176 = vector.shape_cast %6 : vector<32x32xf32> to vector<1x32x32xf32>
    %177 = vector.broadcast %176 : vector<1x32x32xf32> to vector<4x32x32xf32>
    %178 = arith.mulf %177, %174 : vector<4x32x32xf32>
    %179 = vector.shape_cast %173 : vector<4x32xf32> to vector<4x1x32xf32>
    %180 = vector.broadcast %179 : vector<4x1x32xf32> to vector<4x32x32xf32>
    %181 = arith.mulf %178, %180 : vector<4x32x32xf32>
    %cst_97 = arith.constant dense<0.000000e+00> : vector<4x32xf32>
    %182 = vector.multi_reduction <add>, %181, %cst_97 [2] : vector<4x32x32xf32> to vector<4x32xf32>
    %183 = arith.index_cast %c4_i32_90 : i32 to index
    %c0_98 = arith.constant 0 : index
    %c0_99 = arith.constant 0 : index
    %184 = vector.load %arg1[%183, %c0_98, %c0_99] : memref<8x4x32xf32, #tpu.memory_space<vmem>>, vector<1x4x32xf32>
    %185 = vector.shape_cast %184 : vector<1x4x32xf32> to vector<4x32xf32>
    %186 = arith.addf %185, %175 : vector<4x32xf32>
    %187 = arith.addf %186, %182 : vector<4x32xf32>
    %188 = math.tanh %187 : vector<4x32xf32>
    %189 = arith.index_cast %c4_i32_90 : i32 to index
    %c0_100 = arith.constant 0 : index
    %c0_101 = arith.constant 0 : index
    %190 = vector.load %arg8[%189, %c0_100, %c0_101] : memref<8x4x32xf32, #tpu.memory_space<vmem>>, vector<1x4x32xf32>
    %191 = vector.shape_cast %190 : vector<1x4x32xf32> to vector<4x32xf32>
    %192 = vector.shape_cast %188 : vector<4x32xf32> to vector<1x4x32xf32>
    tpu.vector_store %arg8[%189, %c0_100, %c0_101], %192 {strides = array<i32>} : memref<8x4x32xf32, #tpu.memory_space<vmem>>, vector<1x4x32xf32>,
    %193 = vector.broadcast %7 : vector<1x32xf32> to vector<4x32xf32>
    %194 = arith.mulf %188, %193 : vector<4x32xf32>
    %cst_102 = arith.constant dense<0.000000e+00> : vector<4xf32>
    %195 = vector.multi_reduction <add>, %194, %cst_102 [1] : vector<4x32xf32> to vector<4xf32>
    %196 = vector.shape_cast %195 : vector<4xf32> to vector<4x1xf32>
    %197 = vector.broadcast %8 : vector<1x1xf32> to vector<4x1xf32>
    %198 = arith.addf %196, %197 : vector<4x1xf32>
    %199 = math.tanh %198 : vector<4x1xf32>
    %200 = vector.broadcast %199 : vector<4x1xf32> to vector<4x32xf32>
    %201 = arith.mulf %200, %188 : vector<4x32xf32>
    %202 = vector.shape_cast %201 : vector<4x32xf32> to vector<4x32x1xf32>
    %203 = vector.shape_cast %173 : vector<4x32xf32> to vector<4x1x32xf32>
    %204 = vector.broadcast %202 : vector<4x32x1xf32> to vector<4x32x32xf32>
    %205 = vector.broadcast %203 : vector<4x1x32xf32> to vector<4x32x32xf32>
    %206 = arith.mulf %204, %205 : vector<4x32x32xf32>
    %207 = arith.addf %174, %206 : vector<4x32x32xf32>
    %cst_103 = arith.constant -1.000000e+00 : f32
    %cst_104 = arith.constant 1.000000e+00 : f32
    %208 = vector.broadcast %cst_103 : f32 to vector<4x32x32xf32>
    %209 = arith.maximumf %208, %207 : vector<4x32x32xf32>
    %210 = vector.broadcast %cst_104 : f32 to vector<4x32x32xf32>
    %211 = arith.minimumf %210, %209 : vector<4x32x32xf32>
    %c0_105 = arith.constant 0 : index
    %c0_106 = arith.constant 0 : index
    %c0_107 = arith.constant 0 : index
    %212 = vector.load %arg10[%c0_105, %c0_106, %c0_107] : memref<4x32x32xf32, #tpu.memory_space<vmem>>, vector<4x32x32xf32>
    tpu.vector_store %arg10[%c0_105, %c0_106, %c0_107], %211 {strides = array<i32>} : memref<4x32x32xf32, #tpu.memory_space<vmem>>, vector<4x32x32xf32>,
    %c0_108 = arith.constant 0 : index
    %c0_109 = arith.constant 0 : index
    %213 = vector.load %arg9[%c0_108, %c0_109] : memref<4x32xf32, #tpu.memory_space<vmem>>, vector<4x32xf32>
    tpu.vector_store %arg9[%c0_108, %c0_109], %188 {strides = array<i32>} : memref<4x32xf32, #tpu.memory_space<vmem>>, vector<4x32xf32>,
    %c5_i32 = arith.constant 5 : i32
    %c0_110 = arith.constant 0 : index
    %c0_111 = arith.constant 0 : index
    %214 = vector.load %arg9[%c0_110, %c0_111] : memref<4x32xf32, #tpu.memory_space<vmem>>, vector<4x32xf32>
    %c0_112 = arith.constant 0 : index
    %c0_113 = arith.constant 0 : index
    %c0_114 = arith.constant 0 : index
    %215 = vector.load %arg10[%c0_112, %c0_113, %c0_114] : memref<4x32x32xf32, #tpu.memory_space<vmem>>, vector<4x32x32xf32>
    %cst_115 = arith.constant dense<0.000000e+00> : vector<4x32xf32>
    %216 = tpu.matmul %214, %5, %cst_115 {dimension_numbers = #tpu.dot_dimension_numbers<[1], [0], [0], [1], [0, 0, 1, 1], [], []>} : vector<4x32xf32>, vector<32x32xf32>, vector<4x32xf32> -> vector<4x32xf32>
    %217 = vector.shape_cast %6 : vector<32x32xf32> to vector<1x32x32xf32>
    %218 = vector.broadcast %217 : vector<1x32x32xf32> to vector<4x32x32xf32>
    %219 = arith.mulf %218, %215 : vector<4x32x32xf32>
    %220 = vector.shape_cast %214 : vector<4x32xf32> to vector<4x1x32xf32>
    %221 = vector.broadcast %220 : vector<4x1x32xf32> to vector<4x32x32xf32>
    %222 = arith.mulf %219, %221 : vector<4x32x32xf32>
    %cst_116 = arith.constant dense<0.000000e+00> : vector<4x32xf32>
    %223 = vector.multi_reduction <add>, %222, %cst_116 [2] : vector<4x32x32xf32> to vector<4x32xf32>
    %224 = arith.index_cast %c5_i32 : i32 to index
    %c0_117 = arith.constant 0 : index
    %c0_118 = arith.constant 0 : index
    %225 = vector.load %arg1[%224, %c0_117, %c0_118] : memref<8x4x32xf32, #tpu.memory_space<vmem>>, vector<1x4x32xf32>
    %226 = vector.shape_cast %225 : vector<1x4x32xf32> to vector<4x32xf32>
    %227 = arith.addf %226, %216 : vector<4x32xf32>
    %228 = arith.addf %227, %223 : vector<4x32xf32>
    %229 = math.tanh %228 : vector<4x32xf32>
    %230 = arith.index_cast %c5_i32 : i32 to index
    %c0_119 = arith.constant 0 : index
    %c0_120 = arith.constant 0 : index
    %231 = vector.load %arg8[%230, %c0_119, %c0_120] : memref<8x4x32xf32, #tpu.memory_space<vmem>>, vector<1x4x32xf32>
    %232 = vector.shape_cast %231 : vector<1x4x32xf32> to vector<4x32xf32>
    %233 = vector.shape_cast %229 : vector<4x32xf32> to vector<1x4x32xf32>
    tpu.vector_store %arg8[%230, %c0_119, %c0_120], %233 {strides = array<i32>} : memref<8x4x32xf32, #tpu.memory_space<vmem>>, vector<1x4x32xf32>,
    %234 = vector.broadcast %7 : vector<1x32xf32> to vector<4x32xf32>
    %235 = arith.mulf %229, %234 : vector<4x32xf32>
    %cst_121 = arith.constant dense<0.000000e+00> : vector<4xf32>
    %236 = vector.multi_reduction <add>, %235, %cst_121 [1] : vector<4x32xf32> to vector<4xf32>
    %237 = vector.shape_cast %236 : vector<4xf32> to vector<4x1xf32>
    %238 = vector.broadcast %8 : vector<1x1xf32> to vector<4x1xf32>
    %239 = arith.addf %237, %238 : vector<4x1xf32>
    %240 = math.tanh %239 : vector<4x1xf32>
    %241 = vector.broadcast %240 : vector<4x1xf32> to vector<4x32xf32>
    %242 = arith.mulf %241, %229 : vector<4x32xf32>
    %243 = vector.shape_cast %242 : vector<4x32xf32> to vector<4x32x1xf32>
    %244 = vector.shape_cast %214 : vector<4x32xf32> to vector<4x1x32xf32>
    %245 = vector.broadcast %243 : vector<4x32x1xf32> to vector<4x32x32xf32>
    %246 = vector.broadcast %244 : vector<4x1x32xf32> to vector<4x32x32xf32>
    %247 = arith.mulf %245, %246 : vector<4x32x32xf32>
    %248 = arith.addf %215, %247 : vector<4x32x32xf32>
    %cst_122 = arith.constant -1.000000e+00 : f32
    %cst_123 = arith.constant 1.000000e+00 : f32
    %249 = vector.broadcast %cst_122 : f32 to vector<4x32x32xf32>
    %250 = arith.maximumf %249, %248 : vector<4x32x32xf32>
    %251 = vector.broadcast %cst_123 : f32 to vector<4x32x32xf32>
    %252 = arith.minimumf %251, %250 : vector<4x32x32xf32>
    %c0_124 = arith.constant 0 : index
    %c0_125 = arith.constant 0 : index
    %c0_126 = arith.constant 0 : index
    %253 = vector.load %arg10[%c0_124, %c0_125, %c0_126] : memref<4x32x32xf32, #tpu.memory_space<vmem>>, vector<4x32x32xf32>
    tpu.vector_store %arg10[%c0_124, %c0_125, %c0_126], %252 {strides = array<i32>} : memref<4x32x32xf32, #tpu.memory_space<vmem>>, vector<4x32x32xf32>,
    %c0_127 = arith.constant 0 : index
    %c0_128 = arith.constant 0 : index
    %254 = vector.load %arg9[%c0_127, %c0_128] : memref<4x32xf32, #tpu.memory_space<vmem>>, vector<4x32xf32>
    tpu.vector_store %arg9[%c0_127, %c0_128], %229 {strides = array<i32>} : memref<4x32xf32, #tpu.memory_space<vmem>>, vector<4x32xf32>,
    %c6_i32 = arith.constant 6 : i32
    %c0_129 = arith.constant 0 : index
    %c0_130 = arith.constant 0 : index
    %255 = vector.load %arg9[%c0_129, %c0_130] : memref<4x32xf32, #tpu.memory_space<vmem>>, vector<4x32xf32>
    %c0_131 = arith.constant 0 : index
    %c0_132 = arith.constant 0 : index
    %c0_133 = arith.constant 0 : index
    %256 = vector.load %arg10[%c0_131, %c0_132, %c0_133] : memref<4x32x32xf32, #tpu.memory_space<vmem>>, vector<4x32x32xf32>
    %cst_134 = arith.constant dense<0.000000e+00> : vector<4x32xf32>
    %257 = tpu.matmul %255, %5, %cst_134 {dimension_numbers = #tpu.dot_dimension_numbers<[1], [0], [0], [1], [0, 0, 1, 1], [], []>} : vector<4x32xf32>, vector<32x32xf32>, vector<4x32xf32> -> vector<4x32xf32>
    %258 = vector.shape_cast %6 : vector<32x32xf32> to vector<1x32x32xf32>
    %259 = vector.broadcast %258 : vector<1x32x32xf32> to vector<4x32x32xf32>
    %260 = arith.mulf %259, %256 : vector<4x32x32xf32>
    %261 = vector.shape_cast %255 : vector<4x32xf32> to vector<4x1x32xf32>
    %262 = vector.broadcast %261 : vector<4x1x32xf32> to vector<4x32x32xf32>
    %263 = arith.mulf %260, %262 : vector<4x32x32xf32>
    %cst_135 = arith.constant dense<0.000000e+00> : vector<4x32xf32>
    %264 = vector.multi_reduction <add>, %263, %cst_135 [2] : vector<4x32x32xf32> to vector<4x32xf32>
    %265 = arith.index_cast %c6_i32 : i32 to index
    %c0_136 = arith.constant 0 : index
    %c0_137 = arith.constant 0 : index
    %266 = vector.load %arg1[%265, %c0_136, %c0_137] : memref<8x4x32xf32, #tpu.memory_space<vmem>>, vector<1x4x32xf32>
    %267 = vector.shape_cast %266 : vector<1x4x32xf32> to vector<4x32xf32>
    %268 = arith.addf %267, %257 : vector<4x32xf32>
    %269 = arith.addf %268, %264 : vector<4x32xf32>
    %270 = math.tanh %269 : vector<4x32xf32>
    %271 = arith.index_cast %c6_i32 : i32 to index
    %c0_138 = arith.constant 0 : index
    %c0_139 = arith.constant 0 : index
    %272 = vector.load %arg8[%271, %c0_138, %c0_139] : memref<8x4x32xf32, #tpu.memory_space<vmem>>, vector<1x4x32xf32>
    %273 = vector.shape_cast %272 : vector<1x4x32xf32> to vector<4x32xf32>
    %274 = vector.shape_cast %270 : vector<4x32xf32> to vector<1x4x32xf32>
    tpu.vector_store %arg8[%271, %c0_138, %c0_139], %274 {strides = array<i32>} : memref<8x4x32xf32, #tpu.memory_space<vmem>>, vector<1x4x32xf32>,
    %275 = vector.broadcast %7 : vector<1x32xf32> to vector<4x32xf32>
    %276 = arith.mulf %270, %275 : vector<4x32xf32>
    %cst_140 = arith.constant dense<0.000000e+00> : vector<4xf32>
    %277 = vector.multi_reduction <add>, %276, %cst_140 [1] : vector<4x32xf32> to vector<4xf32>
    %278 = vector.shape_cast %277 : vector<4xf32> to vector<4x1xf32>
    %279 = vector.broadcast %8 : vector<1x1xf32> to vector<4x1xf32>
    %280 = arith.addf %278, %279 : vector<4x1xf32>
    %281 = math.tanh %280 : vector<4x1xf32>
    %282 = vector.broadcast %281 : vector<4x1xf32> to vector<4x32xf32>
    %283 = arith.mulf %282, %270 : vector<4x32xf32>
    %284 = vector.shape_cast %283 : vector<4x32xf32> to vector<4x32x1xf32>
    %285 = vector.shape_cast %255 : vector<4x32xf32> to vector<4x1x32xf32>
    %286 = vector.broadcast %284 : vector<4x32x1xf32> to vector<4x32x32xf32>
    %287 = vector.broadcast %285 : vector<4x1x32xf32> to vector<4x32x32xf32>
    %288 = arith.mulf %286, %287 : vector<4x32x32xf32>
    %289 = arith.addf %256, %288 : vector<4x32x32xf32>
    %cst_141 = arith.constant -1.000000e+00 : f32
    %cst_142 = arith.constant 1.000000e+00 : f32
    %290 = vector.broadcast %cst_141 : f32 to vector<4x32x32xf32>
    %291 = arith.maximumf %290, %289 : vector<4x32x32xf32>
    %292 = vector.broadcast %cst_142 : f32 to vector<4x32x32xf32>
    %293 = arith.minimumf %292, %291 : vector<4x32x32xf32>
    %c0_143 = arith.constant 0 : index
    %c0_144 = arith.constant 0 : index
    %c0_145 = arith.constant 0 : index
    %294 = vector.load %arg10[%c0_143, %c0_144, %c0_145] : memref<4x32x32xf32, #tpu.memory_space<vmem>>, vector<4x32x32xf32>
    tpu.vector_store %arg10[%c0_143, %c0_144, %c0_145], %293 {strides = array<i32>} : memref<4x32x32xf32, #tpu.memory_space<vmem>>, vector<4x32x32xf32>,
    %c0_146 = arith.constant 0 : index
    %c0_147 = arith.constant 0 : index
    %295 = vector.load %arg9[%c0_146, %c0_147] : memref<4x32xf32, #tpu.memory_space<vmem>>, vector<4x32xf32>
    tpu.vector_store %arg9[%c0_146, %c0_147], %270 {strides = array<i32>} : memref<4x32xf32, #tpu.memory_space<vmem>>, vector<4x32xf32>,
    %c7_i32 = arith.constant 7 : i32
    %c0_148 = arith.constant 0 : index
    %c0_149 = arith.constant 0 : index
    %296 = vector.load %arg9[%c0_148, %c0_149] : memref<4x32xf32, #tpu.memory_space<vmem>>, vector<4x32xf32>
    %c0_150 = arith.constant 0 : index
    %c0_151 = arith.constant 0 : index
    %c0_152 = arith.constant 0 : index
    %297 = vector.load %arg10[%c0_150, %c0_151, %c0_152] : memref<4x32x32xf32, #tpu.memory_space<vmem>>, vector<4x32x32xf32>
    %cst_153 = arith.constant dense<0.000000e+00> : vector<4x32xf32>
    %298 = tpu.matmul %296, %5, %cst_153 {dimension_numbers = #tpu.dot_dimension_numbers<[1], [0], [0], [1], [0, 0, 1, 1], [], []>} : vector<4x32xf32>, vector<32x32xf32>, vector<4x32xf32> -> vector<4x32xf32>
    %299 = vector.shape_cast %6 : vector<32x32xf32> to vector<1x32x32xf32>
    %300 = vector.broadcast %299 : vector<1x32x32xf32> to vector<4x32x32xf32>
    %301 = arith.mulf %300, %297 : vector<4x32x32xf32>
    %302 = vector.shape_cast %296 : vector<4x32xf32> to vector<4x1x32xf32>
    %303 = vector.broadcast %302 : vector<4x1x32xf32> to vector<4x32x32xf32>
    %304 = arith.mulf %301, %303 : vector<4x32x32xf32>
    %cst_154 = arith.constant dense<0.000000e+00> : vector<4x32xf32>
    %305 = vector.multi_reduction <add>, %304, %cst_154 [2] : vector<4x32x32xf32> to vector<4x32xf32>
    %306 = arith.index_cast %c7_i32 : i32 to index
    %c0_155 = arith.constant 0 : index
    %c0_156 = arith.constant 0 : index
    %307 = vector.load %arg1[%306, %c0_155, %c0_156] : memref<8x4x32xf32, #tpu.memory_space<vmem>>, vector<1x4x32xf32>
    %308 = vector.shape_cast %307 : vector<1x4x32xf32> to vector<4x32xf32>
    %309 = arith.addf %308, %298 : vector<4x32xf32>
    %310 = arith.addf %309, %305 : vector<4x32xf32>
    %311 = math.tanh %310 : vector<4x32xf32>
    %312 = arith.index_cast %c7_i32 : i32 to index
    %c0_157 = arith.constant 0 : index
    %c0_158 = arith.constant 0 : index
    %313 = vector.load %arg8[%312, %c0_157, %c0_158] : memref<8x4x32xf32, #tpu.memory_space<vmem>>, vector<1x4x32xf32>
    %314 = vector.shape_cast %313 : vector<1x4x32xf32> to vector<4x32xf32>
    %315 = vector.shape_cast %311 : vector<4x32xf32> to vector<1x4x32xf32>
    tpu.vector_store %arg8[%312, %c0_157, %c0_158], %315 {strides = array<i32>} : memref<8x4x32xf32, #tpu.memory_space<vmem>>, vector<1x4x32xf32>,
    %316 = vector.broadcast %7 : vector<1x32xf32> to vector<4x32xf32>
    %317 = arith.mulf %311, %316 : vector<4x32xf32>
    %cst_159 = arith.constant dense<0.000000e+00> : vector<4xf32>
    %318 = vector.multi_reduction <add>, %317, %cst_159 [1] : vector<4x32xf32> to vector<4xf32>
    %319 = vector.shape_cast %318 : vector<4xf32> to vector<4x1xf32>
    %320 = vector.broadcast %8 : vector<1x1xf32> to vector<4x1xf32>
    %321 = arith.addf %319, %320 : vector<4x1xf32>
    %322 = math.tanh %321 : vector<4x1xf32>
    %323 = vector.broadcast %322 : vector<4x1xf32> to vector<4x32xf32>
    %324 = arith.mulf %323, %311 : vector<4x32xf32>
    %325 = vector.shape_cast %324 : vector<4x32xf32> to vector<4x32x1xf32>
    %326 = vector.shape_cast %296 : vector<4x32xf32> to vector<4x1x32xf32>
    %327 = vector.broadcast %325 : vector<4x32x1xf32> to vector<4x32x32xf32>
    %328 = vector.broadcast %326 : vector<4x1x32xf32> to vector<4x32x32xf32>
    %329 = arith.mulf %327, %328 : vector<4x32x32xf32>
    %330 = arith.addf %297, %329 : vector<4x32x32xf32>
    %cst_160 = arith.constant -1.000000e+00 : f32
    %cst_161 = arith.constant 1.000000e+00 : f32
    %331 = vector.broadcast %cst_160 : f32 to vector<4x32x32xf32>
    %332 = arith.maximumf %331, %330 : vector<4x32x32xf32>
    %333 = vector.broadcast %cst_161 : f32 to vector<4x32x32xf32>
    %334 = arith.minimumf %333, %332 : vector<4x32x32xf32>
    %c0_162 = arith.constant 0 : index
    %c0_163 = arith.constant 0 : index
    %c0_164 = arith.constant 0 : index
    %335 = vector.load %arg10[%c0_162, %c0_163, %c0_164] : memref<4x32x32xf32, #tpu.memory_space<vmem>>, vector<4x32x32xf32>
    tpu.vector_store %arg10[%c0_162, %c0_163, %c0_164], %334 {strides = array<i32>} : memref<4x32x32xf32, #tpu.memory_space<vmem>>, vector<4x32x32xf32>,
    %c0_165 = arith.constant 0 : index
    %c0_166 = arith.constant 0 : index
    %336 = vector.load %arg9[%c0_165, %c0_166] : memref<4x32xf32, #tpu.memory_space<vmem>>, vector<4x32xf32>
    tpu.vector_store %arg9[%c0_165, %c0_166], %311 {strides = array<i32>} : memref<4x32xf32, #tpu.memory_space<vmem>>, vector<4x32xf32>,
    %c8_i32 = arith.constant 8 : i32
    return
  }
  func.func @transform_0(%arg0: i32) -> (i32, i32, i32) {
    %c0_i32 = arith.constant 0 : i32
    %c0_i32_0 = arith.constant 0 : i32
    %c0_i32_1 = arith.constant 0 : i32
    return %c0_i32, %arg0, %c0_i32_0 : i32, i32, i32
  }
  func.func @transform_1(%arg0: i32) -> (i32, i32) {
    %c0_i32 = arith.constant 0 : i32
    %c0_i32_0 = arith.constant 0 : i32
    return %arg0, %c0_i32 : i32, i32
  }
  func.func @transform_3(%arg0: i32) -> (i32, i32) {
    %c0_i32 = arith.constant 0 : i32
    %c0_i32_0 = arith.constant 0 : i32
    %c0_i32_1 = arith.constant 0 : i32
    return %c0_i32, %c0_i32_0 : i32, i32
  }
  func.func @transform_4(%arg0: i32) -> (i32, i32) {
    %c0_i32 = arith.constant 0 : i32
    %c0_i32_0 = arith.constant 0 : i32
    %c0_i32_1 = arith.constant 0 : i32
    return %c0_i32, %c0_i32_0 : i32, i32
  }
  func.func @transform_5(%arg0: i32) -> (i32, i32) {
    %c0_i32 = arith.constant 0 : i32
    %c0_i32_0 = arith.constant 0 : i32
    %c0_i32_1 = arith.constant 0 : i32
    return %c0_i32, %c0_i32_0 : i32, i32
  }
  func.func @transform_6(%arg0: i32) -> (i32, i32) {
    %c0_i32 = arith.constant 0 : i32
    %c0_i32_0 = arith.constant 0 : i32
    %c0_i32_1 = arith.constant 0 : i32
    return %c0_i32, %c0_i32_0 : i32, i32
  }
  func.func @transform_7(%arg0: i32) -> (i32, i32, i32) {
    %c0_i32 = arith.constant 0 : i32
    %c0_i32_0 = arith.constant 0 : i32
    %c0_i32_1 = arith.constant 0 : i32
    return %c0_i32, %arg0, %c0_i32_0 : i32, i32, i32
  }
  func.func @transform_8(%arg0: i32) -> (i32, i32) {
    %c0_i32 = arith.constant 0 : i32
    %c0_i32_0 = arith.constant 0 : i32
    return %arg0, %c0_i32 : i32, i32
  }
  func.func @transform_9(%arg0: i32) -> (i32, i32, i32) {
    %c0_i32 = arith.constant 0 : i32
    %c0_i32_0 = arith.constant 0 : i32
    %c0_i32_1 = arith.constant 0 : i32
    return %arg0, %c0_i32, %c0_i32_0 : i32, i32, i32
  }
}

</mosaic_0001>

<llo_original>
// kernel: tpu_custom_call.1
$region0: #{tpu_custom_call.1}
  #allocation0 [shape = 'u32[]', space=smem, size = 0x4, offset = 0x4, fixed_abs, tag = 'smem constant byte address 0x4 - core index']
  #allocation1 [shape = 'u32[144,128]{1,0:T(1,128)}', space=vmem, size = 0x12000, scoped, tag = 'internal scratch']
  #allocation2 [shape = 's32[1]{0}', space=sflag, size = 0x4, scoped, tag = 'scratch operand']
  #allocation3 [shape = 'f32[1,1]{1,0:T(1,128)S(1)}', space=vmem, size = 0x200, scoped, tag = 'scoped memory for tpu_custom_call.1']
  #allocation16 [shape = 's32[]', space=sflag, size = 0x4, offset = 0, fixed_abs, tag = 'sflag constant byte address 0x0 - dummy sync flag']
  #allocation17 [shape = 's32[]', space=sflag, size = 0x4, offset = 0, fixed_abs, tag = 'sflag constant byte address 0x0 - dummy sync flag']
  #allocation18 [shape = 'u32[]', space=smem, size = 0x4, offset = 0x44, fixed_abs, tag = 'smem constant byte address 0x44 - assertion arg 0']
  #allocation19 [shape = 'u32[]', space=smem, size = 0x4, offset = 0x48, fixed_abs, tag = 'smem constant byte address 0x48 - assertion arg 1']
  %s0 = inlined_call_operand.hbm [shape: f32[8,4,32], index: 0, kind: input, shape index: {}]
  %s1 = inlined_call_operand.hbm [shape: f32[4,32], index: 1, kind: input, shape index: {}]
  %s2 = inlined_call_operand.hbm [shape: f32[4,32,32], index: 2, kind: input, shape index: {}]
  %s3 = inlined_call_operand.hbm [shape: f32[32,32], index: 3, kind: input, shape index: {}]
  %s4 = inlined_call_operand.hbm [shape: f32[32,32], index: 4, kind: input, shape index: {}]
  %s5 = inlined_call_operand.vmem [shape: f32[1,32], index: 5, kind: input, shape index: {}]
  %s6 = inlined_call_operand.<no memory space> [shape: f32[1,1], index: 6, kind: input, shape index: {}]
  %s7 = inlined_call_operand.hbm [shape: f32[8,4,32], index: 7, kind: output, shape index: {0}]
  %s8 = inlined_call_operand.hbm [shape: f32[4,32], index: 8, kind: output, shape index: {1}]
  %s9 = inlined_call_operand.hbm [shape: f32[4,32,32], index: 9, kind: output, shape index: {2}]
  %10 = xla_tuple %s7, %s8, %s9
  %s11 = sld [smem:[#allocation0]]
  $region70: #{tpu_custom_call.1} parent=0
    _
  %s13 = ssub.s32 1, %s11
  %s14 = scalar_select 0, %s13, %s11
  %v15 = vstv %s6
  %16 = vst [vmem:[#allocation3] sm:$0x1] %v15
  $region1: #{tpu_custom_call.1} parent=0
    #allocation4 [shape = 'u8[16384]{0}', space=vmem, size = 0x4000, scoped, tag = 'input window, operand 0, single buffered']
    #allocation5 [shape = 's32[1]{0}', space=sflag, size = 0x4, scoped, tag = 'scoped memory for tpu_custom_call.1']
    #allocation6 [shape = 's32[1]{0}', space=sflag, size = 0x4, scoped, tag = 'scoped memory for tpu_custom_call.1']
    #allocation7 [shape = 'u8[2048]{0}', space=vmem, size = 0x800, scoped, tag = 'input window, operand 1, single buffered']
    #allocation8 [shape = 's32[1]{0}', space=sflag, size = 0x4, scoped, tag = 'scoped memory for tpu_custom_call.1']
    #allocation9 [shape = 'u8[16384]{0}', space=vmem, size = 0x4000, scoped, tag = 'input window, operand 3, single buffered']
    #allocation10 [shape = 'u8[16384]{0}', space=vmem, size = 0x4000, scoped, tag = 'input window, operand 4, single buffered']
    #allocation11 [shape = 's32[1]{0}', space=sflag, size = 0x4, scoped, tag = 'scoped memory for tpu_custom_call.1']
    #allocation12 [shape = 'u8[16384]{0}', space=vmem, size = 0x4000, scoped, tag = 'output window, operand 0, single buffered']
    #allocation13 [shape = 'u8[2048]{0}', space=vmem, size = 0x800, scoped, tag = 'output window, operand 1, single buffered']
    #allocation14 [shape = 's32[1]{0}', space=sflag, size = 0x4, scoped, tag = 'scoped memory for tpu_custom_call.1']
    #allocation15 [shape = 'u8[65536]{0}', space=vmem, size = 0x10000, scoped, tag = 'output window, operand 2, single buffered']
    %17 = vsyncpa [#allocation5], 0
    %18 = vsyncpa [#allocation8], 0
    %19 = vsyncpa [#allocation11], 0
    %20 = vsyncpa [#allocation6], 0
    %21 = vsyncpa [#allocation14], 0
    // Predicated region
    $region2: #{tpu_custom_call.1} parent=1 // pred_check
      _
    $region3: #{tpu_custom_call.1} parent=1 // pred_check_branch
      %23 = sbr.rel (0) target = $region5
    $region4: #{tpu_custom_call.1} parent=1 // pred_region
      %s25 = ssub.s32 512, 512
      %26 = vsyncadd [#allocation5], %s25
      %s27 = sshll.u32 [#allocation4], 4
      %s28 = int_to_ptr.vmem [resolvable:$true] %s27
      %33 = dma.hbm_to_vmem [thread:$0]  %s0, 512, %s28, [#allocation5], 64, 64, 4
    $region5: #{tpu_custom_call.1} parent=1 // pred_fallthru
      _
    // Predicated region
    $region6: #{tpu_custom_call.1} parent=1 // pred_check
      _
    $region7: #{tpu_custom_call.1} parent=1 // pred_check_branch
      %35 = sbr.rel (0) target = $region9
    $region8: #{tpu_custom_call.1} parent=1 // pred_region
      %s37 = ssub.s32 64, 64
      %38 = vsyncadd [#allocation8], %s37
      %s40 = sshll.u32 [#allocation7], 4
      %s41 = int_to_ptr.vmem [resolvable:$true] %s40
      %43 = dma.hbm_to_vmem [thread:$0]  %s1, 64, %s41, [#allocation8]
    $region9: #{tpu_custom_call.1} parent=1 // pred_fallthru
      _
    // Predicated region
    $region10: #{tpu_custom_call.1} parent=1 // pred_check
      _
    $region11: #{tpu_custom_call.1} parent=1 // pred_check_branch
      %45 = sbr.rel (0) target = $region13
    $region12: #{tpu_custom_call.1} parent=1 // pred_region
      %s47 = ssub.s32 512, 512
      %48 = vsyncadd [#allocation8], %s47
      %s49 = sshll.u32 [#allocation9], 4
      %s50 = int_to_ptr.vmem [resolvable:$true] %s49
      %55 = dma.hbm_to_vmem [thread:$0]  %s3, 512, %s50, [#allocation8], 128, 128, 8
    $region13: #{tpu_custom_call.1} parent=1 // pred_fallthru
      _
    // Predicated region
    $region14: #{tpu_custom_call.1} parent=1 // pred_check
      _
    $region15: #{tpu_custom_call.1} parent=1 // pred_check_branch
      %57 = sbr.rel (0) target = $region17
    $region16: #{tpu_custom_call.1} parent=1 // pred_region
      %s59 = ssub.s32 512, 512
      %60 = vsyncadd [#allocation11], %s59
      %s61 = sshll.u32 [#allocation10], 4
      %s62 = int_to_ptr.vmem [resolvable:$true] %s61
      %67 = dma.hbm_to_vmem [thread:$0]  %s4, 512, %s62, [#allocation11], 128, 128, 8
    $region17: #{tpu_custom_call.1} parent=1 // pred_fallthru
      _
    // Predicated region
    $region18: #{tpu_custom_call.1} parent=1 // pred_check
      _
    $region19: #{tpu_custom_call.1} parent=1 // pred_check_branch
      %69 = sbr.rel (0) target = $region21
    $region20: #{tpu_custom_call.1} parent=1 // pred_region
      _
    $region21: #{tpu_custom_call.1} parent=1 // pred_fallthru
      _
    // Predicated region
    $region22: #{tpu_custom_call.1} parent=1 // pred_check
      _
    $region23: #{tpu_custom_call.1} parent=1 // pred_check_branch
      %71 = sbr.rel (0) target = $region25
    $region24: #{tpu_custom_call.1} parent=1 // pred_region
      _
    $region25: #{tpu_custom_call.1} parent=1 // pred_fallthru
      _
    // Predicated region
    $region26: #{tpu_custom_call.1} parent=1 // pred_check
      _
    $region27: #{tpu_custom_call.1} parent=1 // pred_check_branch
      %73 = sbr.rel (0) target = $region29
    $region28: #{tpu_custom_call.1} parent=1 // pred_region
      %74 = dma.done [#allocation5], 512
    $region29: #{tpu_custom_call.1} parent=1 // pred_fallthru
      _
    // Predicated region
    $region30: #{tpu_custom_call.1} parent=1 // pred_check
      _
    $region31: #{tpu_custom_call.1} parent=1 // pred_check_branch
      %76 = sbr.rel (0) target = $region33
    $region32: #{tpu_custom_call.1} parent=1 // pred_region
      %77 = dma.done [#allocation8], 64
    $region33: #{tpu_custom_call.1} parent=1 // pred_fallthru
      _
    // Predicated region
    $region34: #{tpu_custom_call.1} parent=1 // pred_check
      _
    $region35: #{tpu_custom_call.1} parent=1 // pred_check_branch
      %79 = sbr.rel (0) target = $region37
    $region36: #{tpu_custom_call.1} parent=1 // pred_region
      %80 = dma.done [#allocation8], 512
    $region37: #{tpu_custom_call.1} parent=1 // pred_fallthru
      _
    // Predicated region
    $region38: #{tpu_custom_call.1} parent=1 // pred_check
      _
    $region39: #{tpu_custom_call.1} parent=1 // pred_check_branch
      %82 = sbr.rel (0) target = $region41
    $region40: #{tpu_custom_call.1} parent=1 // pred_region
      %83 = dma.done [#allocation11], 512
    $region41: #{tpu_custom_call.1} parent=1 // pred_fallthru
      _
    %v84 = vld [vmem:[#allocation7] sm:$0xf]
    %vm85 = vcmask 257024
    %86 = vst.msk [vmem:[#allocation13] sm:$0xf] %vm85, %v84
    %s87 = smul.u32 0, 4
    %s88 = smul.u32 %s87, 32
    %s89 = smul.addr %s88, 16
    %s90 = scalar_lea.hbm %s2, %s89
    // Predicated region
    $region42: #{tpu_custom_call.1} parent=1 // pred_check
      _
    $region43: #{tpu_custom_call.1} parent=1 // pred_check_branch
      %92 = sbr.rel target = $region45
    $region44: #{tpu_custom_call.1} parent=1 // pred_region
      %93 = sst [smem:[#allocation18]] [#allocation17]
      %94 = sst [smem:[#allocation19]] [#allocation16]
    $region45: #{tpu_custom_call.1} parent=1 // pred_fallthru
      _
    %96 = shalt.err (0)
    %s98 = sshll.u32 [#allocation15], 4
    %s99 = int_to_ptr.vmem [resolvable:$true] %s98
    %101 = dma.hbm_to_vmem [thread:$0]  %s90, 2048, %s99, [#allocation2]
    %s102 = smul.u32 4, 32
    %s103 = smul.u32 %s102, 1
    %s104 = sshll.u32 %s103, 4
    %105 = dma.done [#allocation2], %s104
    %v106 = vld [vmem:[#allocation9] sm:$0xff]
    %v107 = vld [vmem:[#allocation9 + $0x8] sm:$0xff]
    %v108 = vld [vmem:[#allocation9 + $0x10] sm:$0xff]
    %v109 = vld [vmem:[#allocation9 + $0x18] sm:$0xff]
    %v110 = vld [vmem:[#allocation10] sm:$0xff]
    %v111 = vld [vmem:[#allocation10 + $0x8] sm:$0xff]
    %v112 = vld [vmem:[#allocation10 + $0x10] sm:$0xff]
    %v113 = vld [vmem:[#allocation10 + $0x18] sm:$0xff]
    %v114 = vld [vmem:[%s5] sm:$0x1]
    %v115 = vld [vmem:[#allocation3] sm:$0x1]
    %v116 = vld [vmem:[#allocation13] sm:$0xf]
    %v117 = vld [vmem:[#allocation15] sm:$0xff]
    %v118 = vld [vmem:[#allocation15 + $0x8] sm:$0xff]
    %v119 = vld [vmem:[#allocation15 + $0x10] sm:$0xff]
    %v120 = vld [vmem:[#allocation15 + $0x18] sm:$0xff]
    %v121 = vld [vmem:[#allocation15 + $0x20] sm:$0xff]
    %v122 = vld [vmem:[#allocation15 + $0x28] sm:$0xff]
    %v123 = vld [vmem:[#allocation15 + $0x30] sm:$0xff]
    %v124 = vld [vmem:[#allocation15 + $0x38] sm:$0xff]
    %v125 = vld [vmem:[#allocation15 + $0x40] sm:$0xff]
    %v126 = vld [vmem:[#allocation15 + $0x48] sm:$0xff]
    %v127 = vld [vmem:[#allocation15 + $0x50] sm:$0xff]
    %v128 = vld [vmem:[#allocation15 + $0x58] sm:$0xff]
    %v129 = vld [vmem:[#allocation15 + $0x60] sm:$0xff]
    %v130 = vld [vmem:[#allocation15 + $0x68] sm:$0xff]
    %v131 = vld [vmem:[#allocation15 + $0x70] sm:$0xff]
    %v132 = vld [vmem:[#allocation15 + $0x78] sm:$0xff]
    %vm133 = vcmask 261120
    %v135 = vsel %vm133, %v116, 0
    %137 = vmatprep.subr.mxu0 0.0
    %138 = vmatpush1.msra.mxu0 0.0
    %139 = vmatprep.subr.mxu0 0.0
    %140 = vmatpush1.msra.mxu0 0.0
    %141 = vmatprep.subr.mxu0 0.0
    %142 = vmatpush1.msra.mxu0 0.0
    %143 = vmatprep.subr.mxu0 0.0
    %144 = vmatpush1.msra.mxu0 0.0
    %145 = vmatprep.subr.mxu0 0.0
    %146 = vmatpush1.msra.mxu0 0.0
    %147 = vmatprep.subr.mxu0 0.0
    %148 = vmatpush1.msra.mxu0 0.0
    %149 = vmatprep.subr.mxu0 0.0
    %150 = vmatpush1.msra.mxu0 0.0
    %151 = vmatprep.subr.mxu0 0.0
    %152 = vmatpush1.msra.mxu0 0.0
    %153 = vmatprep.subr.mxu0 0.0
    %154 = vmatpush1.msra.mxu0 0.0
    %155 = vmatprep.subr.mxu0 0.0
    %156 = vmatpush1.msra.mxu0 0.0
    %157 = vmatprep.subr.mxu0 0.0
    %158 = vmatpush1.msra.mxu0 0.0
    %159 = vmatprep.subr.mxu0 0.0
    %160 = vmatpush1.msra.mxu0 0.0
    %161 = vmatprep.subr.mxu0 0.0
    %162 = vmatpush1.msra.mxu0 %v109
    %163 = vmatprep.subr.mxu0 0.0
    %164 = vmatpush1.msra.mxu0 %v108
    %165 = vmatprep.subr.mxu0 0.0
    %166 = vmatpush1.msra.mxu0 %v107
    %167 = vmatprep.subr.mxu0 0.0
    %168 = vmatpush1.msra.mxu0 %v106
    %169 = vmatprep.subr.mxu0 0.0
    %170 = vmatpush2.msra.mxu0 0.0
    %171 = vmatprep.subr.mxu0 0.0
    %172 = vmatpush2.msra.mxu0 0.0
    %173 = vmatprep.subr.mxu0 0.0
    %174 = vmatpush2.msra.mxu0 0.0
    %175 = vmatprep.subr.mxu0 0.0
    %176 = vmatpush2.msra.mxu0 0.0
    %177 = vmatprep.subr.mxu0 0.0
    %178 = vmatpush2.msra.mxu0 0.0
    %179 = vmatprep.subr.mxu0 0.0
    %180 = vmatpush2.msra.mxu0 0.0
    %181 = vmatprep.subr.mxu0 0.0
    %182 = vmatpush2.msra.mxu0 0.0
    %183 = vmatprep.subr.mxu0 0.0
    %184 = vmatpush2.msra.mxu0 0.0
    %185 = vmatprep.subr.mxu0 0.0
    %186 = vmatpush2.msra.mxu0 0.0
    %187 = vmatprep.subr.mxu0 0.0
    %188 = vmatpush2.msra.mxu0 0.0
    %189 = vmatprep.subr.mxu0 0.0
    %190 = vmatpush2.msra.mxu0 0.0
    %191 = vmatprep.subr.mxu0 0.0
    %192 = vmatpush2.msra.mxu0 0.0
    %193 = vmatprep.subr.mxu0 0.0
    %194 = vmatpush2.msra.mxu0 0.0
    %195 = vmatprep.subr.mxu0 0.0
    %196 = vmatpush2.msra.mxu0 0.0
    %197 = vmatprep.subr.mxu0 0.0
    %198 = vmatpush2.msra.mxu0 0.0
    %199 = vmatprep.subr.mxu0 0.0
    %200 = vmatpush2.msra.mxu0 0.0
    %201 = vmatprep.mubr.f32.mxu0 0.0
    %202 = vmatmul.mubr.f32.gmra.mxu0 %v135
    %v203 = vpop.f32.mrf.mxu0
    %v204 = vadd.f32 0.0, %v203
    %v205 = vpop.f32.mrf.mxu0
    %206 = vdwg.mxu0
    %v207 = vmul.f32 %v110, %v117
    %v208 = vmul.f32 %v111, %v118
    %v209 = vmul.f32 %v112, %v119
    %v210 = vmul.f32 %v113, %v120
    %v211 = vmul.f32 %v110, %v121
    %v212 = vmul.f32 %v111, %v122
    %v213 = vmul.f32 %v112, %v123
    %v214 = vmul.f32 %v113, %v124
    %v215 = vmul.f32 %v110, %v125
    %v216 = vmul.f32 %v111, %v126
    %v217 = vmul.f32 %v112, %v127
    %v218 = vmul.f32 %v113, %v128
    %v219 = vmul.f32 %v110, %v129
    %v220 = vmul.f32 %v111, %v130
    %v221 = vmul.f32 %v112, %v131
    %v222 = vmul.f32 %v113, %v132
    %v224 = vunpack.c.l.s4 1966171168
    %v225 = vunpack.c.0.s8 %v224
    %v226 = vlaneseq
    %v227 = vshrl.u32 %v226, 7
    %v228 = vsub.s32 %v225, %v227
    %v229 = vrot.slane %v116, %v228
    %v230 = vcombine.high %v229, %v229
    %v232 = vunpack.c.l.s4 1966171168
    %v233 = vunpack.c.0.s8 %v232
    %v234 = vlaneseq
    %v235 = vshrl.u32 %v234, 7
    %v236 = vsub.s32 %v233, %v235
    %v237 = vrot.slane %v229, %v236
    %v239 = vunpack.c.l.s4 1966171168
    %v240 = vunpack.c.0.s8 %v239
    %v241 = vlaneseq
    %v242 = vshrl.u32 %v241, 7
    %v243 = vsub.s32 %v240, %v242
    %v244 = vrot.slane %v230, %v243
    %v245 = vcombine.high %v237, %v237
    %v246 = vcombine.high %v244, %v244
    %v247 = vlaneseq
    %v248 = vshrl.u32 %v247, 7
    %v249 = vsub.s32 0, %v248
    %v250 = vrot.slane %v237, %v249
    %v251 = vlaneseq
    %v252 = vshrl.u32 %v251, 7
    %v253 = vsub.s32 0, %v252
    %v254 = vrot.slane %v244, %v253
    %v255 = vlaneseq
    %v256 = vshrl.u32 %v255, 7
    %v257 = vsub.s32 0, %v256
    %v258 = vrot.slane %v245, %v257
    %v259 = vlaneseq
    %v260 = vshrl.u32 %v259, 7
    %v261 = vsub.s32 0, %v260
    %v262 = vrot.slane %v246, %v261
    %v267 = vmul.f32 %v207, %v250
    %v268 = vmul.f32 %v208, %v250
    %v269 = vmul.f32 %v209, %v250
    %v270 = vmul.f32 %v210, %v250
    %v271 = vmul.f32 %v211, %v254
    %v272 = vmul.f32 %v212, %v254
    %v273 = vmul.f32 %v213, %v254
    %v274 = vmul.f32 %v214, %v254
    %v275 = vmul.f32 %v215, %v258
    %v276 = vmul.f32 %v216, %v258
    %v277 = vmul.f32 %v217, %v258
    %v278 = vmul.f32 %v218, %v258
    %v279 = vmul.f32 %v219, %v262
    %v280 = vmul.f32 %v220, %v262
    %v281 = vmul.f32 %v221, %v262
    %v282 = vmul.f32 %v222, %v262
    %v283 = vsel %vm133, %v267, 0.0
    %284 = vadd.xlane.f32.xlu0 %v283
    %v285 = vpop.xlane.xlu0 %284
    %v286 = vsel %vm133, %v268, 0.0
    %287 = vadd.xlane.f32.xlu0 %v286
    %v288 = vpop.xlane.xlu0 %287
    %v289 = vsel %vm133, %v269, 0.0
    %290 = vadd.xlane.f32.xlu0 %v289
    %v291 = vpop.xlane.xlu0 %290
    %v292 = vsel %vm133, %v270, 0.0
    %293 = vadd.xlane.f32.xlu0 %v292
    %v294 = vpop.xlane.xlu0 %293
    %v295 = vsel %vm133, %v271, 0.0
    %296 = vadd.xlane.f32.xlu0 %v295
    %v297 = vpop.xlane.xlu0 %296
    %v298 = vsel %vm133, %v272, 0.0
    %299 = vadd.xlane.f32.xlu0 %v298
    %v300 = vpop.xlane.xlu0 %299
    %v301 = vsel %vm133, %v273, 0.0
    %302 = vadd.xlane.f32.xlu0 %v301
    %v303 = vpop.xlane.xlu0 %302
    %v304 = vsel %vm133, %v274, 0.0
    %305 = vadd.xlane.f32.xlu0 %v304
    %v306 = vpop.xlane.xlu0 %305
    %v307 = vsel %vm133, %v275, 0.0
    %308 = vadd.xlane.f32.xlu0 %v307
    %v309 = vpop.xlane.xlu0 %308
    %v310 = vsel %vm133, %v276, 0.0
    %311 = vadd.xlane.f32.xlu0 %v310
    %v312 = vpop.xlane.xlu0 %311
    %v313 = vsel %vm133, %v277, 0.0
    %314 = vadd.xlane.f32.xlu0 %v313
    %v315 = vpop.xlane.xlu0 %314
    %v316 = vsel %vm133, %v278, 0.0
    %317 = vadd.xlane.f32.xlu0 %v316
    %v318 = vpop.xlane.xlu0 %317
    %v319 = vsel %vm133, %v279, 0.0
    %320 = vadd.xlane.f32.xlu0 %v319
    %v321 = vpop.xlane.xlu0 %320
    %v322 = vsel %vm133, %v280, 0.0
    %323 = vadd.xlane.f32.xlu0 %v322
    %v324 = vpop.xlane.xlu0 %323
    %v325 = vsel %vm133, %v281, 0.0
    %326 = vadd.xlane.f32.xlu0 %v325
    %v327 = vpop.xlane.xlu0 %326
    %v328 = vsel %vm133, %v282, 0.0
    %329 = vadd.xlane.f32.xlu0 %v328
    %v330 = vpop.xlane.xlu0 %329
    %v331 = vld [vmem:[#allocation4] sm:$0xf]
    %v332 = vadd.f32 %v331, %v204
    %v349 = vlaneseq
    %v350 = vand.u32 %v349, 127
    %v351 = vlaneseq
    %v352 = vshrl.u32 %v351, 7
    %v353 = vsub.s32 %v350, %v352
    %v354 = vrot.slane %v285, %v353
    %v355 = vadd.s32 %v350, 4294967288
    %v356 = vlaneseq
    %v357 = vshrl.u32 %v356, 7
    %v358 = vsub.s32 %v355, %v357
    %v359 = vrot.slane %v288, %v358
    %vm360 = vcmask 130112
    %v361 = vsel %vm360, %v359, %v354
    %v362 = vadd.s32 %v350, 4294967280
    %v363 = vlaneseq
    %v364 = vshrl.u32 %v363, 7
    %v365 = vsub.s32 %v362, %v364
    %v366 = vrot.slane %v291, %v365
    %vm367 = vcmask 195712
    %v368 = vsel %vm367, %v366, %v361
    %v369 = vadd.s32 %v350, 4294967272
    %v370 = vlaneseq
    %v371 = vshrl.u32 %v370, 7
    %v372 = vsub.s32 %v369, %v371
    %v373 = vrot.slane %v294, %v372
    %vm374 = vcmask 261312
    %v375 = vsel %vm374, %v373, %v368
    %v376 = vlaneseq
    %v377 = vshrl.u32 %v376, 7
    %v378 = vsub.s32 %v350, %v377
    %v379 = vrot.slane %v297, %v378
    %v380 = vlaneseq
    %v381 = vshrl.u32 %v380, 7
    %v382 = vsub.s32 %v355, %v381
    %v383 = vrot.slane %v300, %v382
    %v384 = vsel %vm360, %v383, %v379
    %v385 = vlaneseq
    %v386 = vshrl.u32 %v385, 7
    %v387 = vsub.s32 %v362, %v386
    %v388 = vrot.slane %v303, %v387
    %v389 = vsel %vm367, %v388, %v384
    %v390 = vlaneseq
    %v391 = vshrl.u32 %v390, 7
    %v392 = vsub.s32 %v369, %v391
    %v393 = vrot.slane %v306, %v392
    %v394 = vsel %vm374, %v393, %v389
    %v395 = vlaneseq
    %v396 = vshrl.u32 %v395, 7
    %v397 = vsub.s32 %v350, %v396
    %v398 = vrot.slane %v309, %v397
    %v399 = vlaneseq
    %v400 = vshrl.u32 %v399, 7
    %v401 = vsub.s32 %v355, %v400
    %v402 = vrot.slane %v312, %v401
    %v403 = vsel %vm360, %v402, %v398
    %v404 = vlaneseq
    %v405 = vshrl.u32 %v404, 7
    %v406 = vsub.s32 %v362, %v405
    %v407 = vrot.slane %v315, %v406
    %v408 = vsel %vm367, %v407, %v403
    %v409 = vlaneseq
    %v410 = vshrl.u32 %v409, 7
    %v411 = vsub.s32 %v369, %v410
    %v412 = vrot.slane %v318, %v411
    %v413 = vsel %vm374, %v412, %v408
    %v414 = vlaneseq
    %v415 = vshrl.u32 %v414, 7
    %v416 = vsub.s32 %v350, %v415
    %v417 = vrot.slane %v321, %v416
    %v418 = vlaneseq
    %v419 = vshrl.u32 %v418, 7
    %v420 = vsub.s32 %v355, %v419
    %v421 = vrot.slane %v324, %v420
    %v422 = vsel %vm360, %v421, %v417
    %v423 = vlaneseq
    %v424 = vshrl.u32 %v423, 7
    %v425 = vsub.s32 %v362, %v424
    %v426 = vrot.slane %v327, %v425
    %v427 = vsel %vm367, %v426, %v422
    %v428 = vlaneseq
    %v429 = vshrl.u32 %v428, 7
    %v430 = vsub.s32 %v369, %v429
    %v431 = vrot.slane %v330, %v430
    %v432 = vsel %vm374, %v431, %v427
    %vm433 = vcmask 1041409
    %v434 = vsel %vm433, %v394, %v375
    %vm435 = vcmask 1042434
    %v436 = vsel %vm435, %v413, %v434
    %vm437 = vcmask 1043459
    %v438 = vsel %vm437, %v432, %v436
    %v440 = vadd.f32 %v332, %v438
    %v441 = vtanh.pop %v440
    %442 = vst.msk [vmem:[#allocation12] sm:$0xf] %vm85, %v441
    %v444 = vlaneseq
    %v445 = vshrl.u32 %v444, 7
    %v446 = vsub.s32 0, %v445
    %v447 = vrot.slane %v114, %v446
    %v449 = vmul.f32 %v441, %v447
    %v450 = vsel %vm85, %v449, 0.0
    %451 = vadd.xlane.f32.xlu0 %v450
    %v452 = vpop.xlane.xlu0 %451
    %v454 = vlaneseq
    %v455 = vshrl.u32 %v454, 7
    %v456 = vsub.s32 0, %v455
    %v457 = vrot.slane %v115, %v456
    %v459 = vadd.f32 %v452, %v457
    %v460 = vtanh.pop %v459
    %462 = vset.pattern.permute.xlu0 0
    %463 = vperm.xlu0 %462, %v460
    %v464 = vpop.permute.xlu0 %463
    %v466 = vmul.f32 %v464, %v441
    %v467 = vlaneseq
    %v468 = vshrl.u32 %v467, 7
    %v469 = vsub.s32 0, %v468
    %v470 = vrot.slane %v466, %v469
    %472 = vbcast.lane.b32.xlu0 %v470, 256
    %v473 = vpop.permute.xlu0 %472
    %s475 = sor.u32 256, 8
    %476 = vbcast.lane.b32.xlu0 %v470, %s475
    %v477 = vpop.permute.xlu0 %476
    %s479 = sor.u32 256, 16
    %480 = vbcast.lane.b32.xlu0 %v470, %s479
    %v481 = vpop.permute.xlu0 %480
    %s483 = sor.u32 256, 24
    %484 = vbcast.lane.b32.xlu0 %v470, %s483
    %v485 = vpop.permute.xlu0 %484
    %v486 = vlaneseq
    %v487 = vshrl.u32 %v486, 7
    %v488 = vsub.s32 1, %v487
    %v489 = vrot.slane %v466, %v488
    %491 = vbcast.lane.b32.xlu0 %v489, 256
    %v492 = vpop.permute.xlu0 %491
    %s494 = sor.u32 256, 8
    %495 = vbcast.lane.b32.xlu0 %v489, %s494
    %v496 = vpop.permute.xlu0 %495
    %s498 = sor.u32 256, 16
    %499 = vbcast.lane.b32.xlu0 %v489, %s498
    %v500 = vpop.permute.xlu0 %499
    %s502 = sor.u32 256, 24
    %503 = vbcast.lane.b32.xlu0 %v489, %s502
    %v504 = vpop.permute.xlu0 %503
    %v505 = vlaneseq
    %v506 = vshrl.u32 %v505, 7
    %v507 = vsub.s32 2, %v506
    %v508 = vrot.slane %v466, %v507
    %510 = vbcast.lane.b32.xlu0 %v508, 256
    %v511 = vpop.permute.xlu0 %510
    %s513 = sor.u32 256, 8
    %514 = vbcast.lane.b32.xlu0 %v508, %s513
    %v515 = vpop.permute.xlu0 %514
    %s517 = sor.u32 256, 16
    %518 = vbcast.lane.b32.xlu0 %v508, %s517
    %v519 = vpop.permute.xlu0 %518
    %s521 = sor.u32 256, 24
    %522 = vbcast.lane.b32.xlu0 %v508, %s521
    %v523 = vpop.permute.xlu0 %522
    %v524 = vlaneseq
    %v525 = vshrl.u32 %v524, 7
    %v526 = vsub.s32 3, %v525
    %v527 = vrot.slane %v466, %v526
    %529 = vbcast.lane.b32.xlu0 %v527, 256
    %v530 = vpop.permute.xlu0 %529
    %s532 = sor.u32 256, 8
    %533 = vbcast.lane.b32.xlu0 %v527, %s532
    %v534 = vpop.permute.xlu0 %533
    %s536 = sor.u32 256, 16
    %537 = vbcast.lane.b32.xlu0 %v527, %s536
    %v538 = vpop.permute.xlu0 %537
    %s540 = sor.u32 256, 24
    %541 = vbcast.lane.b32.xlu0 %v527, %s540
    %v542 = vpop.permute.xlu0 %541
    %v543 = vmul.f32 %v473, %v250
    %v544 = vmul.f32 %v477, %v250
    %v545 = vmul.f32 %v481, %v250
    %v546 = vmul.f32 %v485, %v250
    %v547 = vmul.f32 %v492, %v254
    %v548 = vmul.f32 %v496, %v254
    %v549 = vmul.f32 %v500, %v254
    %v550 = vmul.f32 %v504, %v254
    %v551 = vmul.f32 %v511, %v258
    %v552 = vmul.f32 %v515, %v258
    %v553 = vmul.f32 %v519, %v258
    %v554 = vmul.f32 %v523, %v258
    %v555 = vmul.f32 %v530, %v262
    %v556 = vmul.f32 %v534, %v262
    %v557 = vmul.f32 %v538, %v262
    %v558 = vmul.f32 %v542, %v262
    %v559 = vadd.f32 %v117, %v543
    %v560 = vadd.f32 %v118, %v544
    %v561 = vadd.f32 %v119, %v545
    %v562 = vadd.f32 %v120, %v546
    %v563 = vadd.f32 %v121, %v547
    %v564 = vadd.f32 %v122, %v548
    %v565 = vadd.f32 %v123, %v549
    %v566 = vadd.f32 %v124, %v550
    %v567 = vadd.f32 %v125, %v551
    %v568 = vadd.f32 %v126, %v552
    %v569 = vadd.f32 %v127, %v553
    %v570 = vadd.f32 %v128, %v554
    %v571 = vadd.f32 %v129, %v555
    %v572 = vadd.f32 %v130, %v556
    %v573 = vadd.f32 %v131, %v557
    %v574 = vadd.f32 %v132, %v558
    %v575 = vmax.f32 %v559, -1.0
    %v576 = vmax.f32 %v560, -1.0
    %v577 = vmax.f32 %v561, -1.0
    %v578 = vmax.f32 %v562, -1.0
    %v579 = vmax.f32 %v563, -1.0
    %v580 = vmax.f32 %v564, -1.0
    %v581 = vmax.f32 %v565, -1.0
    %v582 = vmax.f32 %v566, -1.0
    %v583 = vmax.f32 %v567, -1.0
    %v584 = vmax.f32 %v568, -1.0
    %v585 = vmax.f32 %v569, -1.0
    %v586 = vmax.f32 %v570, -1.0
    %v587 = vmax.f32 %v571, -1.0
    %v588 = vmax.f32 %v572, -1.0
    %v589 = vmax.f32 %v573, -1.0
    %v590 = vmax.f32 %v574, -1.0
    %v591 = vmin.f32 %v575, 1.0
    %v592 = vmin.f32 %v576, 1.0
    %v593 = vmin.f32 %v577, 1.0
    %v594 = vmin.f32 %v578, 1.0
    %v595 = vmin.f32 %v579, 1.0
    %v596 = vmin.f32 %v580, 1.0
    %v597 = vmin.f32 %v581, 1.0
    %v598 = vmin.f32 %v582, 1.0
    %v599 = vmin.f32 %v583, 1.0
    %v600 = vmin.f32 %v584, 1.0
    %v601 = vmin.f32 %v585, 1.0
    %v602 = vmin.f32 %v586, 1.0
    %v603 = vmin.f32 %v587, 1.0
    %v604 = vmin.f32 %v588, 1.0
    %v605 = vmin.f32 %v589, 1.0
    %v606 = vmin.f32 %v590, 1.0
    %607 = vst.msk [vmem:[#allocation15] sm:$0xff] %vm133, %v591
    %608 = vst.msk [vmem:[#allocation15 + $0x8] sm:$0xff] %vm133, %v592
    %609 = vst.msk [vmem:[#allocation15 + $0x10] sm:$0xff] %vm133, %v593
    %610 = vst.msk [vmem:[#allocation15 + $0x18] sm:$0xff] %vm133, %v594
    %611 = vst.msk [vmem:[#allocation15 + $0x20] sm:$0xff] %vm133, %v595
    %612 = vst.msk [vmem:[#allocation15 + $0x28] sm:$0xff] %vm133, %v596
    %613 = vst.msk [vmem:[#allocation15 + $0x30] sm:$0xff] %vm133, %v597
    %614 = vst.msk [vmem:[#allocation15 + $0x38] sm:$0xff] %vm133, %v598
    %615 = vst.msk [vmem:[#allocation15 + $0x40] sm:$0xff] %vm133, %v599
    %616 = vst.msk [vmem:[#allocation15 + $0x48] sm:$0xff] %vm133, %v600
    %617 = vst.msk [vmem:[#allocation15 + $0x50] sm:$0xff] %vm133, %v601
    %618 = vst.msk [vmem:[#allocation15 + $0x58] sm:$0xff] %vm133, %v602
    %619 = vst.msk [vmem:[#allocation15 + $0x60] sm:$0xff] %vm133, %v603
    %620 = vst.msk [vmem:[#allocation15 + $0x68] sm:$0xff] %vm133, %v604
    %621 = vst.msk [vmem:[#allocation15 + $0x70] sm:$0xff] %vm133, %v605
    %622 = vst.msk [vmem:[#allocation15 + $0x78] sm:$0xff] %vm133, %v606
    %623 = vst.msk [vmem:[#allocation13] sm:$0xf] %vm85, %v441
    %v624 = vld [vmem:[#allocation13] sm:$0xf]
    %v625 = vld [vmem:[#allocation15] sm:$0xff]
    %v626 = vld [vmem:[#allocation15 + $0x8] sm:$0xff]
    %v627 = vld [vmem:[#allocation15 + $0x10] sm:$0xff]
    %v628 = vld [vmem:[#allocation15 + $0x18] sm:$0xff]
    %v629 = vld [vmem:[#allocation15 + $0x20] sm:$0xff]
    %v630 = vld [vmem:[#allocation15 + $0x28] sm:$0xff]
    %v631 = vld [vmem:[#allocation15 + $0x30] sm:$0xff]
    %v632 = vld [vmem:[#allocation15 + $0x38] sm:$0xff]
    %v633 = vld [vmem:[#allocation15 + $0x40] sm:$0xff]
    %v634 = vld [vmem:[#allocation15 + $0x48] sm:$0xff]
    %v635 = vld [vmem:[#allocation15 + $0x50] sm:$0xff]
    %v636 = vld [vmem:[#allocation15 + $0x58] sm:$0xff]
    %v637 = vld [vmem:[#allocation15 + $0x60] sm:$0xff]
    %v638 = vld [vmem:[#allocation15 + $0x68] sm:$0xff]
    %v639 = vld [vmem:[#allocation15 + $0x70] sm:$0xff]
    %v640 = vld [vmem:[#allocation15 + $0x78] sm:$0xff]
    %v642 = vsel %vm133, %v624, 0
    %644 = vmatprep.subr.mxu0 0.0
    %645 = vmatpush1.msra.mxu0 0.0
    %646 = vmatprep.subr.mxu0 0.0
    %647 = vmatpush1.msra.mxu0 0.0
    %648 = vmatprep.subr.mxu0 0.0
    %649 = vmatpush1.msra.mxu0 0.0
    %650 = vmatprep.subr.mxu0 0.0
    %651 = vmatpush1.msra.mxu0 0.0
    %652 = vmatprep.subr.mxu0 0.0
    %653 = vmatpush1.msra.mxu0 0.0
    %654 = vmatprep.subr.mxu0 0.0
    %655 = vmatpush1.msra.mxu0 0.0
    %656 = vmatprep.subr.mxu0 0.0
    %657 = vmatpush1.msra.mxu0 0.0
    %658 = vmatprep.subr.mxu0 0.0
    %659 = vmatpush1.msra.mxu0 0.0
    %660 = vmatprep.subr.mxu0 0.0
    %661 = vmatpush1.msra.mxu0 0.0
    %662 = vmatprep.subr.mxu0 0.0
    %663 = vmatpush1.msra.mxu0 0.0
    %664 = vmatprep.subr.mxu0 0.0
    %665 = vmatpush1.msra.mxu0 0.0
    %666 = vmatprep.subr.mxu0 0.0
    %667 = vmatpush1.msra.mxu0 0.0
    %668 = vmatprep.subr.mxu0 0.0
    %669 = vmatpush1.msra.mxu0 %v109
    %670 = vmatprep.subr.mxu0 0.0
    %671 = vmatpush1.msra.mxu0 %v108
    %672 = vmatprep.subr.mxu0 0.0
    %673 = vmatpush1.msra.mxu0 %v107
    %674 = vmatprep.subr.mxu0 0.0
    %675 = vmatpush1.msra.mxu0 %v106
    %676 = vmatprep.subr.mxu0 0.0
    %677 = vmatpush2.msra.mxu0 0.0
    %678 = vmatprep.subr.mxu0 0.0
    %679 = vmatpush2.msra.mxu0 0.0
    %680 = vmatprep.subr.mxu0 0.0
    %681 = vmatpush2.msra.mxu0 0.0
    %682 = vmatprep.subr.mxu0 0.0
    %683 = vmatpush2.msra.mxu0 0.0
    %684 = vmatprep.subr.mxu0 0.0
    %685 = vmatpush2.msra.mxu0 0.0
    %686 = vmatprep.subr.mxu0 0.0
    %687 = vmatpush2.msra.mxu0 0.0
    %688 = vmatprep.subr.mxu0 0.0
    %689 = vmatpush2.msra.mxu0 0.0
    %690 = vmatprep.subr.mxu0 0.0
    %691 = vmatpush2.msra.mxu0 0.0
    %692 = vmatprep.subr.mxu0 0.0
    %693 = vmatpush2.msra.mxu0 0.0
    %694 = vmatprep.subr.mxu0 0.0
    %695 = vmatpush2.msra.mxu0 0.0
    %696 = vmatprep.subr.mxu0 0.0
    %697 = vmatpush2.msra.mxu0 0.0
    %698 = vmatprep.subr.mxu0 0.0
    %699 = vmatpush2.msra.mxu0 0.0
    %700 = vmatprep.subr.mxu0 0.0
    %701 = vmatpush2.msra.mxu0 0.0
    %702 = vmatprep.subr.mxu0 0.0
    %703 = vmatpush2.msra.mxu0 0.0
    %704 = vmatprep.subr.mxu0 0.0
    %705 = vmatpush2.msra.mxu0 0.0
    %706 = vmatprep.subr.mxu0 0.0
    %707 = vmatpush2.msra.mxu0 0.0
    %708 = vmatprep.mubr.f32.mxu0 0.0
    %709 = vmatmul.mubr.f32.gmra.mxu0 %v642
    %v710 = vpop.f32.mrf.mxu0
    %v711 = vadd.f32 0.0, %v710
    %v712 = vpop.f32.mrf.mxu0
    %713 = vdwg.mxu0
    %v714 = vmul.f32 %v110, %v625
    %v715 = vmul.f32 %v111, %v626
    %v716 = vmul.f32 %v112, %v627
    %v717 = vmul.f32 %v113, %v628
    %v718 = vmul.f32 %v110, %v629
    %v719 = vmul.f32 %v111, %v630
    %v720 = vmul.f32 %v112, %v631
    %v721 = vmul.f32 %v113, %v632
    %v722 = vmul.f32 %v110, %v633
    %v723 = vmul.f32 %v111, %v634
    %v724 = vmul.f32 %v112, %v635
    %v725 = vmul.f32 %v113, %v636
    %v726 = vmul.f32 %v110, %v637
    %v727 = vmul.f32 %v111, %v638
    %v728 = vmul.f32 %v112, %v639
    %v729 = vmul.f32 %v113, %v640
    %v731 = vunpack.c.l.s4 1966171168
    %v732 = vunpack.c.0.s8 %v731
    %v733 = vlaneseq
    %v734 = vshrl.u32 %v733, 7
    %v735 = vsub.s32 %v732, %v734
    %v736 = vrot.slane %v624, %v735
    %v737 = vcombine.high %v736, %v736
    %v739 = vunpack.c.l.s4 1966171168
    %v740 = vunpack.c.0.s8 %v739
    %v741 = vlaneseq
    %v742 = vshrl.u32 %v741, 7
    %v743 = vsub.s32 %v740, %v742
    %v744 = vrot.slane %v736, %v743
    %v746 = vunpack.c.l.s4 1966171168
    %v747 = vunpack.c.0.s8 %v746
    %v748 = vlaneseq
    %v749 = vshrl.u32 %v748, 7
    %v750 = vsub.s32 %v747, %v749
    %v751 = vrot.slane %v737, %v750
    %v752 = vcombine.high %v744, %v744
    %v753 = vcombine.high %v751, %v751
    %v754 = vlaneseq
    %v755 = vshrl.u32 %v754, 7
    %v756 = vsub.s32 0, %v755
    %v757 = vrot.slane %v744, %v756
    %v758 = vlaneseq
    %v759 = vshrl.u32 %v758, 7
    %v760 = vsub.s32 0, %v759
    %v761 = vrot.slane %v751, %v760
    %v762 = vlaneseq
    %v763 = vshrl.u32 %v762, 7
    %v764 = vsub.s32 0, %v763
    %v765 = vrot.slane %v752, %v764
    %v766 = vlaneseq
    %v767 = vshrl.u32 %v766, 7
    %v768 = vsub.s32 0, %v767
    %v769 = vrot.slane %v753, %v768
    %v774 = vmul.f32 %v714, %v757
    %v775 = vmul.f32 %v715, %v757
    %v776 = vmul.f32 %v716, %v757
    %v777 = vmul.f32 %v717, %v757
    %v778 = vmul.f32 %v718, %v761
    %v779 = vmul.f32 %v719, %v761
    %v780 = vmul.f32 %v720, %v761
    %v781 = vmul.f32 %v721, %v761
    %v782 = vmul.f32 %v722, %v765
    %v783 = vmul.f32 %v723, %v765
    %v784 = vmul.f32 %v724, %v765
    %v785 = vmul.f32 %v725, %v765
    %v786 = vmul.f32 %v726, %v769
    %v787 = vmul.f32 %v727, %v769
    %v788 = vmul.f32 %v728, %v769
    %v789 = vmul.f32 %v729, %v769
    %v790 = vsel %vm133, %v774, 0.0
    %791 = vadd.xlane.f32.xlu0 %v790
    %v792 = vpop.xlane.xlu0 %791
    %v793 = vsel %vm133, %v775, 0.0
    %794 = vadd.xlane.f32.xlu0 %v793
    %v795 = vpop.xlane.xlu0 %794
    %v796 = vsel %vm133, %v776, 0.0
    %797 = vadd.xlane.f32.xlu0 %v796
    %v798 = vpop.xlane.xlu0 %797
    %v799 = vsel %vm133, %v777, 0.0
    %800 = vadd.xlane.f32.xlu0 %v799
    %v801 = vpop.xlane.xlu0 %800
    %v802 = vsel %vm133, %v778, 0.0
    %803 = vadd.xlane.f32.xlu0 %v802
    %v804 = vpop.xlane.xlu0 %803
    %v805 = vsel %vm133, %v779, 0.0
    %806 = vadd.xlane.f32.xlu0 %v805
    %v807 = vpop.xlane.xlu0 %806
    %v808 = vsel %vm133, %v780, 0.0
    %809 = vadd.xlane.f32.xlu0 %v808
    %v810 = vpop.xlane.xlu0 %809
    %v811 = vsel %vm133, %v781, 0.0
    %812 = vadd.xlane.f32.xlu0 %v811
    %v813 = vpop.xlane.xlu0 %812
    %v814 = vsel %vm133, %v782, 0.0
    %815 = vadd.xlane.f32.xlu0 %v814
    %v816 = vpop.xlane.xlu0 %815
    %v817 = vsel %vm133, %v783, 0.0
    %818 = vadd.xlane.f32.xlu0 %v817
    %v819 = vpop.xlane.xlu0 %818
    %v820 = vsel %vm133, %v784, 0.0
    %821 = vadd.xlane.f32.xlu0 %v820
    %v822 = vpop.xlane.xlu0 %821
    %v823 = vsel %vm133, %v785, 0.0
    %824 = vadd.xlane.f32.xlu0 %v823
    %v825 = vpop.xlane.xlu0 %824
    %v826 = vsel %vm133, %v786, 0.0
    %827 = vadd.xlane.f32.xlu0 %v826
    %v828 = vpop.xlane.xlu0 %827
    %v829 = vsel %vm133, %v787, 0.0
    %830 = vadd.xlane.f32.xlu0 %v829
    %v831 = vpop.xlane.xlu0 %830
    %v832 = vsel %vm133, %v788, 0.0
    %833 = vadd.xlane.f32.xlu0 %v832
    %v834 = vpop.xlane.xlu0 %833
    %v835 = vsel %vm133, %v789, 0.0
    %836 = vadd.xlane.f32.xlu0 %v835
    %v837 = vpop.xlane.xlu0 %836
    %s838 = scalar_lea.vmem [#allocation4], 4
    %v839 = vld [vmem:[%s838] sm:$0xf]
    %v840 = vadd.f32 %v839, %v711
    %v857 = vlaneseq
    %v858 = vshrl.u32 %v857, 7
    %v859 = vsub.s32 %v350, %v858
    %v860 = vrot.slane %v792, %v859
    %v861 = vlaneseq
    %v862 = vshrl.u32 %v861, 7
    %v863 = vsub.s32 %v355, %v862
    %v864 = vrot.slane %v795, %v863
    %v865 = vsel %vm360, %v864, %v860
    %v866 = vlaneseq
    %v867 = vshrl.u32 %v866, 7
    %v868 = vsub.s32 %v362, %v867
    %v869 = vrot.slane %v798, %v868
    %v870 = vsel %vm367, %v869, %v865
    %v871 = vlaneseq
    %v872 = vshrl.u32 %v871, 7
    %v873 = vsub.s32 %v369, %v872
    %v874 = vrot.slane %v801, %v873
    %v875 = vsel %vm374, %v874, %v870
    %v876 = vlaneseq
    %v877 = vshrl.u32 %v876, 7
    %v878 = vsub.s32 %v350, %v877
    %v879 = vrot.slane %v804, %v878
    %v880 = vlaneseq
    %v881 = vshrl.u32 %v880, 7
    %v882 = vsub.s32 %v355, %v881
    %v883 = vrot.slane %v807, %v882
    %v884 = vsel %vm360, %v883, %v879
    %v885 = vlaneseq
    %v886 = vshrl.u32 %v885, 7
    %v887 = vsub.s32 %v362, %v886
    %v888 = vrot.slane %v810, %v887
    %v889 = vsel %vm367, %v888, %v884
    %v890 = vlaneseq
    %v891 = vshrl.u32 %v890, 7
    %v892 = vsub.s32 %v369, %v891
    %v893 = vrot.slane %v813, %v892
    %v894 = vsel %vm374, %v893, %v889
    %v895 = vlaneseq
    %v896 = vshrl.u32 %v895, 7
    %v897 = vsub.s32 %v350, %v896
    %v898 = vrot.slane %v816, %v897
    %v899 = vlaneseq
    %v900 = vshrl.u32 %v899, 7
    %v901 = vsub.s32 %v355, %v900
    %v902 = vrot.slane %v819, %v901
    %v903 = vsel %vm360, %v902, %v898
    %v904 = vlaneseq
    %v905 = vshrl.u32 %v904, 7
    %v906 = vsub.s32 %v362, %v905
    %v907 = vrot.slane %v822, %v906
    %v908 = vsel %vm367, %v907, %v903
    %v909 = vlaneseq
    %v910 = vshrl.u32 %v909, 7
    %v911 = vsub.s32 %v369, %v910
    %v912 = vrot.slane %v825, %v911
    %v913 = vsel %vm374, %v912, %v908
    %v914 = vlaneseq
    %v915 = vshrl.u32 %v914, 7
    %v916 = vsub.s32 %v350, %v915
    %v917 = vrot.slane %v828, %v916
    %v918 = vlaneseq
    %v919 = vshrl.u32 %v918, 7
    %v920 = vsub.s32 %v355, %v919
    %v921 = vrot.slane %v831, %v920
    %v922 = vsel %vm360, %v921, %v917
    %v923 = vlaneseq
    %v924 = vshrl.u32 %v923, 7
    %v925 = vsub.s32 %v362, %v924
    %v926 = vrot.slane %v834, %v925
    %v927 = vsel %vm367, %v926, %v922
    %v928 = vlaneseq
    %v929 = vshrl.u32 %v928, 7
    %v930 = vsub.s32 %v369, %v929
    %v931 = vrot.slane %v837, %v930
    %v932 = vsel %vm374, %v931, %v927
    %v933 = vsel %vm433, %v894, %v875
    %v934 = vsel %vm435, %v913, %v933
    %v935 = vsel %vm437, %v932, %v934
    %v937 = vadd.f32 %v840, %v935
    %v938 = vtanh.pop %v937
    %s939 = scalar_lea.vmem [#allocation12], 4
    %940 = vst.msk [vmem:[%s939] sm:$0xf] %vm85, %v938
    %v941 = vmul.f32 %v938, %v447
    %v942 = vsel %vm85, %v941, 0.0
    %943 = vadd.xlane.f32.xlu0 %v942
    %v944 = vpop.xlane.xlu0 %943
    %v945 = vadd.f32 %v944, %v457
    %v946 = vtanh.pop %v945
    %948 = vset.pattern.permute.xlu0 0
    %949 = vperm.xlu0 %948, %v946
    %v950 = vpop.permute.xlu0 %949
    %v952 = vmul.f32 %v950, %v938
    %v953 = vlaneseq
    %v954 = vshrl.u32 %v953, 7
    %v955 = vsub.s32 0, %v954
    %v956 = vrot.slane %v952, %v955
    %958 = vbcast.lane.b32.xlu0 %v956, 256
    %v959 = vpop.permute.xlu0 %958
    %s961 = sor.u32 256, 8
    %962 = vbcast.lane.b32.xlu0 %v956, %s961
    %v963 = vpop.permute.xlu0 %962
    %s965 = sor.u32 256, 16
    %966 = vbcast.lane.b32.xlu0 %v956, %s965
    %v967 = vpop.permute.xlu0 %966
    %s969 = sor.u32 256, 24
    %970 = vbcast.lane.b32.xlu0 %v956, %s969
    %v971 = vpop.permute.xlu0 %970
    %v972 = vlaneseq
    %v973 = vshrl.u32 %v972, 7
    %v974 = vsub.s32 1, %v973
    %v975 = vrot.slane %v952, %v974
    %977 = vbcast.lane.b32.xlu0 %v975, 256
    %v978 = vpop.permute.xlu0 %977
    %s980 = sor.u32 256, 8
    %981 = vbcast.lane.b32.xlu0 %v975, %s980
    %v982 = vpop.permute.xlu0 %981
    %s984 = sor.u32 256, 16
    %985 = vbcast.lane.b32.xlu0 %v975, %s984
    %v986 = vpop.permute.xlu0 %985
    %s988 = sor.u32 256, 24
    %989 = vbcast.lane.b32.xlu0 %v975, %s988
    %v990 = vpop.permute.xlu0 %989
    %v991 = vlaneseq
    %v992 = vshrl.u32 %v991, 7
    %v993 = vsub.s32 2, %v992
    %v994 = vrot.slane %v952, %v993
    %996 = vbcast.lane.b32.xlu0 %v994, 256
    %v997 = vpop.permute.xlu0 %996
    %s999 = sor.u32 256, 8
    %1000 = vbcast.lane.b32.xlu0 %v994, %s999
    %v1001 = vpop.permute.xlu0 %1000
    %s1003 = sor.u32 256, 16
    %1004 = vbcast.lane.b32.xlu0 %v994, %s1003
    %v1005 = vpop.permute.xlu0 %1004
    %s1007 = sor.u32 256, 24
    %1008 = vbcast.lane.b32.xlu0 %v994, %s1007
    %v1009 = vpop.permute.xlu0 %1008
    %v1010 = vlaneseq
    %v1011 = vshrl.u32 %v1010, 7
    %v1012 = vsub.s32 3, %v1011
    %v1013 = vrot.slane %v952, %v1012
    %1015 = vbcast.lane.b32.xlu0 %v1013, 256
    %v1016 = vpop.permute.xlu0 %1015
    %s1018 = sor.u32 256, 8
    %1019 = vbcast.lane.b32.xlu0 %v1013, %s1018
    %v1020 = vpop.permute.xlu0 %1019
    %s1022 = sor.u32 256, 16
    %1023 = vbcast.lane.b32.xlu0 %v1013, %s1022
    %v1024 = vpop.permute.xlu0 %1023
    %s1026 = sor.u32 256, 24
    %1027 = vbcast.lane.b32.xlu0 %v1013, %s1026
    %v1028 = vpop.permute.xlu0 %1027
    %v1029 = vmul.f32 %v959, %v757
    %v1030 = vmul.f32 %v963, %v757
    %v1031 = vmul.f32 %v967, %v757
    %v1032 = vmul.f32 %v971, %v757
    %v1033 = vmul.f32 %v978, %v761
    %v1034 = vmul.f32 %v982, %v761
    %v1035 = vmul.f32 %v986, %v761
    %v1036 = vmul.f32 %v990, %v761
    %v1037 = vmul.f32 %v997, %v765
    %v1038 = vmul.f32 %v1001, %v765
    %v1039 = vmul.f32 %v1005, %v765
    %v1040 = vmul.f32 %v1009, %v765
    %v1041 = vmul.f32 %v1016, %v769
    %v1042 = vmul.f32 %v1020, %v769
    %v1043 = vmul.f32 %v1024, %v769
    %v1044 = vmul.f32 %v1028, %v769
    %v1045 = vadd.f32 %v625, %v1029
    %v1046 = vadd.f32 %v626, %v1030
    %v1047 = vadd.f32 %v627, %v1031
    %v1048 = vadd.f32 %v628, %v1032
    %v1049 = vadd.f32 %v629, %v1033
    %v1050 = vadd.f32 %v630, %v1034
    %v1051 = vadd.f32 %v631, %v1035
    %v1052 = vadd.f32 %v632, %v1036
    %v1053 = vadd.f32 %v633, %v1037
    %v1054 = vadd.f32 %v634, %v1038
    %v1055 = vadd.f32 %v635, %v1039
    %v1056 = vadd.f32 %v636, %v1040
    %v1057 = vadd.f32 %v637, %v1041
    %v1058 = vadd.f32 %v638, %v1042
    %v1059 = vadd.f32 %v639, %v1043
    %v1060 = vadd.f32 %v640, %v1044
    %v1061 = vmax.f32 %v1045, -1.0
    %v1062 = vmax.f32 %v1046, -1.0
    %v1063 = vmax.f32 %v1047, -1.0
    %v1064 = vmax.f32 %v1048, -1.0
    %v1065 = vmax.f32 %v1049, -1.0
    %v1066 = vmax.f32 %v1050, -1.0
    %v1067 = vmax.f32 %v1051, -1.0
    %v1068 = vmax.f32 %v1052, -1.0
    %v1069 = vmax.f32 %v1053, -1.0
    %v1070 = vmax.f32 %v1054, -1.0
    %v1071 = vmax.f32 %v1055, -1.0
    %v1072 = vmax.f32 %v1056, -1.0
    %v1073 = vmax.f32 %v1057, -1.0
    %v1074 = vmax.f32 %v1058, -1.0
    %v1075 = vmax.f32 %v1059, -1.0
    %v1076 = vmax.f32 %v1060, -1.0
    %v1077 = vmin.f32 %v1061, 1.0
    %v1078 = vmin.f32 %v1062, 1.0
    %v1079 = vmin.f32 %v1063, 1.0
    %v1080 = vmin.f32 %v1064, 1.0
    %v1081 = vmin.f32 %v1065, 1.0
    %v1082 = vmin.f32 %v1066, 1.0
    %v1083 = vmin.f32 %v1067, 1.0
    %v1084 = vmin.f32 %v1068, 1.0
    %v1085 = vmin.f32 %v1069, 1.0
    %v1086 = vmin.f32 %v1070, 1.0
    %v1087 = vmin.f32 %v1071, 1.0
    %v1088 = vmin.f32 %v1072, 1.0
    %v1089 = vmin.f32 %v1073, 1.0
    %v1090 = vmin.f32 %v1074, 1.0
    %v1091 = vmin.f32 %v1075, 1.0
    %v1092 = vmin.f32 %v1076, 1.0
    %1093 = vst.msk [vmem:[#allocation15] sm:$0xff] %vm133, %v1077
    %1094 = vst.msk [vmem:[#allocation15 + $0x8] sm:$0xff] %vm133, %v1078
    %1095 = vst.msk [vmem:[#allocation15 + $0x10] sm:$0xff] %vm133, %v1079
    %1096 = vst.msk [vmem:[#allocation15 + $0x18] sm:$0xff] %vm133, %v1080
    %1097 = vst.msk [vmem:[#allocation15 + $0x20] sm:$0xff] %vm133, %v1081
    %1098 = vst.msk [vmem:[#allocation15 + $0x28] sm:$0xff] %vm133, %v1082
    %1099 = vst.msk [vmem:[#allocation15 + $0x30] sm:$0xff] %vm133, %v1083
    %1100 = vst.msk [vmem:[#allocation15 + $0x38] sm:$0xff] %vm133, %v1084
    %1101 = vst.msk [vmem:[#allocation15 + $0x40] sm:$0xff] %vm133, %v1085
    %1102 = vst.msk [vmem:[#allocation15 + $0x48] sm:$0xff] %vm133, %v1086
    %1103 = vst.msk [vmem:[#allocation15 + $0x50] sm:$0xff] %vm133, %v1087
    %1104 = vst.msk [vmem:[#allocation15 + $0x58] sm:$0xff] %vm133, %v1088
    %1105 = vst.msk [vmem:[#allocation15 + $0x60] sm:$0xff] %vm133, %v1089
    %1106 = vst.msk [vmem:[#allocation15 + $0x68] sm:$0xff] %vm133, %v1090
    %1107 = vst.msk [vmem:[#allocation15 + $0x70] sm:$0xff] %vm133, %v1091
    %1108 = vst.msk [vmem:[#allocation15 + $0x78] sm:$0xff] %vm133, %v1092
    %1109 = vst.msk [vmem:[#allocation13] sm:$0xf] %vm85, %v938
    %v1110 = vld [vmem:[#allocation13] sm:$0xf]
    %v1111 = vld [vmem:[#allocation15] sm:$0xff]
    %v1112 = vld [vmem:[#allocation15 + $0x8] sm:$0xff]
    %v1113 = vld [vmem:[#allocation15 + $0x10] sm:$0xff]
    %v1114 = vld [vmem:[#allocation15 + $0x18] sm:$0xff]
    %v1115 = vld [vmem:[#allocation15 + $0x20] sm:$0xff]
    %v1116 = vld [vmem:[#allocation15 + $0x28] sm:$0xff]
    %v1117 = vld [vmem:[#allocation15 + $0x30] sm:$0xff]
    %v1118 = vld [vmem:[#allocation15 + $0x38] sm:$0xff]
    %v1119 = vld [vmem:[#allocation15 + $0x40] sm:$0xff]
    %v1120 = vld [vmem:[#allocation15 + $0x48] sm:$0xff]
    %v1121 = vld [vmem:[#allocation15 + $0x50] sm:$0xff]
    %v1122 = vld [vmem:[#allocation15 + $0x58] sm:$0xff]
    %v1123 = vld [vmem:[#allocation15 + $0x60] sm:$0xff]
    %v1124 = vld [vmem:[#allocation15 + $0x68] sm:$0xff]
    %v1125 = vld [vmem:[#allocation15 + $0x70] sm:$0xff]
    %v1126 = vld [vmem:[#allocation15 + $0x78] sm:$0xff]
    %v1128 = vsel %vm133, %v1110, 0
    %1130 = vmatprep.subr.mxu0 0.0
    %1131 = vmatpush1.msra.mxu0 0.0
    %1132 = vmatprep.subr.mxu0 0.0
    %1133 = vmatpush1.msra.mxu0 0.0
    %1134 = vmatprep.subr.mxu0 0.0
    %1135 = vmatpush1.msra.mxu0 0.0
    %1136 = vmatprep.subr.mxu0 0.0
    %1137 = vmatpush1.msra.mxu0 0.0
    %1138 = vmatprep.subr.mxu0 0.0
    %1139 = vmatpush1.msra.mxu0 0.0
    %1140 = vmatprep.subr.mxu0 0.0
    %1141 = vmatpush1.msra.mxu0 0.0
    %1142 = vmatprep.subr.mxu0 0.0
    %1143 = vmatpush1.msra.mxu0 0.0
    %1144 = vmatprep.subr.mxu0 0.0
    %1145 = vmatpush1.msra.mxu0 0.0
    %1146 = vmatprep.subr.mxu0 0.0
    %1147 = vmatpush1.msra.mxu0 0.0
    %1148 = vmatprep.subr.mxu0 0.0
    %1149 = vmatpush1.msra.mxu0 0.0
    %1150 = vmatprep.subr.mxu0 0.0
    %1151 = vmatpush1.msra.mxu0 0.0
    %1152 = vmatprep.subr.mxu0 0.0
    %1153 = vmatpush1.msra.mxu0 0.0
    %1154 = vmatprep.subr.mxu0 0.0
    %1155 = vmatpush1.msra.mxu0 %v109
    %1156 = vmatprep.subr.mxu0 0.0
    %1157 = vmatpush1.msra.mxu0 %v108
    %1158 = vmatprep.subr.mxu0 0.0
    %1159 = vmatpush1.msra.mxu0 %v107
    %1160 = vmatprep.subr.mxu0 0.0
    %1161 = vmatpush1.msra.mxu0 %v106
    %1162 = vmatprep.subr.mxu0 0.0
    %1163 = vmatpush2.msra.mxu0 0.0
    %1164 = vmatprep.subr.mxu0 0.0
    %1165 = vmatpush2.msra.mxu0 0.0
    %1166 = vmatprep.subr.mxu0 0.0
    %1167 = vmatpush2.msra.mxu0 0.0
    %1168 = vmatprep.subr.mxu0 0.0
    %1169 = vmatpush2.msra.mxu0 0.0
    %1170 = vmatprep.subr.mxu0 0.0
    %1171 = vmatpush2.msra.mxu0 0.0
    %1172 = vmatprep.subr.mxu0 0.0
    %1173 = vmatpush2.msra.mxu0 0.0
    %1174 = vmatprep.subr.mxu0 0.0
    %1175 = vmatpush2.msra.mxu0 0.0
    %1176 = vmatprep.subr.mxu0 0.0
    %1177 = vmatpush2.msra.mxu0 0.0
    %1178 = vmatprep.subr.mxu0 0.0
    %1179 = vmatpush2.msra.mxu0 0.0
    %1180 = vmatprep.subr.mxu0 0.0
    %1181 = vmatpush2.msra.mxu0 0.0
    %1182 = vmatprep.subr.mxu0 0.0
    %1183 = vmatpush2.msra.mxu0 0.0
    %1184 = vmatprep.subr.mxu0 0.0
    %1185 = vmatpush2.msra.mxu0 0.0
    %1186 = vmatprep.subr.mxu0 0.0
    %1187 = vmatpush2.msra.mxu0 0.0
    %1188 = vmatprep.subr.mxu0 0.0
    %1189 = vmatpush2.msra.mxu0 0.0
    %1190 = vmatprep.subr.mxu0 0.0
    %1191 = vmatpush2.msra.mxu0 0.0
    %1192 = vmatprep.subr.mxu0 0.0
    %1193 = vmatpush2.msra.mxu0 0.0
    %1194 = vmatprep.mubr.f32.mxu0 0.0
    %1195 = vmatmul.mubr.f32.gmra.mxu0 %v1128
    %v1196 = vpop.f32.mrf.mxu0
    %v1197 = vadd.f32 0.0, %v1196
    %v1198 = vpop.f32.mrf.mxu0
    %1199 = vdwg.mxu0
    %v1200 = vmul.f32 %v110, %v1111
    %v1201 = vmul.f32 %v111, %v1112
    %v1202 = vmul.f32 %v112, %v1113
    %v1203 = vmul.f32 %v113, %v1114
    %v1204 = vmul.f32 %v110, %v1115
    %v1205 = vmul.f32 %v111, %v1116
    %v1206 = vmul.f32 %v112, %v1117
    %v1207 = vmul.f32 %v113, %v1118
    %v1208 = vmul.f32 %v110, %v1119
    %v1209 = vmul.f32 %v111, %v1120
    %v1210 = vmul.f32 %v112, %v1121
    %v1211 = vmul.f32 %v113, %v1122
    %v1212 = vmul.f32 %v110, %v1123
    %v1213 = vmul.f32 %v111, %v1124
    %v1214 = vmul.f32 %v112, %v1125
    %v1215 = vmul.f32 %v113, %v1126
    %v1217 = vunpack.c.l.s4 1966171168
    %v1218 = vunpack.c.0.s8 %v1217
    %v1219 = vlaneseq
    %v1220 = vshrl.u32 %v1219, 7
    %v1221 = vsub.s32 %v1218, %v1220
    %v1222 = vrot.slane %v1110, %v1221
    %v1223 = vcombine.high %v1222, %v1222
    %v1225 = vunpack.c.l.s4 1966171168
    %v1226 = vunpack.c.0.s8 %v1225
    %v1227 = vlaneseq
    %v1228 = vshrl.u32 %v1227, 7
    %v1229 = vsub.s32 %v1226, %v1228
    %v1230 = vrot.slane %v1222, %v1229
    %v1232 = vunpack.c.l.s4 1966171168
    %v1233 = vunpack.c.0.s8 %v1232
    %v1234 = vlaneseq
    %v1235 = vshrl.u32 %v1234, 7
    %v1236 = vsub.s32 %v1233, %v1235
    %v1237 = vrot.slane %v1223, %v1236
    %v1238 = vcombine.high %v1230, %v1230
    %v1239 = vcombine.high %v1237, %v1237
    %v1240 = vlaneseq
    %v1241 = vshrl.u32 %v1240, 7
    %v1242 = vsub.s32 0, %v1241
    %v1243 = vrot.slane %v1230, %v1242
    %v1244 = vlaneseq
    %v1245 = vshrl.u32 %v1244, 7
    %v1246 = vsub.s32 0, %v1245
    %v1247 = vrot.slane %v1237, %v1246
    %v1248 = vlaneseq
    %v1249 = vshrl.u32 %v1248, 7
    %v1250 = vsub.s32 0, %v1249
    %v1251 = vrot.slane %v1238, %v1250
    %v1252 = vlaneseq
    %v1253 = vshrl.u32 %v1252, 7
    %v1254 = vsub.s32 0, %v1253
    %v1255 = vrot.slane %v1239, %v1254
    %v1260 = vmul.f32 %v1200, %v1243
    %v1261 = vmul.f32 %v1201, %v1243
    %v1262 = vmul.f32 %v1202, %v1243
    %v1263 = vmul.f32 %v1203, %v1243
    %v1264 = vmul.f32 %v1204, %v1247
    %v1265 = vmul.f32 %v1205, %v1247
    %v1266 = vmul.f32 %v1206, %v1247
    %v1267 = vmul.f32 %v1207, %v1247
    %v1268 = vmul.f32 %v1208, %v1251
    %v1269 = vmul.f32 %v1209, %v1251
    %v1270 = vmul.f32 %v1210, %v1251
    %v1271 = vmul.f32 %v1211, %v1251
    %v1272 = vmul.f32 %v1212, %v1255
    %v1273 = vmul.f32 %v1213, %v1255
    %v1274 = vmul.f32 %v1214, %v1255
    %v1275 = vmul.f32 %v1215, %v1255
    %v1276 = vsel %vm133, %v1260, 0.0
    %1277 = vadd.xlane.f32.xlu0 %v1276
    %v1278 = vpop.xlane.xlu0 %1277
    %v1279 = vsel %vm133, %v1261, 0.0
    %1280 = vadd.xlane.f32.xlu0 %v1279
    %v1281 = vpop.xlane.xlu0 %1280
    %v1282 = vsel %vm133, %v1262, 0.0
    %1283 = vadd.xlane.f32.xlu0 %v1282
    %v1284 = vpop.xlane.xlu0 %1283
    %v1285 = vsel %vm133, %v1263, 0.0
    %1286 = vadd.xlane.f32.xlu0 %v1285
    %v1287 = vpop.xlane.xlu0 %1286
    %v1288 = vsel %vm133, %v1264, 0.0
    %1289 = vadd.xlane.f32.xlu0 %v1288
    %v1290 = vpop.xlane.xlu0 %1289
    %v1291 = vsel %vm133, %v1265, 0.0
    %1292 = vadd.xlane.f32.xlu0 %v1291
    %v1293 = vpop.xlane.xlu0 %1292
    %v1294 = vsel %vm133, %v1266, 0.0
    %1295 = vadd.xlane.f32.xlu0 %v1294
    %v1296 = vpop.xlane.xlu0 %1295
    %v1297 = vsel %vm133, %v1267, 0.0
    %1298 = vadd.xlane.f32.xlu0 %v1297
    %v1299 = vpop.xlane.xlu0 %1298
    %v1300 = vsel %vm133, %v1268, 0.0
    %1301 = vadd.xlane.f32.xlu0 %v1300
    %v1302 = vpop.xlane.xlu0 %1301
    %v1303 = vsel %vm133, %v1269, 0.0
    %1304 = vadd.xlane.f32.xlu0 %v1303
    %v1305 = vpop.xlane.xlu0 %1304
    %v1306 = vsel %vm133, %v1270, 0.0
    %1307 = vadd.xlane.f32.xlu0 %v1306
    %v1308 = vpop.xlane.xlu0 %1307
    %v1309 = vsel %vm133, %v1271, 0.0
    %1310 = vadd.xlane.f32.xlu0 %v1309
    %v1311 = vpop.xlane.xlu0 %1310
    %v1312 = vsel %vm133, %v1272, 0.0
    %1313 = vadd.xlane.f32.xlu0 %v1312
    %v1314 = vpop.xlane.xlu0 %1313
    %v1315 = vsel %vm133, %v1273, 0.0
    %1316 = vadd.xlane.f32.xlu0 %v1315
    %v1317 = vpop.xlane.xlu0 %1316
    %v1318 = vsel %vm133, %v1274, 0.0
    %1319 = vadd.xlane.f32.xlu0 %v1318
    %v1320 = vpop.xlane.xlu0 %1319
    %v1321 = vsel %vm133, %v1275, 0.0
    %1322 = vadd.xlane.f32.xlu0 %v1321
    %v1323 = vpop.xlane.xlu0 %1322
    %s1324 = scalar_lea.vmem [#allocation4], 8
    %v1325 = vld [vmem:[%s1324] sm:$0xf]
    %v1326 = vadd.f32 %v1325, %v1197
    %v1343 = vlaneseq
    %v1344 = vshrl.u32 %v1343, 7
    %v1345 = vsub.s32 %v350, %v1344
    %v1346 = vrot.slane %v1278, %v1345
    %v1347 = vlaneseq
    %v1348 = vshrl.u32 %v1347, 7
    %v1349 = vsub.s32 %v355, %v1348
    %v1350 = vrot.slane %v1281, %v1349
    %v1351 = vsel %vm360, %v1350, %v1346
    %v1352 = vlaneseq
    %v1353 = vshrl.u32 %v1352, 7
    %v1354 = vsub.s32 %v362, %v1353
    %v1355 = vrot.slane %v1284, %v1354
    %v1356 = vsel %vm367, %v1355, %v1351
    %v1357 = vlaneseq
    %v1358 = vshrl.u32 %v1357, 7
    %v1359 = vsub.s32 %v369, %v1358
    %v1360 = vrot.slane %v1287, %v1359
    %v1361 = vsel %vm374, %v1360, %v1356
    %v1362 = vlaneseq
    %v1363 = vshrl.u32 %v1362, 7
    %v1364 = vsub.s32 %v350, %v1363
    %v1365 = vrot.slane %v1290, %v1364
    %v1366 = vlaneseq
    %v1367 = vshrl.u32 %v1366, 7
    %v1368 = vsub.s32 %v355, %v1367
    %v1369 = vrot.slane %v1293, %v1368
    %v1370 = vsel %vm360, %v1369, %v1365
    %v1371 = vlaneseq
    %v1372 = vshrl.u32 %v1371, 7
    %v1373 = vsub.s32 %v362, %v1372
    %v1374 = vrot.slane %v1296, %v1373
    %v1375 = vsel %vm367, %v1374, %v1370
    %v1376 = vlaneseq
    %v1377 = vshrl.u32 %v1376, 7
    %v1378 = vsub.s32 %v369, %v1377
    %v1379 = vrot.slane %v1299, %v1378
    %v1380 = vsel %vm374, %v1379, %v1375
    %v1381 = vlaneseq
    %v1382 = vshrl.u32 %v1381, 7
    %v1383 = vsub.s32 %v350, %v1382
    %v1384 = vrot.slane %v1302, %v1383
    %v1385 = vlaneseq
    %v1386 = vshrl.u32 %v1385, 7
    %v1387 = vsub.s32 %v355, %v1386
    %v1388 = vrot.slane %v1305, %v1387
    %v1389 = vsel %vm360, %v1388, %v1384
    %v1390 = vlaneseq
    %v1391 = vshrl.u32 %v1390, 7
    %v1392 = vsub.s32 %v362, %v1391
    %v1393 = vrot.slane %v1308, %v1392
    %v1394 = vsel %vm367, %v1393, %v1389
    %v1395 = vlaneseq
    %v1396 = vshrl.u32 %v1395, 7
    %v1397 = vsub.s32 %v369, %v1396
    %v1398 = vrot.slane %v1311, %v1397
    %v1399 = vsel %vm374, %v1398, %v1394
    %v1400 = vlaneseq
    %v1401 = vshrl.u32 %v1400, 7
    %v1402 = vsub.s32 %v350, %v1401
    %v1403 = vrot.slane %v1314, %v1402
    %v1404 = vlaneseq
    %v1405 = vshrl.u32 %v1404, 7
    %v1406 = vsub.s32 %v355, %v1405
    %v1407 = vrot.slane %v1317, %v1406
    %v1408 = vsel %vm360, %v1407, %v1403
    %v1409 = vlaneseq
    %v1410 = vshrl.u32 %v1409, 7
    %v1411 = vsub.s32 %v362, %v1410
    %v1412 = vrot.slane %v1320, %v1411
    %v1413 = vsel %vm367, %v1412, %v1408
    %v1414 = vlaneseq
    %v1415 = vshrl.u32 %v1414, 7
    %v1416 = vsub.s32 %v369, %v1415
    %v1417 = vrot.slane %v1323, %v1416
    %v1418 = vsel %vm374, %v1417, %v1413
    %v1419 = vsel %vm433, %v1380, %v1361
    %v1420 = vsel %vm435, %v1399, %v1419
    %v1421 = vsel %vm437, %v1418, %v1420
    %v1423 = vadd.f32 %v1326, %v1421
    %v1424 = vtanh.pop %v1423
    %s1425 = scalar_lea.vmem [#allocation12], 8
    %1426 = vst.msk [vmem:[%s1425] sm:$0xf] %vm85, %v1424
    %v1427 = vmul.f32 %v1424, %v447
    %v1428 = vsel %vm85, %v1427, 0.0
    %1429 = vadd.xlane.f32.xlu0 %v1428
    %v1430 = vpop.xlane.xlu0 %1429
    %v1431 = vadd.f32 %v1430, %v457
    %v1432 = vtanh.pop %v1431
    %1434 = vset.pattern.permute.xlu0 0
    %1435 = vperm.xlu0 %1434, %v1432
    %v1436 = vpop.permute.xlu0 %1435
    %v1438 = vmul.f32 %v1436, %v1424
    %v1439 = vlaneseq
    %v1440 = vshrl.u32 %v1439, 7
    %v1441 = vsub.s32 0, %v1440
    %v1442 = vrot.slane %v1438, %v1441
    %1444 = vbcast.lane.b32.xlu0 %v1442, 256
    %v1445 = vpop.permute.xlu0 %1444
    %s1447 = sor.u32 256, 8
    %1448 = vbcast.lane.b32.xlu0 %v1442, %s1447
    %v1449 = vpop.permute.xlu0 %1448
    %s1451 = sor.u32 256, 16
    %1452 = vbcast.lane.b32.xlu0 %v1442, %s1451
    %v1453 = vpop.permute.xlu0 %1452
    %s1455 = sor.u32 256, 24
    %1456 = vbcast.lane.b32.xlu0 %v1442, %s1455
    %v1457 = vpop.permute.xlu0 %1456
    %v1458 = vlaneseq
    %v1459 = vshrl.u32 %v1458, 7
    %v1460 = vsub.s32 1, %v1459
    %v1461 = vrot.slane %v1438, %v1460
    %1463 = vbcast.lane.b32.xlu0 %v1461, 256
    %v1464 = vpop.permute.xlu0 %1463
    %s1466 = sor.u32 256, 8
    %1467 = vbcast.lane.b32.xlu0 %v1461, %s1466
    %v1468 = vpop.permute.xlu0 %1467
    %s1470 = sor.u32 256, 16
    %1471 = vbcast.lane.b32.xlu0 %v1461, %s1470
    %v1472 = vpop.permute.xlu0 %1471
    %s1474 = sor.u32 256, 24
    %1475 = vbcast.lane.b32.xlu0 %v1461, %s1474
    %v1476 = vpop.permute.xlu0 %1475
    %v1477 = vlaneseq
    %v1478 = vshrl.u32 %v1477, 7
    %v1479 = vsub.s32 2, %v1478
    %v1480 = vrot.slane %v1438, %v1479
    %1482 = vbcast.lane.b32.xlu0 %v1480, 256
    %v1483 = vpop.permute.xlu0 %1482
    %s1485 = sor.u32 256, 8
    %1486 = vbcast.lane.b32.xlu0 %v1480, %s1485
    %v1487 = vpop.permute.xlu0 %1486
    %s1489 = sor.u32 256, 16
    %1490 = vbcast.lane.b32.xlu0 %v1480, %s1489
    %v1491 = vpop.permute.xlu0 %1490
    %s1493 = sor.u32 256, 24
    %1494 = vbcast.lane.b32.xlu0 %v1480, %s1493
    %v1495 = vpop.permute.xlu0 %1494
    %v1496 = vlaneseq
    %v1497 = vshrl.u32 %v1496, 7
    %v1498 = vsub.s32 3, %v1497
    %v1499 = vrot.slane %v1438, %v1498
    %1501 = vbcast.lane.b32.xlu0 %v1499, 256
    %v1502 = vpop.permute.xlu0 %1501
    %s1504 = sor.u32 256, 8
    %1505 = vbcast.lane.b32.xlu0 %v1499, %s1504
    %v1506 = vpop.permute.xlu0 %1505
    %s1508 = sor.u32 256, 16
    %1509 = vbcast.lane.b32.xlu0 %v1499, %s1508
    %v1510 = vpop.permute.xlu0 %1509
    %s1512 = sor.u32 256, 24
    %1513 = vbcast.lane.b32.xlu0 %v1499, %s1512
    %v1514 = vpop.permute.xlu0 %1513
    %v1515 = vmul.f32 %v1445, %v1243
    %v1516 = vmul.f32 %v1449, %v1243
    %v1517 = vmul.f32 %v1453, %v1243
    %v1518 = vmul.f32 %v1457, %v1243
    %v1519 = vmul.f32 %v1464, %v1247
    %v1520 = vmul.f32 %v1468, %v1247
    %v1521 = vmul.f32 %v1472, %v1247
    %v1522 = vmul.f32 %v1476, %v1247
    %v1523 = vmul.f32 %v1483, %v1251
    %v1524 = vmul.f32 %v1487, %v1251
    %v1525 = vmul.f32 %v1491, %v1251
    %v1526 = vmul.f32 %v1495, %v1251
    %v1527 = vmul.f32 %v1502, %v1255
    %v1528 = vmul.f32 %v1506, %v1255
    %v1529 = vmul.f32 %v1510, %v1255
    %v1530 = vmul.f32 %v1514, %v1255
    %v1531 = vadd.f32 %v1111, %v1515
    %v1532 = vadd.f32 %v1112, %v1516
    %v1533 = vadd.f32 %v1113, %v1517
    %v1534 = vadd.f32 %v1114, %v1518
    %v1535 = vadd.f32 %v1115, %v1519
    %v1536 = vadd.f32 %v1116, %v1520
    %v1537 = vadd.f32 %v1117, %v1521
    %v1538 = vadd.f32 %v1118, %v1522
    %v1539 = vadd.f32 %v1119, %v1523
    %v1540 = vadd.f32 %v1120, %v1524
    %v1541 = vadd.f32 %v1121, %v1525
    %v1542 = vadd.f32 %v1122, %v1526
    %v1543 = vadd.f32 %v1123, %v1527
    %v1544 = vadd.f32 %v1124, %v1528
    %v1545 = vadd.f32 %v1125, %v1529
    %v1546 = vadd.f32 %v1126, %v1530
    %v1547 = vmax.f32 %v1531, -1.0
    %v1548 = vmax.f32 %v1532, -1.0
    %v1549 = vmax.f32 %v1533, -1.0
    %v1550 = vmax.f32 %v1534, -1.0
    %v1551 = vmax.f32 %v1535, -1.0
    %v1552 = vmax.f32 %v1536, -1.0
    %v1553 = vmax.f32 %v1537, -1.0
    %v1554 = vmax.f32 %v1538, -1.0
    %v1555 = vmax.f32 %v1539, -1.0
    %v1556 = vmax.f32 %v1540, -1.0
    %v1557 = vmax.f32 %v1541, -1.0
    %v1558 = vmax.f32 %v1542, -1.0
    %v1559 = vmax.f32 %v1543, -1.0
    %v1560 = vmax.f32 %v1544, -1.0
    %v1561 = vmax.f32 %v1545, -1.0
    %v1562 = vmax.f32 %v1546, -1.0
    %v1563 = vmin.f32 %v1547, 1.0
    %v1564 = vmin.f32 %v1548, 1.0
    %v1565 = vmin.f32 %v1549, 1.0
    %v1566 = vmin.f32 %v1550, 1.0
    %v1567 = vmin.f32 %v1551, 1.0
    %v1568 = vmin.f32 %v1552, 1.0
    %v1569 = vmin.f32 %v1553, 1.0
    %v1570 = vmin.f32 %v1554, 1.0
    %v1571 = vmin.f32 %v1555, 1.0
    %v1572 = vmin.f32 %v1556, 1.0
    %v1573 = vmin.f32 %v1557, 1.0
    %v1574 = vmin.f32 %v1558, 1.0
    %v1575 = vmin.f32 %v1559, 1.0
    %v1576 = vmin.f32 %v1560, 1.0
    %v1577 = vmin.f32 %v1561, 1.0
    %v1578 = vmin.f32 %v1562, 1.0
    %1579 = vst.msk [vmem:[#allocation15] sm:$0xff] %vm133, %v1563
    %1580 = vst.msk [vmem:[#allocation15 + $0x8] sm:$0xff] %vm133, %v1564
    %1581 = vst.msk [vmem:[#allocation15 + $0x10] sm:$0xff] %vm133, %v1565
    %1582 = vst.msk [vmem:[#allocation15 + $0x18] sm:$0xff] %vm133, %v1566
    %1583 = vst.msk [vmem:[#allocation15 + $0x20] sm:$0xff] %vm133, %v1567
    %1584 = vst.msk [vmem:[#allocation15 + $0x28] sm:$0xff] %vm133, %v1568
    %1585 = vst.msk [vmem:[#allocation15 + $0x30] sm:$0xff] %vm133, %v1569
    %1586 = vst.msk [vmem:[#allocation15 + $0x38] sm:$0xff] %vm133, %v1570
    %1587 = vst.msk [vmem:[#allocation15 + $0x40] sm:$0xff] %vm133, %v1571
    %1588 = vst.msk [vmem:[#allocation15 + $0x48] sm:$0xff] %vm133, %v1572
    %1589 = vst.msk [vmem:[#allocation15 + $0x50] sm:$0xff] %vm133, %v1573
    %1590 = vst.msk [vmem:[#allocation15 + $0x58] sm:$0xff] %vm133, %v1574
    %1591 = vst.msk [vmem:[#allocation15 + $0x60] sm:$0xff] %vm133, %v1575
    %1592 = vst.msk [vmem:[#allocation15 + $0x68] sm:$0xff] %vm133, %v1576
    %1593 = vst.msk [vmem:[#allocation15 + $0x70] sm:$0xff] %vm133, %v1577
    %1594 = vst.msk [vmem:[#allocation15 + $0x78] sm:$0xff] %vm133, %v1578
    %1595 = vst.msk [vmem:[#allocation13] sm:$0xf] %vm85, %v1424
    %v1596 = vld [vmem:[#allocation13] sm:$0xf]
    %v1597 = vld [vmem:[#allocation15] sm:$0xff]
    %v1598 = vld [vmem:[#allocation15 + $0x8] sm:$0xff]
    %v1599 = vld [vmem:[#allocation15 + $0x10] sm:$0xff]
    %v1600 = vld [vmem:[#allocation15 + $0x18] sm:$0xff]
    %v1601 = vld [vmem:[#allocation15 + $0x20] sm:$0xff]
    %v1602 = vld [vmem:[#allocation15 + $0x28] sm:$0xff]
    %v1603 = vld [vmem:[#allocation15 + $0x30] sm:$0xff]
    %v1604 = vld [vmem:[#allocation15 + $0x38] sm:$0xff]
    %v1605 = vld [vmem:[#allocation15 + $0x40] sm:$0xff]
    %v1606 = vld [vmem:[#allocation15 + $0x48] sm:$0xff]
    %v1607 = vld [vmem:[#allocation15 + $0x50] sm:$0xff]
    %v1608 = vld [vmem:[#allocation15 + $0x58] sm:$0xff]
    %v1609 = vld [vmem:[#allocation15 + $0x60] sm:$0xff]
    %v1610 = vld [vmem:[#allocation15 + $0x68] sm:$0xff]
    %v1611 = vld [vmem:[#allocation15 + $0x70] sm:$0xff]
    %v1612 = vld [vmem:[#allocation15 + $0x78] sm:$0xff]
    %v1614 = vsel %vm133, %v1596, 0
    %1616 = vmatprep.subr.mxu0 0.0
    %1617 = vmatpush1.msra.mxu0 0.0
    %1618 = vmatprep.subr.mxu0 0.0
    %1619 = vmatpush1.msra.mxu0 0.0
    %1620 = vmatprep.subr.mxu0 0.0
    %1621 = vmatpush1.msra.mxu0 0.0
    %1622 = vmatprep.subr.mxu0 0.0
    %1623 = vmatpush1.msra.mxu0 0.0
    %1624 = vmatprep.subr.mxu0 0.0
    %1625 = vmatpush1.msra.mxu0 0.0
    %1626 = vmatprep.subr.mxu0 0.0
    %1627 = vmatpush1.msra.mxu0 0.0
    %1628 = vmatprep.subr.mxu0 0.0
    %1629 = vmatpush1.msra.mxu0 0.0
    %1630 = vmatprep.subr.mxu0 0.0
    %1631 = vmatpush1.msra.mxu0 0.0
    %1632 = vmatprep.subr.mxu0 0.0
    %1633 = vmatpush1.msra.mxu0 0.0
    %1634 = vmatprep.subr.mxu0 0.0
    %1635 = vmatpush1.msra.mxu0 0.0
    %1636 = vmatprep.subr.mxu0 0.0
    %1637 = vmatpush1.msra.mxu0 0.0
    %1638 = vmatprep.subr.mxu0 0.0
    %1639 = vmatpush1.msra.mxu0 0.0
    %1640 = vmatprep.subr.mxu0 0.0
    %1641 = vmatpush1.msra.mxu0 %v109
    %1642 = vmatprep.subr.mxu0 0.0
    %1643 = vmatpush1.msra.mxu0 %v108
    %1644 = vmatprep.subr.mxu0 0.0
    %1645 = vmatpush1.msra.mxu0 %v107
    %1646 = vmatprep.subr.mxu0 0.0
    %1647 = vmatpush1.msra.mxu0 %v106
    %1648 = vmatprep.subr.mxu0 0.0
    %1649 = vmatpush2.msra.mxu0 0.0
    %1650 = vmatprep.subr.mxu0 0.0
    %1651 = vmatpush2.msra.mxu0 0.0
    %1652 = vmatprep.subr.mxu0 0.0
    %1653 = vmatpush2.msra.mxu0 0.0
    %1654 = vmatprep.subr.mxu0 0.0
    %1655 = vmatpush2.msra.mxu0 0.0
    %1656 = vmatprep.subr.mxu0 0.0
    %1657 = vmatpush2.msra.mxu0 0.0
    %1658 = vmatprep.subr.mxu0 0.0
    %1659 = vmatpush2.msra.mxu0 0.0
    %1660 = vmatprep.subr.mxu0 0.0
    %1661 = vmatpush2.msra.mxu0 0.0
    %1662 = vmatprep.subr.mxu0 0.0
    %1663 = vmatpush2.msra.mxu0 0.0
    %1664 = vmatprep.subr.mxu0 0.0
    %1665 = vmatpush2.msra.mxu0 0.0
    %1666 = vmatprep.subr.mxu0 0.0
    %1667 = vmatpush2.msra.mxu0 0.0
    %1668 = vmatprep.subr.mxu0 0.0
    %1669 = vmatpush2.msra.mxu0 0.0
    %1670 = vmatprep.subr.mxu0 0.0
    %1671 = vmatpush2.msra.mxu0 0.0
    %1672 = vmatprep.subr.mxu0 0.0
    %1673 = vmatpush2.msra.mxu0 0.0
    %1674 = vmatprep.subr.mxu0 0.0
    %1675 = vmatpush2.msra.mxu0 0.0
    %1676 = vmatprep.subr.mxu0 0.0
    %1677 = vmatpush2.msra.mxu0 0.0
    %1678 = vmatprep.subr.mxu0 0.0
    %1679 = vmatpush2.msra.mxu0 0.0
    %1680 = vmatprep.mubr.f32.mxu0 0.0
    %1681 = vmatmul.mubr.f32.gmra.mxu0 %v1614
    %v1682 = vpop.f32.mrf.mxu0
    %v1683 = vadd.f32 0.0, %v1682
    %v1684 = vpop.f32.mrf.mxu0
    %1685 = vdwg.mxu0
    %v1686 = vmul.f32 %v110, %v1597
    %v1687 = vmul.f32 %v111, %v1598
    %v1688 = vmul.f32 %v112, %v1599
    %v1689 = vmul.f32 %v113, %v1600
    %v1690 = vmul.f32 %v110, %v1601
    %v1691 = vmul.f32 %v111, %v1602
    %v1692 = vmul.f32 %v112, %v1603
    %v1693 = vmul.f32 %v113, %v1604
    %v1694 = vmul.f32 %v110, %v1605
    %v1695 = vmul.f32 %v111, %v1606
    %v1696 = vmul.f32 %v112, %v1607
    %v1697 = vmul.f32 %v113, %v1608
    %v1698 = vmul.f32 %v110, %v1609
    %v1699 = vmul.f32 %v111, %v1610
    %v1700 = vmul.f32 %v112, %v1611
    %v1701 = vmul.f32 %v113, %v1612
    %v1703 = vunpack.c.l.s4 1966171168
    %v1704 = vunpack.c.0.s8 %v1703
    %v1705 = vlaneseq
    %v1706 = vshrl.u32 %v1705, 7
    %v1707 = vsub.s32 %v1704, %v1706
    %v1708 = vrot.slane %v1596, %v1707
    %v1709 = vcombine.high %v1708, %v1708
    %v1711 = vunpack.c.l.s4 1966171168
    %v1712 = vunpack.c.0.s8 %v1711
    %v1713 = vlaneseq
    %v1714 = vshrl.u32 %v1713, 7
    %v1715 = vsub.s32 %v1712, %v1714
    %v1716 = vrot.slane %v1708, %v1715
    %v1718 = vunpack.c.l.s4 1966171168
    %v1719 = vunpack.c.0.s8 %v1718
    %v1720 = vlaneseq
    %v1721 = vshrl.u32 %v1720, 7
    %v1722 = vsub.s32 %v1719, %v1721
    %v1723 = vrot.slane %v1709, %v1722
    %v1724 = vcombine.high %v1716, %v1716
    %v1725 = vcombine.high %v1723, %v1723
    %v1726 = vlaneseq
    %v1727 = vshrl.u32 %v1726, 7
    %v1728 = vsub.s32 0, %v1727
    %v1729 = vrot.slane %v1716, %v1728
    %v1730 = vlaneseq
    %v1731 = vshrl.u32 %v1730, 7
    %v1732 = vsub.s32 0, %v1731
    %v1733 = vrot.slane %v1723, %v1732
    %v1734 = vlaneseq
    %v1735 = vshrl.u32 %v1734, 7
    %v1736 = vsub.s32 0, %v1735
    %v1737 = vrot.slane %v1724, %v1736
    %v1738 = vlaneseq
    %v1739 = vshrl.u32 %v1738, 7
    %v1740 = vsub.s32 0, %v1739
    %v1741 = vrot.slane %v1725, %v1740
    %v1746 = vmul.f32 %v1686, %v1729
    %v1747 = vmul.f32 %v1687, %v1729
    %v1748 = vmul.f32 %v1688, %v1729
    %v1749 = vmul.f32 %v1689, %v1729
    %v1750 = vmul.f32 %v1690, %v1733
    %v1751 = vmul.f32 %v1691, %v1733
    %v1752 = vmul.f32 %v1692, %v1733
    %v1753 = vmul.f32 %v1693, %v1733
    %v1754 = vmul.f32 %v1694, %v1737
    %v1755 = vmul.f32 %v1695, %v1737
    %v1756 = vmul.f32 %v1696, %v1737
    %v1757 = vmul.f32 %v1697, %v1737
    %v1758 = vmul.f32 %v1698, %v1741
    %v1759 = vmul.f32 %v1699, %v1741
    %v1760 = vmul.f32 %v1700, %v1741
    %v1761 = vmul.f32 %v1701, %v1741
    %v1762 = vsel %vm133, %v1746, 0.0
    %1763 = vadd.xlane.f32.xlu0 %v1762
    %v1764 = vpop.xlane.xlu0 %1763
    %v1765 = vsel %vm133, %v1747, 0.0
    %1766 = vadd.xlane.f32.xlu0 %v1765
    %v1767 = vpop.xlane.xlu0 %1766
    %v1768 = vsel %vm133, %v1748, 0.0
    %1769 = vadd.xlane.f32.xlu0 %v1768
    %v1770 = vpop.xlane.xlu0 %1769
    %v1771 = vsel %vm133, %v1749, 0.0
    %1772 = vadd.xlane.f32.xlu0 %v1771
    %v1773 = vpop.xlane.xlu0 %1772
    %v1774 = vsel %vm133, %v1750, 0.0
    %1775 = vadd.xlane.f32.xlu0 %v1774
    %v1776 = vpop.xlane.xlu0 %1775
    %v1777 = vsel %vm133, %v1751, 0.0
    %1778 = vadd.xlane.f32.xlu0 %v1777
    %v1779 = vpop.xlane.xlu0 %1778
    %v1780 = vsel %vm133, %v1752, 0.0
    %1781 = vadd.xlane.f32.xlu0 %v1780
    %v1782 = vpop.xlane.xlu0 %1781
    %v1783 = vsel %vm133, %v1753, 0.0
    %1784 = vadd.xlane.f32.xlu0 %v1783
    %v1785 = vpop.xlane.xlu0 %1784
    %v1786 = vsel %vm133, %v1754, 0.0
    %1787 = vadd.xlane.f32.xlu0 %v1786
    %v1788 = vpop.xlane.xlu0 %1787
    %v1789 = vsel %vm133, %v1755, 0.0
    %1790 = vadd.xlane.f32.xlu0 %v1789
    %v1791 = vpop.xlane.xlu0 %1790
    %v1792 = vsel %vm133, %v1756, 0.0
    %1793 = vadd.xlane.f32.xlu0 %v1792
    %v1794 = vpop.xlane.xlu0 %1793
    %v1795 = vsel %vm133, %v1757, 0.0
    %1796 = vadd.xlane.f32.xlu0 %v1795
    %v1797 = vpop.xlane.xlu0 %1796
    %v1798 = vsel %vm133, %v1758, 0.0
    %1799 = vadd.xlane.f32.xlu0 %v1798
    %v1800 = vpop.xlane.xlu0 %1799
    %v1801 = vsel %vm133, %v1759, 0.0
    %1802 = vadd.xlane.f32.xlu0 %v1801
    %v1803 = vpop.xlane.xlu0 %1802
    %v1804 = vsel %vm133, %v1760, 0.0
    %1805 = vadd.xlane.f32.xlu0 %v1804
    %v1806 = vpop.xlane.xlu0 %1805
    %v1807 = vsel %vm133, %v1761, 0.0
    %1808 = vadd.xlane.f32.xlu0 %v1807
    %v1809 = vpop.xlane.xlu0 %1808
    %s1810 = scalar_lea.vmem [#allocation4], 12
    %v1811 = vld [vmem:[%s1810] sm:$0xf]
    %v1812 = vadd.f32 %v1811, %v1683
    %v1829 = vlaneseq
    %v1830 = vshrl.u32 %v1829, 7
    %v1831 = vsub.s32 %v350, %v1830
    %v1832 = vrot.slane %v1764, %v1831
    %v1833 = vlaneseq
    %v1834 = vshrl.u32 %v1833, 7
    %v1835 = vsub.s32 %v355, %v1834
    %v1836 = vrot.slane %v1767, %v1835
    %v1837 = vsel %vm360, %v1836, %v1832
    %v1838 = vlaneseq
    %v1839 = vshrl.u32 %v1838, 7
    %v1840 = vsub.s32 %v362, %v1839
    %v1841 = vrot.slane %v1770, %v1840
    %v1842 = vsel %vm367, %v1841, %v1837
    %v1843 = vlaneseq
    %v1844 = vshrl.u32 %v1843, 7
    %v1845 = vsub.s32 %v369, %v1844
    %v1846 = vrot.slane %v1773, %v1845
    %v1847 = vsel %vm374, %v1846, %v1842
    %v1848 = vlaneseq
    %v1849 = vshrl.u32 %v1848, 7
    %v1850 = vsub.s32 %v350, %v1849
    %v1851 = vrot.slane %v1776, %v1850
    %v1852 = vlaneseq
    %v1853 = vshrl.u32 %v1852, 7
    %v1854 = vsub.s32 %v355, %v1853
    %v1855 = vrot.slane %v1779, %v1854
    %v1856 = vsel %vm360, %v1855, %v1851
    %v1857 = vlaneseq
    %v1858 = vshrl.u32 %v1857, 7
    %v1859 = vsub.s32 %v362, %v1858
    %v1860 = vrot.slane %v1782, %v1859
    %v1861 = vsel %vm367, %v1860, %v1856
    %v1862 = vlaneseq
    %v1863 = vshrl.u32 %v1862, 7
    %v1864 = vsub.s32 %v369, %v1863
    %v1865 = vrot.slane %v1785, %v1864
    %v1866 = vsel %vm374, %v1865, %v1861
    %v1867 = vlaneseq
    %v1868 = vshrl.u32 %v1867, 7
    %v1869 = vsub.s32 %v350, %v1868
    %v1870 = vrot.slane %v1788, %v1869
    %v1871 = vlaneseq
    %v1872 = vshrl.u32 %v1871, 7
    %v1873 = vsub.s32 %v355, %v1872
    %v1874 = vrot.slane %v1791, %v1873
    %v1875 = vsel %vm360, %v1874, %v1870
    %v1876 = vlaneseq
    %v1877 = vshrl.u32 %v1876, 7
    %v1878 = vsub.s32 %v362, %v1877
    %v1879 = vrot.slane %v1794, %v1878
    %v1880 = vsel %vm367, %v1879, %v1875
    %v1881 = vlaneseq
    %v1882 = vshrl.u32 %v1881, 7
    %v1883 = vsub.s32 %v369, %v1882
    %v1884 = vrot.slane %v1797, %v1883
    %v1885 = vsel %vm374, %v1884, %v1880
    %v1886 = vlaneseq
    %v1887 = vshrl.u32 %v1886, 7
    %v1888 = vsub.s32 %v350, %v1887
    %v1889 = vrot.slane %v1800, %v1888
    %v1890 = vlaneseq
    %v1891 = vshrl.u32 %v1890, 7
    %v1892 = vsub.s32 %v355, %v1891
    %v1893 = vrot.slane %v1803, %v1892
    %v1894 = vsel %vm360, %v1893, %v1889
    %v1895 = vlaneseq
    %v1896 = vshrl.u32 %v1895, 7
    %v1897 = vsub.s32 %v362, %v1896
    %v1898 = vrot.slane %v1806, %v1897
    %v1899 = vsel %vm367, %v1898, %v1894
    %v1900 = vlaneseq
    %v1901 = vshrl.u32 %v1900, 7
    %v1902 = vsub.s32 %v369, %v1901
    %v1903 = vrot.slane %v1809, %v1902
    %v1904 = vsel %vm374, %v1903, %v1899
    %v1905 = vsel %vm433, %v1866, %v1847
    %v1906 = vsel %vm435, %v1885, %v1905
    %v1907 = vsel %vm437, %v1904, %v1906
    %v1909 = vadd.f32 %v1812, %v1907
    %v1910 = vtanh.pop %v1909
    %s1911 = scalar_lea.vmem [#allocation12], 12
    %1912 = vst.msk [vmem:[%s1911] sm:$0xf] %vm85, %v1910
    %v1913 = vmul.f32 %v1910, %v447
    %v1914 = vsel %vm85, %v1913, 0.0
    %1915 = vadd.xlane.f32.xlu0 %v1914
    %v1916 = vpop.xlane.xlu0 %1915
    %v1917 = vadd.f32 %v1916, %v457
    %v1918 = vtanh.pop %v1917
    %1920 = vset.pattern.permute.xlu0 0
    %1921 = vperm.xlu0 %1920, %v1918
    %v1922 = vpop.permute.xlu0 %1921
    %v1924 = vmul.f32 %v1922, %v1910
    %v1925 = vlaneseq
    %v1926 = vshrl.u32 %v1925, 7
    %v1927 = vsub.s32 0, %v1926
    %v1928 = vrot.slane %v1924, %v1927
    %1930 = vbcast.lane.b32.xlu0 %v1928, 256
    %v1931 = vpop.permute.xlu0 %1930
    %s1933 = sor.u32 256, 8
    %1934 = vbcast.lane.b32.xlu0 %v1928, %s1933
    %v1935 = vpop.permute.xlu0 %1934
    %s1937 = sor.u32 256, 16
    %1938 = vbcast.lane.b32.xlu0 %v1928, %s1937
    %v1939 = vpop.permute.xlu0 %1938
    %s1941 = sor.u32 256, 24
    %1942 = vbcast.lane.b32.xlu0 %v1928, %s1941
    %v1943 = vpop.permute.xlu0 %1942
    %v1944 = vlaneseq
    %v1945 = vshrl.u32 %v1944, 7
    %v1946 = vsub.s32 1, %v1945
    %v1947 = vrot.slane %v1924, %v1946
    %1949 = vbcast.lane.b32.xlu0 %v1947, 256
    %v1950 = vpop.permute.xlu0 %1949
    %s1952 = sor.u32 256, 8
    %1953 = vbcast.lane.b32.xlu0 %v1947, %s1952
    %v1954 = vpop.permute.xlu0 %1953
    %s1956 = sor.u32 256, 16
    %1957 = vbcast.lane.b32.xlu0 %v1947, %s1956
    %v1958 = vpop.permute.xlu0 %1957
    %s1960 = sor.u32 256, 24
    %1961 = vbcast.lane.b32.xlu0 %v1947, %s1960
    %v1962 = vpop.permute.xlu0 %1961
    %v1963 = vlaneseq
    %v1964 = vshrl.u32 %v1963, 7
    %v1965 = vsub.s32 2, %v1964
    %v1966 = vrot.slane %v1924, %v1965
    %1968 = vbcast.lane.b32.xlu0 %v1966, 256
    %v1969 = vpop.permute.xlu0 %1968
    %s1971 = sor.u32 256, 8
    %1972 = vbcast.lane.b32.xlu0 %v1966, %s1971
    %v1973 = vpop.permute.xlu0 %1972
    %s1975 = sor.u32 256, 16
    %1976 = vbcast.lane.b32.xlu0 %v1966, %s1975
    %v1977 = vpop.permute.xlu0 %1976
    %s1979 = sor.u32 256, 24
    %1980 = vbcast.lane.b32.xlu0 %v1966, %s1979
    %v1981 = vpop.permute.xlu0 %1980
    %v1982 = vlaneseq
    %v1983 = vshrl.u32 %v1982, 7
    %v1984 = vsub.s32 3, %v1983
    %v1985 = vrot.slane %v1924, %v1984
    %1987 = vbcast.lane.b32.xlu0 %v1985, 256
    %v1988 = vpop.permute.xlu0 %1987
    %s1990 = sor.u32 256, 8
    %1991 = vbcast.lane.b32.xlu0 %v1985, %s1990
    %v1992 = vpop.permute.xlu0 %1991
    %s1994 = sor.u32 256, 16
    %1995 = vbcast.lane.b32.xlu0 %v1985, %s1994
    %v1996 = vpop.permute.xlu0 %1995
    %s1998 = sor.u32 256, 24
    %1999 = vbcast.lane.b32.xlu0 %v1985, %s1998
    %v2000 = vpop.permute.xlu0 %1999
    %v2001 = vmul.f32 %v1931, %v1729
    %v2002 = vmul.f32 %v1935, %v1729
    %v2003 = vmul.f32 %v1939, %v1729
    %v2004 = vmul.f32 %v1943, %v1729
    %v2005 = vmul.f32 %v1950, %v1733
    %v2006 = vmul.f32 %v1954, %v1733
    %v2007 = vmul.f32 %v1958, %v1733
    %v2008 = vmul.f32 %v1962, %v1733
    %v2009 = vmul.f32 %v1969, %v1737
    %v2010 = vmul.f32 %v1973, %v1737
    %v2011 = vmul.f32 %v1977, %v1737
    %v2012 = vmul.f32 %v1981, %v1737
    %v2013 = vmul.f32 %v1988, %v1741
    %v2014 = vmul.f32 %v1992, %v1741
    %v2015 = vmul.f32 %v1996, %v1741
    %v2016 = vmul.f32 %v2000, %v1741
    %v2017 = vadd.f32 %v1597, %v2001
    %v2018 = vadd.f32 %v1598, %v2002
    %v2019 = vadd.f32 %v1599, %v2003
    %v2020 = vadd.f32 %v1600, %v2004
    %v2021 = vadd.f32 %v1601, %v2005
    %v2022 = vadd.f32 %v1602, %v2006
    %v2023 = vadd.f32 %v1603, %v2007
    %v2024 = vadd.f32 %v1604, %v2008
    %v2025 = vadd.f32 %v1605, %v2009
    %v2026 = vadd.f32 %v1606, %v2010
    %v2027 = vadd.f32 %v1607, %v2011
    %v2028 = vadd.f32 %v1608, %v2012
    %v2029 = vadd.f32 %v1609, %v2013
    %v2030 = vadd.f32 %v1610, %v2014
    %v2031 = vadd.f32 %v1611, %v2015
    %v2032 = vadd.f32 %v1612, %v2016
    %v2033 = vmax.f32 %v2017, -1.0
    %v2034 = vmax.f32 %v2018, -1.0
    %v2035 = vmax.f32 %v2019, -1.0
    %v2036 = vmax.f32 %v2020, -1.0
    %v2037 = vmax.f32 %v2021, -1.0
    %v2038 = vmax.f32 %v2022, -1.0
    %v2039 = vmax.f32 %v2023, -1.0
    %v2040 = vmax.f32 %v2024, -1.0
    %v2041 = vmax.f32 %v2025, -1.0
    %v2042 = vmax.f32 %v2026, -1.0
    %v2043 = vmax.f32 %v2027, -1.0
    %v2044 = vmax.f32 %v2028, -1.0
    %v2045 = vmax.f32 %v2029, -1.0
    %v2046 = vmax.f32 %v2030, -1.0
    %v2047 = vmax.f32 %v2031, -1.0
    %v2048 = vmax.f32 %v2032, -1.0
    %v2049 = vmin.f32 %v2033, 1.0
    %v2050 = vmin.f32 %v2034, 1.0
    %v2051 = vmin.f32 %v2035, 1.0
    %v2052 = vmin.f32 %v2036, 1.0
    %v2053 = vmin.f32 %v2037, 1.0
    %v2054 = vmin.f32 %v2038, 1.0
    %v2055 = vmin.f32 %v2039, 1.0
    %v2056 = vmin.f32 %v2040, 1.0
    %v2057 = vmin.f32 %v2041, 1.0
    %v2058 = vmin.f32 %v2042, 1.0
    %v2059 = vmin.f32 %v2043, 1.0
    %v2060 = vmin.f32 %v2044, 1.0
    %v2061 = vmin.f32 %v2045, 1.0
    %v2062 = vmin.f32 %v2046, 1.0
    %v2063 = vmin.f32 %v2047, 1.0
    %v2064 = vmin.f32 %v2048, 1.0
    %2065 = vst.msk [vmem:[#allocation15] sm:$0xff] %vm133, %v2049
    %2066 = vst.msk [vmem:[#allocation15 + $0x8] sm:$0xff] %vm133, %v2050
    %2067 = vst.msk [vmem:[#allocation15 + $0x10] sm:$0xff] %vm133, %v2051
    %2068 = vst.msk [vmem:[#allocation15 + $0x18] sm:$0xff] %vm133, %v2052
    %2069 = vst.msk [vmem:[#allocation15 + $0x20] sm:$0xff] %vm133, %v2053
    %2070 = vst.msk [vmem:[#allocation15 + $0x28] sm:$0xff] %vm133, %v2054
    %2071 = vst.msk [vmem:[#allocation15 + $0x30] sm:$0xff] %vm133, %v2055
    %2072 = vst.msk [vmem:[#allocation15 + $0x38] sm:$0xff] %vm133, %v2056
    %2073 = vst.msk [vmem:[#allocation15 + $0x40] sm:$0xff] %vm133, %v2057
    %2074 = vst.msk [vmem:[#allocation15 + $0x48] sm:$0xff] %vm133, %v2058
    %2075 = vst.msk [vmem:[#allocation15 + $0x50] sm:$0xff] %vm133, %v2059
    %2076 = vst.msk [vmem:[#allocation15 + $0x58] sm:$0xff] %vm133, %v2060
    %2077 = vst.msk [vmem:[#allocation15 + $0x60] sm:$0xff] %vm133, %v2061
    %2078 = vst.msk [vmem:[#allocation15 + $0x68] sm:$0xff] %vm133, %v2062
    %2079 = vst.msk [vmem:[#allocation15 + $0x70] sm:$0xff] %vm133, %v2063
    %2080 = vst.msk [vmem:[#allocation15 + $0x78] sm:$0xff] %vm133, %v2064
    %2081 = vst.msk [vmem:[#allocation13] sm:$0xf] %vm85, %v1910
    %v2082 = vld [vmem:[#allocation13] sm:$0xf]
    %v2083 = vld [vmem:[#allocation15] sm:$0xff]
    %v2084 = vld [vmem:[#allocation15 + $0x8] sm:$0xff]
    %v2085 = vld [vmem:[#allocation15 + $0x10] sm:$0xff]
    %v2086 = vld [vmem:[#allocation15 + $0x18] sm:$0xff]
    %v2087 = vld [vmem:[#allocation15 + $0x20] sm:$0xff]
    %v2088 = vld [vmem:[#allocation15 + $0x28] sm:$0xff]
    %v2089 = vld [vmem:[#allocation15 + $0x30] sm:$0xff]
    %v2090 = vld [vmem:[#allocation15 + $0x38] sm:$0xff]
    %v2091 = vld [vmem:[#allocation15 + $0x40] sm:$0xff]
    %v2092 = vld [vmem:[#allocation15 + $0x48] sm:$0xff]
    %v2093 = vld [vmem:[#allocation15 + $0x50] sm:$0xff]
    %v2094 = vld [vmem:[#allocation15 + $0x58] sm:$0xff]
    %v2095 = vld [vmem:[#allocation15 + $0x60] sm:$0xff]
    %v2096 = vld [vmem:[#allocation15 + $0x68] sm:$0xff]
    %v2097 = vld [vmem:[#allocation15 + $0x70] sm:$0xff]
    %v2098 = vld [vmem:[#allocation15 + $0x78] sm:$0xff]
    %v2100 = vsel %vm133, %v2082, 0
    %2102 = vmatprep.subr.mxu0 0.0
    %2103 = vmatpush1.msra.mxu0 0.0
    %2104 = vmatprep.subr.mxu0 0.0
    %2105 = vmatpush1.msra.mxu0 0.0
    %2106 = vmatprep.subr.mxu0 0.0
    %2107 = vmatpush1.msra.mxu0 0.0
    %2108 = vmatprep.subr.mxu0 0.0
    %2109 = vmatpush1.msra.mxu0 0.0
    %2110 = vmatprep.subr.mxu0 0.0
    %2111 = vmatpush1.msra.mxu0 0.0
    %2112 = vmatprep.subr.mxu0 0.0
    %2113 = vmatpush1.msra.mxu0 0.0
    %2114 = vmatprep.subr.mxu0 0.0
    %2115 = vmatpush1.msra.mxu0 0.0
    %2116 = vmatprep.subr.mxu0 0.0
    %2117 = vmatpush1.msra.mxu0 0.0
    %2118 = vmatprep.subr.mxu0 0.0
    %2119 = vmatpush1.msra.mxu0 0.0
    %2120 = vmatprep.subr.mxu0 0.0
    %2121 = vmatpush1.msra.mxu0 0.0
    %2122 = vmatprep.subr.mxu0 0.0
    %2123 = vmatpush1.msra.mxu0 0.0
    %2124 = vmatprep.subr.mxu0 0.0
    %2125 = vmatpush1.msra.mxu0 0.0
    %2126 = vmatprep.subr.mxu0 0.0
    %2127 = vmatpush1.msra.mxu0 %v109
    %2128 = vmatprep.subr.mxu0 0.0
    %2129 = vmatpush1.msra.mxu0 %v108
    %2130 = vmatprep.subr.mxu0 0.0
    %2131 = vmatpush1.msra.mxu0 %v107
    %2132 = vmatprep.subr.mxu0 0.0
    %2133 = vmatpush1.msra.mxu0 %v106
    %2134 = vmatprep.subr.mxu0 0.0
    %2135 = vmatpush2.msra.mxu0 0.0
    %2136 = vmatprep.subr.mxu0 0.0
    %2137 = vmatpush2.msra.mxu0 0.0
    %2138 = vmatprep.subr.mxu0 0.0
    %2139 = vmatpush2.msra.mxu0 0.0
    %2140 = vmatprep.subr.mxu0 0.0
    %2141 = vmatpush2.msra.mxu0 0.0
    %2142 = vmatprep.subr.mxu0 0.0
    %2143 = vmatpush2.msra.mxu0 0.0
    %2144 = vmatprep.subr.mxu0 0.0
    %2145 = vmatpush2.msra.mxu0 0.0
    %2146 = vmatprep.subr.mxu0 0.0
    %2147 = vmatpush2.msra.mxu0 0.0
    %2148 = vmatprep.subr.mxu0 0.0
    %2149 = vmatpush2.msra.mxu0 0.0
    %2150 = vmatprep.subr.mxu0 0.0
    %2151 = vmatpush2.msra.mxu0 0.0
    %2152 = vmatprep.subr.mxu0 0.0
    %2153 = vmatpush2.msra.mxu0 0.0
    %2154 = vmatprep.subr.mxu0 0.0
    %2155 = vmatpush2.msra.mxu0 0.0
    %2156 = vmatprep.subr.mxu0 0.0
    %2157 = vmatpush2.msra.mxu0 0.0
    %2158 = vmatprep.subr.mxu0 0.0
    %2159 = vmatpush2.msra.mxu0 0.0
    %2160 = vmatprep.subr.mxu0 0.0
    %2161 = vmatpush2.msra.mxu0 0.0
    %2162 = vmatprep.subr.mxu0 0.0
    %2163 = vmatpush2.msra.mxu0 0.0
    %2164 = vmatprep.subr.mxu0 0.0
    %2165 = vmatpush2.msra.mxu0 0.0
    %2166 = vmatprep.mubr.f32.mxu0 0.0
    %2167 = vmatmul.mubr.f32.gmra.mxu0 %v2100
    %v2168 = vpop.f32.mrf.mxu0
    %v2169 = vadd.f32 0.0, %v2168
    %v2170 = vpop.f32.mrf.mxu0
    %2171 = vdwg.mxu0
    %v2172 = vmul.f32 %v110, %v2083
    %v2173 = vmul.f32 %v111, %v2084
    %v2174 = vmul.f32 %v112, %v2085
    %v2175 = vmul.f32 %v113, %v2086
    %v2176 = vmul.f32 %v110, %v2087
    %v2177 = vmul.f32 %v111, %v2088
    %v2178 = vmul.f32 %v112, %v2089
    %v2179 = vmul.f32 %v113, %v2090
    %v2180 = vmul.f32 %v110, %v2091
    %v2181 = vmul.f32 %v111, %v2092
    %v2182 = vmul.f32 %v112, %v2093
    %v2183 = vmul.f32 %v113, %v2094
    %v2184 = vmul.f32 %v110, %v2095
    %v2185 = vmul.f32 %v111, %v2096
    %v2186 = vmul.f32 %v112, %v2097
    %v2187 = vmul.f32 %v113, %v2098
    %v2189 = vunpack.c.l.s4 1966171168
    %v2190 = vunpack.c.0.s8 %v2189
    %v2191 = vlaneseq
    %v2192 = vshrl.u32 %v2191, 7
    %v2193 = vsub.s32 %v2190, %v2192
    %v2194 = vrot.slane %v2082, %v2193
    %v2195 = vcombine.high %v2194, %v2194
    %v2197 = vunpack.c.l.s4 1966171168
    %v2198 = vunpack.c.0.s8 %v2197
    %v2199 = vlaneseq
    %v2200 = vshrl.u32 %v2199, 7
    %v2201 = vsub.s32 %v2198, %v2200
    %v2202 = vrot.slane %v2194, %v2201
    %v2204 = vunpack.c.l.s4 1966171168
    %v2205 = vunpack.c.0.s8 %v2204
    %v2206 = vlaneseq
    %v2207 = vshrl.u32 %v2206, 7
    %v2208 = vsub.s32 %v2205, %v2207
    %v2209 = vrot.slane %v2195, %v2208
    %v2210 = vcombine.high %v2202, %v2202
    %v2211 = vcombine.high %v2209, %v2209
    %v2212 = vlaneseq
    %v2213 = vshrl.u32 %v2212, 7
    %v2214 = vsub.s32 0, %v2213
    %v2215 = vrot.slane %v2202, %v2214
    %v2216 = vlaneseq
    %v2217 = vshrl.u32 %v2216, 7
    %v2218 = vsub.s32 0, %v2217
    %v2219 = vrot.slane %v2209, %v2218
    %v2220 = vlaneseq
    %v2221 = vshrl.u32 %v2220, 7
    %v2222 = vsub.s32 0, %v2221
    %v2223 = vrot.slane %v2210, %v2222
    %v2224 = vlaneseq
    %v2225 = vshrl.u32 %v2224, 7
    %v2226 = vsub.s32 0, %v2225
    %v2227 = vrot.slane %v2211, %v2226
    %v2232 = vmul.f32 %v2172, %v2215
    %v2233 = vmul.f32 %v2173, %v2215
    %v2234 = vmul.f32 %v2174, %v2215
    %v2235 = vmul.f32 %v2175, %v2215
    %v2236 = vmul.f32 %v2176, %v2219
    %v2237 = vmul.f32 %v2177, %v2219
    %v2238 = vmul.f32 %v2178, %v2219
    %v2239 = vmul.f32 %v2179, %v2219
    %v2240 = vmul.f32 %v2180, %v2223
    %v2241 = vmul.f32 %v2181, %v2223
    %v2242 = vmul.f32 %v2182, %v2223
    %v2243 = vmul.f32 %v2183, %v2223
    %v2244 = vmul.f32 %v2184, %v2227
    %v2245 = vmul.f32 %v2185, %v2227
    %v2246 = vmul.f32 %v2186, %v2227
    %v2247 = vmul.f32 %v2187, %v2227
    %v2248 = vsel %vm133, %v2232, 0.0
    %2249 = vadd.xlane.f32.xlu0 %v2248
    %v2250 = vpop.xlane.xlu0 %2249
    %v2251 = vsel %vm133, %v2233, 0.0
    %2252 = vadd.xlane.f32.xlu0 %v2251
    %v2253 = vpop.xlane.xlu0 %2252
    %v2254 = vsel %vm133, %v2234, 0.0
    %2255 = vadd.xlane.f32.xlu0 %v2254
    %v2256 = vpop.xlane.xlu0 %2255
    %v2257 = vsel %vm133, %v2235, 0.0
    %2258 = vadd.xlane.f32.xlu0 %v2257
    %v2259 = vpop.xlane.xlu0 %2258
    %v2260 = vsel %vm133, %v2236, 0.0
    %2261 = vadd.xlane.f32.xlu0 %v2260
    %v2262 = vpop.xlane.xlu0 %2261
    %v2263 = vsel %vm133, %v2237, 0.0
    %2264 = vadd.xlane.f32.xlu0 %v2263
    %v2265 = vpop.xlane.xlu0 %2264
    %v2266 = vsel %vm133, %v2238, 0.0
    %2267 = vadd.xlane.f32.xlu0 %v2266
    %v2268 = vpop.xlane.xlu0 %2267
    %v2269 = vsel %vm133, %v2239, 0.0
    %2270 = vadd.xlane.f32.xlu0 %v2269
    %v2271 = vpop.xlane.xlu0 %2270
    %v2272 = vsel %vm133, %v2240, 0.0
    %2273 = vadd.xlane.f32.xlu0 %v2272
    %v2274 = vpop.xlane.xlu0 %2273
    %v2275 = vsel %vm133, %v2241, 0.0
    %2276 = vadd.xlane.f32.xlu0 %v2275
    %v2277 = vpop.xlane.xlu0 %2276
    %v2278 = vsel %vm133, %v2242, 0.0
    %2279 = vadd.xlane.f32.xlu0 %v2278
    %v2280 = vpop.xlane.xlu0 %2279
    %v2281 = vsel %vm133, %v2243, 0.0
    %2282 = vadd.xlane.f32.xlu0 %v2281
    %v2283 = vpop.xlane.xlu0 %2282
    %v2284 = vsel %vm133, %v2244, 0.0
    %2285 = vadd.xlane.f32.xlu0 %v2284
    %v2286 = vpop.xlane.xlu0 %2285
    %v2287 = vsel %vm133, %v2245, 0.0
    %2288 = vadd.xlane.f32.xlu0 %v2287
    %v2289 = vpop.xlane.xlu0 %2288
    %v2290 = vsel %vm133, %v2246, 0.0
    %2291 = vadd.xlane.f32.xlu0 %v2290
    %v2292 = vpop.xlane.xlu0 %2291
    %v2293 = vsel %vm133, %v2247, 0.0
    %2294 = vadd.xlane.f32.xlu0 %v2293
    %v2295 = vpop.xlane.xlu0 %2294
    %s2296 = scalar_lea.vmem [#allocation4], 16
    %v2297 = vld [vmem:[%s2296] sm:$0xf]
    %v2298 = vadd.f32 %v2297, %v2169
    %v2315 = vlaneseq
    %v2316 = vshrl.u32 %v2315, 7
    %v2317 = vsub.s32 %v350, %v2316
    %v2318 = vrot.slane %v2250, %v2317
    %v2319 = vlaneseq
    %v2320 = vshrl.u32 %v2319, 7
    %v2321 = vsub.s32 %v355, %v2320
    %v2322 = vrot.slane %v2253, %v2321
    %v2323 = vsel %vm360, %v2322, %v2318
    %v2324 = vlaneseq
    %v2325 = vshrl.u32 %v2324, 7
    %v2326 = vsub.s32 %v362, %v2325
    %v2327 = vrot.slane %v2256, %v2326
    %v2328 = vsel %vm367, %v2327, %v2323
    %v2329 = vlaneseq
    %v2330 = vshrl.u32 %v2329, 7
    %v2331 = vsub.s32 %v369, %v2330
    %v2332 = vrot.slane %v2259, %v2331
    %v2333 = vsel %vm374, %v2332, %v2328
    %v2334 = vlaneseq
    %v2335 = vshrl.u32 %v2334, 7
    %v2336 = vsub.s32 %v350, %v2335
    %v2337 = vrot.slane %v2262, %v2336
    %v2338 = vlaneseq
    %v2339 = vshrl.u32 %v2338, 7
    %v2340 = vsub.s32 %v355, %v2339
    %v2341 = vrot.slane %v2265, %v2340
    %v2342 = vsel %vm360, %v2341, %v2337
    %v2343 = vlaneseq
    %v2344 = vshrl.u32 %v2343, 7
    %v2345 = vsub.s32 %v362, %v2344
    %v2346 = vrot.slane %v2268, %v2345
    %v2347 = vsel %vm367, %v2346, %v2342
    %v2348 = vlaneseq
    %v2349 = vshrl.u32 %v2348, 7
    %v2350 = vsub.s32 %v369, %v2349
    %v2351 = vrot.slane %v2271, %v2350
    %v2352 = vsel %vm374, %v2351, %v2347
    %v2353 = vlaneseq
    %v2354 = vshrl.u32 %v2353, 7
    %v2355 = vsub.s32 %v350, %v2354
    %v2356 = vrot.slane %v2274, %v2355
    %v2357 = vlaneseq
    %v2358 = vshrl.u32 %v2357, 7
    %v2359 = vsub.s32 %v355, %v2358
    %v2360 = vrot.slane %v2277, %v2359
    %v2361 = vsel %vm360, %v2360, %v2356
    %v2362 = vlaneseq
    %v2363 = vshrl.u32 %v2362, 7
    %v2364 = vsub.s32 %v362, %v2363
    %v2365 = vrot.slane %v2280, %v2364
    %v2366 = vsel %vm367, %v2365, %v2361
    %v2367 = vlaneseq
    %v2368 = vshrl.u32 %v2367, 7
    %v2369 = vsub.s32 %v369, %v2368
    %v2370 = vrot.slane %v2283, %v2369
    %v2371 = vsel %vm374, %v2370, %v2366
    %v2372 = vlaneseq
    %v2373 = vshrl.u32 %v2372, 7
    %v2374 = vsub.s32 %v350, %v2373
    %v2375 = vrot.slane %v2286, %v2374
    %v2376 = vlaneseq
    %v2377 = vshrl.u32 %v2376, 7
    %v2378 = vsub.s32 %v355, %v2377
    %v2379 = vrot.slane %v2289, %v2378
    %v2380 = vsel %vm360, %v2379, %v2375
    %v2381 = vlaneseq
    %v2382 = vshrl.u32 %v2381, 7
    %v2383 = vsub.s32 %v362, %v2382
    %v2384 = vrot.slane %v2292, %v2383
    %v2385 = vsel %vm367, %v2384, %v2380
    %v2386 = vlaneseq
    %v2387 = vshrl.u32 %v2386, 7
    %v2388 = vsub.s32 %v369, %v2387
    %v2389 = vrot.slane %v2295, %v2388
    %v2390 = vsel %vm374, %v2389, %v2385
    %v2391 = vsel %vm433, %v2352, %v2333
    %v2392 = vsel %vm435, %v2371, %v2391
    %v2393 = vsel %vm437, %v2390, %v2392
    %v2395 = vadd.f32 %v2298, %v2393
    %v2396 = vtanh.pop %v2395
    %s2397 = scalar_lea.vmem [#allocation12], 16
    %2398 = vst.msk [vmem:[%s2397] sm:$0xf] %vm85, %v2396
    %v2399 = vmul.f32 %v2396, %v447
    %v2400 = vsel %vm85, %v2399, 0.0
    %2401 = vadd.xlane.f32.xlu0 %v2400
    %v2402 = vpop.xlane.xlu0 %2401
    %v2403 = vadd.f32 %v2402, %v457
    %v2404 = vtanh.pop %v2403
    %2406 = vset.pattern.permute.xlu0 0
    %2407 = vperm.xlu0 %2406, %v2404
    %v2408 = vpop.permute.xlu0 %2407
    %v2410 = vmul.f32 %v2408, %v2396
    %v2411 = vlaneseq
    %v2412 = vshrl.u32 %v2411, 7
    %v2413 = vsub.s32 0, %v2412
    %v2414 = vrot.slane %v2410, %v2413
    %2416 = vbcast.lane.b32.xlu0 %v2414, 256
    %v2417 = vpop.permute.xlu0 %2416
    %s2419 = sor.u32 256, 8
    %2420 = vbcast.lane.b32.xlu0 %v2414, %s2419
    %v2421 = vpop.permute.xlu0 %2420
    %s2423 = sor.u32 256, 16
    %2424 = vbcast.lane.b32.xlu0 %v2414, %s2423
    %v2425 = vpop.permute.xlu0 %2424
    %s2427 = sor.u32 256, 24
    %2428 = vbcast.lane.b32.xlu0 %v2414, %s2427
    %v2429 = vpop.permute.xlu0 %2428
    %v2430 = vlaneseq
    %v2431 = vshrl.u32 %v2430, 7
    %v2432 = vsub.s32 1, %v2431
    %v2433 = vrot.slane %v2410, %v2432
    %2435 = vbcast.lane.b32.xlu0 %v2433, 256
    %v2436 = vpop.permute.xlu0 %2435
    %s2438 = sor.u32 256, 8
    %2439 = vbcast.lane.b32.xlu0 %v2433, %s2438
    %v2440 = vpop.permute.xlu0 %2439
    %s2442 = sor.u32 256, 16
    %2443 = vbcast.lane.b32.xlu0 %v2433, %s2442
    %v2444 = vpop.permute.xlu0 %2443
    %s2446 = sor.u32 256, 24
    %2447 = vbcast.lane.b32.xlu0 %v2433, %s2446
    %v2448 = vpop.permute.xlu0 %2447
    %v2449 = vlaneseq
    %v2450 = vshrl.u32 %v2449, 7
    %v2451 = vsub.s32 2, %v2450
    %v2452 = vrot.slane %v2410, %v2451
    %2454 = vbcast.lane.b32.xlu0 %v2452, 256
    %v2455 = vpop.permute.xlu0 %2454
    %s2457 = sor.u32 256, 8
    %2458 = vbcast.lane.b32.xlu0 %v2452, %s2457
    %v2459 = vpop.permute.xlu0 %2458
    %s2461 = sor.u32 256, 16
    %2462 = vbcast.lane.b32.xlu0 %v2452, %s2461
    %v2463 = vpop.permute.xlu0 %2462
    %s2465 = sor.u32 256, 24
    %2466 = vbcast.lane.b32.xlu0 %v2452, %s2465
    %v2467 = vpop.permute.xlu0 %2466
    %v2468 = vlaneseq
    %v2469 = vshrl.u32 %v2468, 7
    %v2470 = vsub.s32 3, %v2469
    %v2471 = vrot.slane %v2410, %v2470
    %2473 = vbcast.lane.b32.xlu0 %v2471, 256
    %v2474 = vpop.permute.xlu0 %2473
    %s2476 = sor.u32 256, 8
    %2477 = vbcast.lane.b32.xlu0 %v2471, %s2476
    %v2478 = vpop.permute.xlu0 %2477
    %s2480 = sor.u32 256, 16
    %2481 = vbcast.lane.b32.xlu0 %v2471, %s2480
    %v2482 = vpop.permute.xlu0 %2481
    %s2484 = sor.u32 256, 24
    %2485 = vbcast.lane.b32.xlu0 %v2471, %s2484
    %v2486 = vpop.permute.xlu0 %2485
    %v2487 = vmul.f32 %v2417, %v2215
    %v2488 = vmul.f32 %v2421, %v2215
    %v2489 = vmul.f32 %v2425, %v2215
    %v2490 = vmul.f32 %v2429, %v2215
    %v2491 = vmul.f32 %v2436, %v2219
    %v2492 = vmul.f32 %v2440, %v2219
    %v2493 = vmul.f32 %v2444, %v2219
    %v2494 = vmul.f32 %v2448, %v2219
    %v2495 = vmul.f32 %v2455, %v2223
    %v2496 = vmul.f32 %v2459, %v2223
    %v2497 = vmul.f32 %v2463, %v2223
    %v2498 = vmul.f32 %v2467, %v2223
    %v2499 = vmul.f32 %v2474, %v2227
    %v2500 = vmul.f32 %v2478, %v2227
    %v2501 = vmul.f32 %v2482, %v2227
    %v2502 = vmul.f32 %v2486, %v2227
    %v2503 = vadd.f32 %v2083, %v2487
    %v2504 = vadd.f32 %v2084, %v2488
    %v2505 = vadd.f32 %v2085, %v2489
    %v2506 = vadd.f32 %v2086, %v2490
    %v2507 = vadd.f32 %v2087, %v2491
    %v2508 = vadd.f32 %v2088, %v2492
    %v2509 = vadd.f32 %v2089, %v2493
    %v2510 = vadd.f32 %v2090, %v2494
    %v2511 = vadd.f32 %v2091, %v2495
    %v2512 = vadd.f32 %v2092, %v2496
    %v2513 = vadd.f32 %v2093, %v2497
    %v2514 = vadd.f32 %v2094, %v2498
    %v2515 = vadd.f32 %v2095, %v2499
    %v2516 = vadd.f32 %v2096, %v2500
    %v2517 = vadd.f32 %v2097, %v2501
    %v2518 = vadd.f32 %v2098, %v2502
    %v2519 = vmax.f32 %v2503, -1.0
    %v2520 = vmax.f32 %v2504, -1.0
    %v2521 = vmax.f32 %v2505, -1.0
    %v2522 = vmax.f32 %v2506, -1.0
    %v2523 = vmax.f32 %v2507, -1.0
    %v2524 = vmax.f32 %v2508, -1.0
    %v2525 = vmax.f32 %v2509, -1.0
    %v2526 = vmax.f32 %v2510, -1.0
    %v2527 = vmax.f32 %v2511, -1.0
    %v2528 = vmax.f32 %v2512, -1.0
    %v2529 = vmax.f32 %v2513, -1.0
    %v2530 = vmax.f32 %v2514, -1.0
    %v2531 = vmax.f32 %v2515, -1.0
    %v2532 = vmax.f32 %v2516, -1.0
    %v2533 = vmax.f32 %v2517, -1.0
    %v2534 = vmax.f32 %v2518, -1.0
    %v2535 = vmin.f32 %v2519, 1.0
    %v2536 = vmin.f32 %v2520, 1.0
    %v2537 = vmin.f32 %v2521, 1.0
    %v2538 = vmin.f32 %v2522, 1.0
    %v2539 = vmin.f32 %v2523, 1.0
    %v2540 = vmin.f32 %v2524, 1.0
    %v2541 = vmin.f32 %v2525, 1.0
    %v2542 = vmin.f32 %v2526, 1.0
    %v2543 = vmin.f32 %v2527, 1.0
    %v2544 = vmin.f32 %v2528, 1.0
    %v2545 = vmin.f32 %v2529, 1.0
    %v2546 = vmin.f32 %v2530, 1.0
    %v2547 = vmin.f32 %v2531, 1.0
    %v2548 = vmin.f32 %v2532, 1.0
    %v2549 = vmin.f32 %v2533, 1.0
    %v2550 = vmin.f32 %v2534, 1.0
    %2551 = vst.msk [vmem:[#allocation15] sm:$0xff] %vm133, %v2535
    %2552 = vst.msk [vmem:[#allocation15 + $0x8] sm:$0xff] %vm133, %v2536
    %2553 = vst.msk [vmem:[#allocation15 + $0x10] sm:$0xff] %vm133, %v2537
    %2554 = vst.msk [vmem:[#allocation15 + $0x18] sm:$0xff] %vm133, %v2538
    %2555 = vst.msk [vmem:[#allocation15 + $0x20] sm:$0xff] %vm133, %v2539
    %2556 = vst.msk [vmem:[#allocation15 + $0x28] sm:$0xff] %vm133, %v2540
    %2557 = vst.msk [vmem:[#allocation15 + $0x30] sm:$0xff] %vm133, %v2541
    %2558 = vst.msk [vmem:[#allocation15 + $0x38] sm:$0xff] %vm133, %v2542
    %2559 = vst.msk [vmem:[#allocation15 + $0x40] sm:$0xff] %vm133, %v2543
    %2560 = vst.msk [vmem:[#allocation15 + $0x48] sm:$0xff] %vm133, %v2544
    %2561 = vst.msk [vmem:[#allocation15 + $0x50] sm:$0xff] %vm133, %v2545
    %2562 = vst.msk [vmem:[#allocation15 + $0x58] sm:$0xff] %vm133, %v2546
    %2563 = vst.msk [vmem:[#allocation15 + $0x60] sm:$0xff] %vm133, %v2547
    %2564 = vst.msk [vmem:[#allocation15 + $0x68] sm:$0xff] %vm133, %v2548
    %2565 = vst.msk [vmem:[#allocation15 + $0x70] sm:$0xff] %vm133, %v2549
    %2566 = vst.msk [vmem:[#allocation15 + $0x78] sm:$0xff] %vm133, %v2550
    %2567 = vst.msk [vmem:[#allocation13] sm:$0xf] %vm85, %v2396
    %v2568 = vld [vmem:[#allocation13] sm:$0xf]
    %v2569 = vld [vmem:[#allocation15] sm:$0xff]
    %v2570 = vld [vmem:[#allocation15 + $0x8] sm:$0xff]
    %v2571 = vld [vmem:[#allocation15 + $0x10] sm:$0xff]
    %v2572 = vld [vmem:[#allocation15 + $0x18] sm:$0xff]
    %v2573 = vld [vmem:[#allocation15 + $0x20] sm:$0xff]
    %v2574 = vld [vmem:[#allocation15 + $0x28] sm:$0xff]
    %v2575 = vld [vmem:[#allocation15 + $0x30] sm:$0xff]
    %v2576 = vld [vmem:[#allocation15 + $0x38] sm:$0xff]
    %v2577 = vld [vmem:[#allocation15 + $0x40] sm:$0xff]
    %v2578 = vld [vmem:[#allocation15 + $0x48] sm:$0xff]
    %v2579 = vld [vmem:[#allocation15 + $0x50] sm:$0xff]
    %v2580 = vld [vmem:[#allocation15 + $0x58] sm:$0xff]
    %v2581 = vld [vmem:[#allocation15 + $0x60] sm:$0xff]
    %v2582 = vld [vmem:[#allocation15 + $0x68] sm:$0xff]
    %v2583 = vld [vmem:[#allocation15 + $0x70] sm:$0xff]
    %v2584 = vld [vmem:[#allocation15 + $0x78] sm:$0xff]
    %v2586 = vsel %vm133, %v2568, 0
    %2588 = vmatprep.subr.mxu0 0.0
    %2589 = vmatpush1.msra.mxu0 0.0
    %2590 = vmatprep.subr.mxu0 0.0
    %2591 = vmatpush1.msra.mxu0 0.0
    %2592 = vmatprep.subr.mxu0 0.0
    %2593 = vmatpush1.msra.mxu0 0.0
    %2594 = vmatprep.subr.mxu0 0.0
    %2595 = vmatpush1.msra.mxu0 0.0
    %2596 = vmatprep.subr.mxu0 0.0
    %2597 = vmatpush1.msra.mxu0 0.0
    %2598 = vmatprep.subr.mxu0 0.0
    %2599 = vmatpush1.msra.mxu0 0.0
    %2600 = vmatprep.subr.mxu0 0.0
    %2601 = vmatpush1.msra.mxu0 0.0
    %2602 = vmatprep.subr.mxu0 0.0
    %2603 = vmatpush1.msra.mxu0 0.0
    %2604 = vmatprep.subr.mxu0 0.0
    %2605 = vmatpush1.msra.mxu0 0.0
    %2606 = vmatprep.subr.mxu0 0.0
    %2607 = vmatpush1.msra.mxu0 0.0
    %2608 = vmatprep.subr.mxu0 0.0
    %2609 = vmatpush1.msra.mxu0 0.0
    %2610 = vmatprep.subr.mxu0 0.0
    %2611 = vmatpush1.msra.mxu0 0.0
    %2612 = vmatprep.subr.mxu0 0.0
    %2613 = vmatpush1.msra.mxu0 %v109
    %2614 = vmatprep.subr.mxu0 0.0
    %2615 = vmatpush1.msra.mxu0 %v108
    %2616 = vmatprep.subr.mxu0 0.0
    %2617 = vmatpush1.msra.mxu0 %v107
    %2618 = vmatprep.subr.mxu0 0.0
    %2619 = vmatpush1.msra.mxu0 %v106
    %2620 = vmatprep.subr.mxu0 0.0
    %2621 = vmatpush2.msra.mxu0 0.0
    %2622 = vmatprep.subr.mxu0 0.0
    %2623 = vmatpush2.msra.mxu0 0.0
    %2624 = vmatprep.subr.mxu0 0.0
    %2625 = vmatpush2.msra.mxu0 0.0
    %2626 = vmatprep.subr.mxu0 0.0
    %2627 = vmatpush2.msra.mxu0 0.0
    %2628 = vmatprep.subr.mxu0 0.0
    %2629 = vmatpush2.msra.mxu0 0.0
    %2630 = vmatprep.subr.mxu0 0.0
    %2631 = vmatpush2.msra.mxu0 0.0
    %2632 = vmatprep.subr.mxu0 0.0
    %2633 = vmatpush2.msra.mxu0 0.0
    %2634 = vmatprep.subr.mxu0 0.0
    %2635 = vmatpush2.msra.mxu0 0.0
    %2636 = vmatprep.subr.mxu0 0.0
    %2637 = vmatpush2.msra.mxu0 0.0
    %2638 = vmatprep.subr.mxu0 0.0
    %2639 = vmatpush2.msra.mxu0 0.0
    %2640 = vmatprep.subr.mxu0 0.0
    %2641 = vmatpush2.msra.mxu0 0.0
    %2642 = vmatprep.subr.mxu0 0.0
    %2643 = vmatpush2.msra.mxu0 0.0
    %2644 = vmatprep.subr.mxu0 0.0
    %2645 = vmatpush2.msra.mxu0 0.0
    %2646 = vmatprep.subr.mxu0 0.0
    %2647 = vmatpush2.msra.mxu0 0.0
    %2648 = vmatprep.subr.mxu0 0.0
    %2649 = vmatpush2.msra.mxu0 0.0
    %2650 = vmatprep.subr.mxu0 0.0
    %2651 = vmatpush2.msra.mxu0 0.0
    %2652 = vmatprep.mubr.f32.mxu0 0.0
    %2653 = vmatmul.mubr.f32.gmra.mxu0 %v2586
    %v2654 = vpop.f32.mrf.mxu0
    %v2655 = vadd.f32 0.0, %v2654
    %v2656 = vpop.f32.mrf.mxu0
    %2657 = vdwg.mxu0
    %v2658 = vmul.f32 %v110, %v2569
    %v2659 = vmul.f32 %v111, %v2570
    %v2660 = vmul.f32 %v112, %v2571
    %v2661 = vmul.f32 %v113, %v2572
    %v2662 = vmul.f32 %v110, %v2573
    %v2663 = vmul.f32 %v111, %v2574
    %v2664 = vmul.f32 %v112, %v2575
    %v2665 = vmul.f32 %v113, %v2576
    %v2666 = vmul.f32 %v110, %v2577
    %v2667 = vmul.f32 %v111, %v2578
    %v2668 = vmul.f32 %v112, %v2579
    %v2669 = vmul.f32 %v113, %v2580
    %v2670 = vmul.f32 %v110, %v2581
    %v2671 = vmul.f32 %v111, %v2582
    %v2672 = vmul.f32 %v112, %v2583
    %v2673 = vmul.f32 %v113, %v2584
    %v2675 = vunpack.c.l.s4 1966171168
    %v2676 = vunpack.c.0.s8 %v2675
    %v2677 = vlaneseq
    %v2678 = vshrl.u32 %v2677, 7
    %v2679 = vsub.s32 %v2676, %v2678
    %v2680 = vrot.slane %v2568, %v2679
    %v2681 = vcombine.high %v2680, %v2680
    %v2683 = vunpack.c.l.s4 1966171168
    %v2684 = vunpack.c.0.s8 %v2683
    %v2685 = vlaneseq
    %v2686 = vshrl.u32 %v2685, 7
    %v2687 = vsub.s32 %v2684, %v2686
    %v2688 = vrot.slane %v2680, %v2687
    %v2690 = vunpack.c.l.s4 1966171168
    %v2691 = vunpack.c.0.s8 %v2690
    %v2692 = vlaneseq
    %v2693 = vshrl.u32 %v2692, 7
    %v2694 = vsub.s32 %v2691, %v2693
    %v2695 = vrot.slane %v2681, %v2694
    %v2696 = vcombine.high %v2688, %v2688
    %v2697 = vcombine.high %v2695, %v2695
    %v2698 = vlaneseq
    %v2699 = vshrl.u32 %v2698, 7
    %v2700 = vsub.s32 0, %v2699
    %v2701 = vrot.slane %v2688, %v2700
    %v2702 = vlaneseq
    %v2703 = vshrl.u32 %v2702, 7
    %v2704 = vsub.s32 0, %v2703
    %v2705 = vrot.slane %v2695, %v2704
    %v2706 = vlaneseq
    %v2707 = vshrl.u32 %v2706, 7
    %v2708 = vsub.s32 0, %v2707
    %v2709 = vrot.slane %v2696, %v2708
    %v2710 = vlaneseq
    %v2711 = vshrl.u32 %v2710, 7
    %v2712 = vsub.s32 0, %v2711
    %v2713 = vrot.slane %v2697, %v2712
    %v2718 = vmul.f32 %v2658, %v2701
    %v2719 = vmul.f32 %v2659, %v2701
    %v2720 = vmul.f32 %v2660, %v2701
    %v2721 = vmul.f32 %v2661, %v2701
    %v2722 = vmul.f32 %v2662, %v2705
    %v2723 = vmul.f32 %v2663, %v2705
    %v2724 = vmul.f32 %v2664, %v2705
    %v2725 = vmul.f32 %v2665, %v2705
    %v2726 = vmul.f32 %v2666, %v2709
    %v2727 = vmul.f32 %v2667, %v2709
    %v2728 = vmul.f32 %v2668, %v2709
    %v2729 = vmul.f32 %v2669, %v2709
    %v2730 = vmul.f32 %v2670, %v2713
    %v2731 = vmul.f32 %v2671, %v2713
    %v2732 = vmul.f32 %v2672, %v2713
    %v2733 = vmul.f32 %v2673, %v2713
    %v2734 = vsel %vm133, %v2718, 0.0
    %2735 = vadd.xlane.f32.xlu0 %v2734
    %v2736 = vpop.xlane.xlu0 %2735
    %v2737 = vsel %vm133, %v2719, 0.0
    %2738 = vadd.xlane.f32.xlu0 %v2737
    %v2739 = vpop.xlane.xlu0 %2738
    %v2740 = vsel %vm133, %v2720, 0.0
    %2741 = vadd.xlane.f32.xlu0 %v2740
    %v2742 = vpop.xlane.xlu0 %2741
    %v2743 = vsel %vm133, %v2721, 0.0
    %2744 = vadd.xlane.f32.xlu0 %v2743
    %v2745 = vpop.xlane.xlu0 %2744
    %v2746 = vsel %vm133, %v2722, 0.0
    %2747 = vadd.xlane.f32.xlu0 %v2746
    %v2748 = vpop.xlane.xlu0 %2747
    %v2749 = vsel %vm133, %v2723, 0.0
    %2750 = vadd.xlane.f32.xlu0 %v2749
    %v2751 = vpop.xlane.xlu0 %2750
    %v2752 = vsel %vm133, %v2724, 0.0
    %2753 = vadd.xlane.f32.xlu0 %v2752
    %v2754 = vpop.xlane.xlu0 %2753
    %v2755 = vsel %vm133, %v2725, 0.0
    %2756 = vadd.xlane.f32.xlu0 %v2755
    %v2757 = vpop.xlane.xlu0 %2756
    %v2758 = vsel %vm133, %v2726, 0.0
    %2759 = vadd.xlane.f32.xlu0 %v2758
    %v2760 = vpop.xlane.xlu0 %2759
    %v2761 = vsel %vm133, %v2727, 0.0
    %2762 = vadd.xlane.f32.xlu0 %v2761
    %v2763 = vpop.xlane.xlu0 %2762
    %v2764 = vsel %vm133, %v2728, 0.0
    %2765 = vadd.xlane.f32.xlu0 %v2764
    %v2766 = vpop.xlane.xlu0 %2765
    %v2767 = vsel %vm133, %v2729, 0.0
    %2768 = vadd.xlane.f32.xlu0 %v2767
    %v2769 = vpop.xlane.xlu0 %2768
    %v2770 = vsel %vm133, %v2730, 0.0
    %2771 = vadd.xlane.f32.xlu0 %v2770
    %v2772 = vpop.xlane.xlu0 %2771
    %v2773 = vsel %vm133, %v2731, 0.0
    %2774 = vadd.xlane.f32.xlu0 %v2773
    %v2775 = vpop.xlane.xlu0 %2774
    %v2776 = vsel %vm133, %v2732, 0.0
    %2777 = vadd.xlane.f32.xlu0 %v2776
    %v2778 = vpop.xlane.xlu0 %2777
    %v2779 = vsel %vm133, %v2733, 0.0
    %2780 = vadd.xlane.f32.xlu0 %v2779
    %v2781 = vpop.xlane.xlu0 %2780
    %s2782 = scalar_lea.vmem [#allocation4], 20
    %v2783 = vld [vmem:[%s2782] sm:$0xf]
    %v2784 = vadd.f32 %v2783, %v2655
    %v2801 = vlaneseq
    %v2802 = vshrl.u32 %v2801, 7
    %v2803 = vsub.s32 %v350, %v2802
    %v2804 = vrot.slane %v2736, %v2803
    %v2805 = vlaneseq
    %v2806 = vshrl.u32 %v2805, 7
    %v2807 = vsub.s32 %v355, %v2806
    %v2808 = vrot.slane %v2739, %v2807
    %v2809 = vsel %vm360, %v2808, %v2804
    %v2810 = vlaneseq
    %v2811 = vshrl.u32 %v2810, 7
    %v2812 = vsub.s32 %v362, %v2811
    %v2813 = vrot.slane %v2742, %v2812
    %v2814 = vsel %vm367, %v2813, %v2809
    %v2815 = vlaneseq
    %v2816 = vshrl.u32 %v2815, 7
    %v2817 = vsub.s32 %v369, %v2816
    %v2818 = vrot.slane %v2745, %v2817
    %v2819 = vsel %vm374, %v2818, %v2814
    %v2820 = vlaneseq
    %v2821 = vshrl.u32 %v2820, 7
    %v2822 = vsub.s32 %v350, %v2821
    %v2823 = vrot.slane %v2748, %v2822
    %v2824 = vlaneseq
    %v2825 = vshrl.u32 %v2824, 7
    %v2826 = vsub.s32 %v355, %v2825
    %v2827 = vrot.slane %v2751, %v2826
    %v2828 = vsel %vm360, %v2827, %v2823
    %v2829 = vlaneseq
    %v2830 = vshrl.u32 %v2829, 7
    %v2831 = vsub.s32 %v362, %v2830
    %v2832 = vrot.slane %v2754, %v2831
    %v2833 = vsel %vm367, %v2832, %v2828
    %v2834 = vlaneseq
    %v2835 = vshrl.u32 %v2834, 7
    %v2836 = vsub.s32 %v369, %v2835
    %v2837 = vrot.slane %v2757, %v2836
    %v2838 = vsel %vm374, %v2837, %v2833
    %v2839 = vlaneseq
    %v2840 = vshrl.u32 %v2839, 7
    %v2841 = vsub.s32 %v350, %v2840
    %v2842 = vrot.slane %v2760, %v2841
    %v2843 = vlaneseq
    %v2844 = vshrl.u32 %v2843, 7
    %v2845 = vsub.s32 %v355, %v2844
    %v2846 = vrot.slane %v2763, %v2845
    %v2847 = vsel %vm360, %v2846, %v2842
    %v2848 = vlaneseq
    %v2849 = vshrl.u32 %v2848, 7
    %v2850 = vsub.s32 %v362, %v2849
    %v2851 = vrot.slane %v2766, %v2850
    %v2852 = vsel %vm367, %v2851, %v2847
    %v2853 = vlaneseq
    %v2854 = vshrl.u32 %v2853, 7
    %v2855 = vsub.s32 %v369, %v2854
    %v2856 = vrot.slane %v2769, %v2855
    %v2857 = vsel %vm374, %v2856, %v2852
    %v2858 = vlaneseq
    %v2859 = vshrl.u32 %v2858, 7
    %v2860 = vsub.s32 %v350, %v2859
    %v2861 = vrot.slane %v2772, %v2860
    %v2862 = vlaneseq
    %v2863 = vshrl.u32 %v2862, 7
    %v2864 = vsub.s32 %v355, %v2863
    %v2865 = vrot.slane %v2775, %v2864
    %v2866 = vsel %vm360, %v2865, %v2861
    %v2867 = vlaneseq
    %v2868 = vshrl.u32 %v2867, 7
    %v2869 = vsub.s32 %v362, %v2868
    %v2870 = vrot.slane %v2778, %v2869
    %v2871 = vsel %vm367, %v2870, %v2866
    %v2872 = vlaneseq
    %v2873 = vshrl.u32 %v2872, 7
    %v2874 = vsub.s32 %v369, %v2873
    %v2875 = vrot.slane %v2781, %v2874
    %v2876 = vsel %vm374, %v2875, %v2871
    %v2877 = vsel %vm433, %v2838, %v2819
    %v2878 = vsel %vm435, %v2857, %v2877
    %v2879 = vsel %vm437, %v2876, %v2878
    %v2881 = vadd.f32 %v2784, %v2879
    %v2882 = vtanh.pop %v2881
    %s2883 = scalar_lea.vmem [#allocation12], 20
    %2884 = vst.msk [vmem:[%s2883] sm:$0xf] %vm85, %v2882
    %v2885 = vmul.f32 %v2882, %v447
    %v2886 = vsel %vm85, %v2885, 0.0
    %2887 = vadd.xlane.f32.xlu0 %v2886
    %v2888 = vpop.xlane.xlu0 %2887
    %v2889 = vadd.f32 %v2888, %v457
    %v2890 = vtanh.pop %v2889
    %2892 = vset.pattern.permute.xlu0 0
    %2893 = vperm.xlu0 %2892, %v2890
    %v2894 = vpop.permute.xlu0 %2893
    %v2896 = vmul.f32 %v2894, %v2882
    %v2897 = vlaneseq
    %v2898 = vshrl.u32 %v2897, 7
    %v2899 = vsub.s32 0, %v2898
    %v2900 = vrot.slane %v2896, %v2899
    %2902 = vbcast.lane.b32.xlu0 %v2900, 256
    %v2903 = vpop.permute.xlu0 %2902
    %s2905 = sor.u32 256, 8
    %2906 = vbcast.lane.b32.xlu0 %v2900, %s2905
    %v2907 = vpop.permute.xlu0 %2906
    %s2909 = sor.u32 256, 16
    %2910 = vbcast.lane.b32.xlu0 %v2900, %s2909
    %v2911 = vpop.permute.xlu0 %2910
    %s2913 = sor.u32 256, 24
    %2914 = vbcast.lane.b32.xlu0 %v2900, %s2913
    %v2915 = vpop.permute.xlu0 %2914
    %v2916 = vlaneseq
    %v2917 = vshrl.u32 %v2916, 7
    %v2918 = vsub.s32 1, %v2917
    %v2919 = vrot.slane %v2896, %v2918
    %2921 = vbcast.lane.b32.xlu0 %v2919, 256
    %v2922 = vpop.permute.xlu0 %2921
    %s2924 = sor.u32 256, 8
    %2925 = vbcast.lane.b32.xlu0 %v2919, %s2924
    %v2926 = vpop.permute.xlu0 %2925
    %s2928 = sor.u32 256, 16
    %2929 = vbcast.lane.b32.xlu0 %v2919, %s2928
    %v2930 = vpop.permute.xlu0 %2929
    %s2932 = sor.u32 256, 24
    %2933 = vbcast.lane.b32.xlu0 %v2919, %s2932
    %v2934 = vpop.permute.xlu0 %2933
    %v2935 = vlaneseq
    %v2936 = vshrl.u32 %v2935, 7
    %v2937 = vsub.s32 2, %v2936
    %v2938 = vrot.slane %v2896, %v2937
    %2940 = vbcast.lane.b32.xlu0 %v2938, 256
    %v2941 = vpop.permute.xlu0 %2940
    %s2943 = sor.u32 256, 8
    %2944 = vbcast.lane.b32.xlu0 %v2938, %s2943
    %v2945 = vpop.permute.xlu0 %2944
    %s2947 = sor.u32 256, 16
    %2948 = vbcast.lane.b32.xlu0 %v2938, %s2947
    %v2949 = vpop.permute.xlu0 %2948
    %s2951 = sor.u32 256, 24
    %2952 = vbcast.lane.b32.xlu0 %v2938, %s2951
    %v2953 = vpop.permute.xlu0 %2952
    %v2954 = vlaneseq
    %v2955 = vshrl.u32 %v2954, 7
    %v2956 = vsub.s32 3, %v2955
    %v2957 = vrot.slane %v2896, %v2956
    %2959 = vbcast.lane.b32.xlu0 %v2957, 256
    %v2960 = vpop.permute.xlu0 %2959
    %s2962 = sor.u32 256, 8
    %2963 = vbcast.lane.b32.xlu0 %v2957, %s2962
    %v2964 = vpop.permute.xlu0 %2963
    %s2966 = sor.u32 256, 16
    %2967 = vbcast.lane.b32.xlu0 %v2957, %s2966
    %v2968 = vpop.permute.xlu0 %2967
    %s2970 = sor.u32 256, 24
    %2971 = vbcast.lane.b32.xlu0 %v2957, %s2970
    %v2972 = vpop.permute.xlu0 %2971
    %v2973 = vmul.f32 %v2903, %v2701
    %v2974 = vmul.f32 %v2907, %v2701
    %v2975 = vmul.f32 %v2911, %v2701
    %v2976 = vmul.f32 %v2915, %v2701
    %v2977 = vmul.f32 %v2922, %v2705
    %v2978 = vmul.f32 %v2926, %v2705
    %v2979 = vmul.f32 %v2930, %v2705
    %v2980 = vmul.f32 %v2934, %v2705
    %v2981 = vmul.f32 %v2941, %v2709
    %v2982 = vmul.f32 %v2945, %v2709
    %v2983 = vmul.f32 %v2949, %v2709
    %v2984 = vmul.f32 %v2953, %v2709
    %v2985 = vmul.f32 %v2960, %v2713
    %v2986 = vmul.f32 %v2964, %v2713
    %v2987 = vmul.f32 %v2968, %v2713
    %v2988 = vmul.f32 %v2972, %v2713
    %v2989 = vadd.f32 %v2569, %v2973
    %v2990 = vadd.f32 %v2570, %v2974
    %v2991 = vadd.f32 %v2571, %v2975
    %v2992 = vadd.f32 %v2572, %v2976
    %v2993 = vadd.f32 %v2573, %v2977
    %v2994 = vadd.f32 %v2574, %v2978
    %v2995 = vadd.f32 %v2575, %v2979
    %v2996 = vadd.f32 %v2576, %v2980
    %v2997 = vadd.f32 %v2577, %v2981
    %v2998 = vadd.f32 %v2578, %v2982
    %v2999 = vadd.f32 %v2579, %v2983
    %v3000 = vadd.f32 %v2580, %v2984
    %v3001 = vadd.f32 %v2581, %v2985
    %v3002 = vadd.f32 %v2582, %v2986
    %v3003 = vadd.f32 %v2583, %v2987
    %v3004 = vadd.f32 %v2584, %v2988
    %v3005 = vmax.f32 %v2989, -1.0
    %v3006 = vmax.f32 %v2990, -1.0
    %v3007 = vmax.f32 %v2991, -1.0
    %v3008 = vmax.f32 %v2992, -1.0
    %v3009 = vmax.f32 %v2993, -1.0
    %v3010 = vmax.f32 %v2994, -1.0
    %v3011 = vmax.f32 %v2995, -1.0
    %v3012 = vmax.f32 %v2996, -1.0
    %v3013 = vmax.f32 %v2997, -1.0
    %v3014 = vmax.f32 %v2998, -1.0
    %v3015 = vmax.f32 %v2999, -1.0
    %v3016 = vmax.f32 %v3000, -1.0
    %v3017 = vmax.f32 %v3001, -1.0
    %v3018 = vmax.f32 %v3002, -1.0
    %v3019 = vmax.f32 %v3003, -1.0
    %v3020 = vmax.f32 %v3004, -1.0
    %v3021 = vmin.f32 %v3005, 1.0
    %v3022 = vmin.f32 %v3006, 1.0
    %v3023 = vmin.f32 %v3007, 1.0
    %v3024 = vmin.f32 %v3008, 1.0
    %v3025 = vmin.f32 %v3009, 1.0
    %v3026 = vmin.f32 %v3010, 1.0
    %v3027 = vmin.f32 %v3011, 1.0
    %v3028 = vmin.f32 %v3012, 1.0
    %v3029 = vmin.f32 %v3013, 1.0
    %v3030 = vmin.f32 %v3014, 1.0
    %v3031 = vmin.f32 %v3015, 1.0
    %v3032 = vmin.f32 %v3016, 1.0
    %v3033 = vmin.f32 %v3017, 1.0
    %v3034 = vmin.f32 %v3018, 1.0
    %v3035 = vmin.f32 %v3019, 1.0
    %v3036 = vmin.f32 %v3020, 1.0
    %3037 = vst.msk [vmem:[#allocation15] sm:$0xff] %vm133, %v3021
    %3038 = vst.msk [vmem:[#allocation15 + $0x8] sm:$0xff] %vm133, %v3022
    %3039 = vst.msk [vmem:[#allocation15 + $0x10] sm:$0xff] %vm133, %v3023
    %3040 = vst.msk [vmem:[#allocation15 + $0x18] sm:$0xff] %vm133, %v3024
    %3041 = vst.msk [vmem:[#allocation15 + $0x20] sm:$0xff] %vm133, %v3025
    %3042 = vst.msk [vmem:[#allocation15 + $0x28] sm:$0xff] %vm133, %v3026
    %3043 = vst.msk [vmem:[#allocation15 + $0x30] sm:$0xff] %vm133, %v3027
    %3044 = vst.msk [vmem:[#allocation15 + $0x38] sm:$0xff] %vm133, %v3028
    %3045 = vst.msk [vmem:[#allocation15 + $0x40] sm:$0xff] %vm133, %v3029
    %3046 = vst.msk [vmem:[#allocation15 + $0x48] sm:$0xff] %vm133, %v3030
    %3047 = vst.msk [vmem:[#allocation15 + $0x50] sm:$0xff] %vm133, %v3031
    %3048 = vst.msk [vmem:[#allocation15 + $0x58] sm:$0xff] %vm133, %v3032
    %3049 = vst.msk [vmem:[#allocation15 + $0x60] sm:$0xff] %vm133, %v3033
    %3050 = vst.msk [vmem:[#allocation15 + $0x68] sm:$0xff] %vm133, %v3034
    %3051 = vst.msk [vmem:[#allocation15 + $0x70] sm:$0xff] %vm133, %v3035
    %3052 = vst.msk [vmem:[#allocation15 + $0x78] sm:$0xff] %vm133, %v3036
    %3053 = vst.msk [vmem:[#allocation13] sm:$0xf] %vm85, %v2882
    %v3054 = vld [vmem:[#allocation13] sm:$0xf]
    %v3055 = vld [vmem:[#allocation15] sm:$0xff]
    %v3056 = vld [vmem:[#allocation15 + $0x8] sm:$0xff]
    %v3057 = vld [vmem:[#allocation15 + $0x10] sm:$0xff]
    %v3058 = vld [vmem:[#allocation15 + $0x18] sm:$0xff]
    %v3059 = vld [vmem:[#allocation15 + $0x20] sm:$0xff]
    %v3060 = vld [vmem:[#allocation15 + $0x28] sm:$0xff]
    %v3061 = vld [vmem:[#allocation15 + $0x30] sm:$0xff]
    %v3062 = vld [vmem:[#allocation15 + $0x38] sm:$0xff]
    %v3063 = vld [vmem:[#allocation15 + $0x40] sm:$0xff]
    %v3064 = vld [vmem:[#allocation15 + $0x48] sm:$0xff]
    %v3065 = vld [vmem:[#allocation15 + $0x50] sm:$0xff]
    %v3066 = vld [vmem:[#allocation15 + $0x58] sm:$0xff]
    %v3067 = vld [vmem:[#allocation15 + $0x60] sm:$0xff]
    %v3068 = vld [vmem:[#allocation15 + $0x68] sm:$0xff]
    %v3069 = vld [vmem:[#allocation15 + $0x70] sm:$0xff]
    %v3070 = vld [vmem:[#allocation15 + $0x78] sm:$0xff]
    %v3072 = vsel %vm133, %v3054, 0
    %3074 = vmatprep.subr.mxu0 0.0
    %3075 = vmatpush1.msra.mxu0 0.0
    %3076 = vmatprep.subr.mxu0 0.0
    %3077 = vmatpush1.msra.mxu0 0.0
    %3078 = vmatprep.subr.mxu0 0.0
    %3079 = vmatpush1.msra.mxu0 0.0
    %3080 = vmatprep.subr.mxu0 0.0
    %3081 = vmatpush1.msra.mxu0 0.0
    %3082 = vmatprep.subr.mxu0 0.0
    %3083 = vmatpush1.msra.mxu0 0.0
    %3084 = vmatprep.subr.mxu0 0.0
    %3085 = vmatpush1.msra.mxu0 0.0
    %3086 = vmatprep.subr.mxu0 0.0
    %3087 = vmatpush1.msra.mxu0 0.0
    %3088 = vmatprep.subr.mxu0 0.0
    %3089 = vmatpush1.msra.mxu0 0.0
    %3090 = vmatprep.subr.mxu0 0.0
    %3091 = vmatpush1.msra.mxu0 0.0
    %3092 = vmatprep.subr.mxu0 0.0
    %3093 = vmatpush1.msra.mxu0 0.0
    %3094 = vmatprep.subr.mxu0 0.0
    %3095 = vmatpush1.msra.mxu0 0.0
    %3096 = vmatprep.subr.mxu0 0.0
    %3097 = vmatpush1.msra.mxu0 0.0
    %3098 = vmatprep.subr.mxu0 0.0
    %3099 = vmatpush1.msra.mxu0 %v109
    %3100 = vmatprep.subr.mxu0 0.0
    %3101 = vmatpush1.msra.mxu0 %v108
    %3102 = vmatprep.subr.mxu0 0.0
    %3103 = vmatpush1.msra.mxu0 %v107
    %3104 = vmatprep.subr.mxu0 0.0
    %3105 = vmatpush1.msra.mxu0 %v106
    %3106 = vmatprep.subr.mxu0 0.0
    %3107 = vmatpush2.msra.mxu0 0.0
    %3108 = vmatprep.subr.mxu0 0.0
    %3109 = vmatpush2.msra.mxu0 0.0
    %3110 = vmatprep.subr.mxu0 0.0
    %3111 = vmatpush2.msra.mxu0 0.0
    %3112 = vmatprep.subr.mxu0 0.0
    %3113 = vmatpush2.msra.mxu0 0.0
    %3114 = vmatprep.subr.mxu0 0.0
    %3115 = vmatpush2.msra.mxu0 0.0
    %3116 = vmatprep.subr.mxu0 0.0
    %3117 = vmatpush2.msra.mxu0 0.0
    %3118 = vmatprep.subr.mxu0 0.0
    %3119 = vmatpush2.msra.mxu0 0.0
    %3120 = vmatprep.subr.mxu0 0.0
    %3121 = vmatpush2.msra.mxu0 0.0
    %3122 = vmatprep.subr.mxu0 0.0
    %3123 = vmatpush2.msra.mxu0 0.0
    %3124 = vmatprep.subr.mxu0 0.0
    %3125 = vmatpush2.msra.mxu0 0.0
    %3126 = vmatprep.subr.mxu0 0.0
    %3127 = vmatpush2.msra.mxu0 0.0
    %3128 = vmatprep.subr.mxu0 0.0
    %3129 = vmatpush2.msra.mxu0 0.0
    %3130 = vmatprep.subr.mxu0 0.0
    %3131 = vmatpush2.msra.mxu0 0.0
    %3132 = vmatprep.subr.mxu0 0.0
    %3133 = vmatpush2.msra.mxu0 0.0
    %3134 = vmatprep.subr.mxu0 0.0
    %3135 = vmatpush2.msra.mxu0 0.0
    %3136 = vmatprep.subr.mxu0 0.0
    %3137 = vmatpush2.msra.mxu0 0.0
    %3138 = vmatprep.mubr.f32.mxu0 0.0
    %3139 = vmatmul.mubr.f32.gmra.mxu0 %v3072
    %v3140 = vpop.f32.mrf.mxu0
    %v3141 = vadd.f32 0.0, %v3140
    %v3142 = vpop.f32.mrf.mxu0
    %3143 = vdwg.mxu0
    %v3144 = vmul.f32 %v110, %v3055
    %v3145 = vmul.f32 %v111, %v3056
    %v3146 = vmul.f32 %v112, %v3057
    %v3147 = vmul.f32 %v113, %v3058
    %v3148 = vmul.f32 %v110, %v3059
    %v3149 = vmul.f32 %v111, %v3060
    %v3150 = vmul.f32 %v112, %v3061
    %v3151 = vmul.f32 %v113, %v3062
    %v3152 = vmul.f32 %v110, %v3063
    %v3153 = vmul.f32 %v111, %v3064
    %v3154 = vmul.f32 %v112, %v3065
    %v3155 = vmul.f32 %v113, %v3066
    %v3156 = vmul.f32 %v110, %v3067
    %v3157 = vmul.f32 %v111, %v3068
    %v3158 = vmul.f32 %v112, %v3069
    %v3159 = vmul.f32 %v113, %v3070
    %v3161 = vunpack.c.l.s4 1966171168
    %v3162 = vunpack.c.0.s8 %v3161
    %v3163 = vlaneseq
    %v3164 = vshrl.u32 %v3163, 7
    %v3165 = vsub.s32 %v3162, %v3164
    %v3166 = vrot.slane %v3054, %v3165
    %v3167 = vcombine.high %v3166, %v3166
    %v3169 = vunpack.c.l.s4 1966171168
    %v3170 = vunpack.c.0.s8 %v3169
    %v3171 = vlaneseq
    %v3172 = vshrl.u32 %v3171, 7
    %v3173 = vsub.s32 %v3170, %v3172
    %v3174 = vrot.slane %v3166, %v3173
    %v3176 = vunpack.c.l.s4 1966171168
    %v3177 = vunpack.c.0.s8 %v3176
    %v3178 = vlaneseq
    %v3179 = vshrl.u32 %v3178, 7
    %v3180 = vsub.s32 %v3177, %v3179
    %v3181 = vrot.slane %v3167, %v3180
    %v3182 = vcombine.high %v3174, %v3174
    %v3183 = vcombine.high %v3181, %v3181
    %v3184 = vlaneseq
    %v3185 = vshrl.u32 %v3184, 7
    %v3186 = vsub.s32 0, %v3185
    %v3187 = vrot.slane %v3174, %v3186
    %v3188 = vlaneseq
    %v3189 = vshrl.u32 %v3188, 7
    %v3190 = vsub.s32 0, %v3189
    %v3191 = vrot.slane %v3181, %v3190
    %v3192 = vlaneseq
    %v3193 = vshrl.u32 %v3192, 7
    %v3194 = vsub.s32 0, %v3193
    %v3195 = vrot.slane %v3182, %v3194
    %v3196 = vlaneseq
    %v3197 = vshrl.u32 %v3196, 7
    %v3198 = vsub.s32 0, %v3197
    %v3199 = vrot.slane %v3183, %v3198
    %v3204 = vmul.f32 %v3144, %v3187
    %v3205 = vmul.f32 %v3145, %v3187
    %v3206 = vmul.f32 %v3146, %v3187
    %v3207 = vmul.f32 %v3147, %v3187
    %v3208 = vmul.f32 %v3148, %v3191
    %v3209 = vmul.f32 %v3149, %v3191
    %v3210 = vmul.f32 %v3150, %v3191
    %v3211 = vmul.f32 %v3151, %v3191
    %v3212 = vmul.f32 %v3152, %v3195
    %v3213 = vmul.f32 %v3153, %v3195
    %v3214 = vmul.f32 %v3154, %v3195
    %v3215 = vmul.f32 %v3155, %v3195
    %v3216 = vmul.f32 %v3156, %v3199
    %v3217 = vmul.f32 %v3157, %v3199
    %v3218 = vmul.f32 %v3158, %v3199
    %v3219 = vmul.f32 %v3159, %v3199
    %v3220 = vsel %vm133, %v3204, 0.0
    %3221 = vadd.xlane.f32.xlu0 %v3220
    %v3222 = vpop.xlane.xlu0 %3221
    %v3223 = vsel %vm133, %v3205, 0.0
    %3224 = vadd.xlane.f32.xlu0 %v3223
    %v3225 = vpop.xlane.xlu0 %3224
    %v3226 = vsel %vm133, %v3206, 0.0
    %3227 = vadd.xlane.f32.xlu0 %v3226
    %v3228 = vpop.xlane.xlu0 %3227
    %v3229 = vsel %vm133, %v3207, 0.0
    %3230 = vadd.xlane.f32.xlu0 %v3229
    %v3231 = vpop.xlane.xlu0 %3230
    %v3232 = vsel %vm133, %v3208, 0.0
    %3233 = vadd.xlane.f32.xlu0 %v3232
    %v3234 = vpop.xlane.xlu0 %3233
    %v3235 = vsel %vm133, %v3209, 0.0
    %3236 = vadd.xlane.f32.xlu0 %v3235
    %v3237 = vpop.xlane.xlu0 %3236
    %v3238 = vsel %vm133, %v3210, 0.0
    %3239 = vadd.xlane.f32.xlu0 %v3238
    %v3240 = vpop.xlane.xlu0 %3239
    %v3241 = vsel %vm133, %v3211, 0.0
    %3242 = vadd.xlane.f32.xlu0 %v3241
    %v3243 = vpop.xlane.xlu0 %3242
    %v3244 = vsel %vm133, %v3212, 0.0
    %3245 = vadd.xlane.f32.xlu0 %v3244
    %v3246 = vpop.xlane.xlu0 %3245
    %v3247 = vsel %vm133, %v3213, 0.0
    %3248 = vadd.xlane.f32.xlu0 %v3247
    %v3249 = vpop.xlane.xlu0 %3248
    %v3250 = vsel %vm133, %v3214, 0.0
    %3251 = vadd.xlane.f32.xlu0 %v3250
    %v3252 = vpop.xlane.xlu0 %3251
    %v3253 = vsel %vm133, %v3215, 0.0
    %3254 = vadd.xlane.f32.xlu0 %v3253
    %v3255 = vpop.xlane.xlu0 %3254
    %v3256 = vsel %vm133, %v3216, 0.0
    %3257 = vadd.xlane.f32.xlu0 %v3256
    %v3258 = vpop.xlane.xlu0 %3257
    %v3259 = vsel %vm133, %v3217, 0.0
    %3260 = vadd.xlane.f32.xlu0 %v3259
    %v3261 = vpop.xlane.xlu0 %3260
    %v3262 = vsel %vm133, %v3218, 0.0
    %3263 = vadd.xlane.f32.xlu0 %v3262
    %v3264 = vpop.xlane.xlu0 %3263
    %v3265 = vsel %vm133, %v3219, 0.0
    %3266 = vadd.xlane.f32.xlu0 %v3265
    %v3267 = vpop.xlane.xlu0 %3266
    %s3268 = scalar_lea.vmem [#allocation4], 24
    %v3269 = vld [vmem:[%s3268] sm:$0xf]
    %v3270 = vadd.f32 %v3269, %v3141
    %v3287 = vlaneseq
    %v3288 = vshrl.u32 %v3287, 7
    %v3289 = vsub.s32 %v350, %v3288
    %v3290 = vrot.slane %v3222, %v3289
    %v3291 = vlaneseq
    %v3292 = vshrl.u32 %v3291, 7
    %v3293 = vsub.s32 %v355, %v3292
    %v3294 = vrot.slane %v3225, %v3293
    %v3295 = vsel %vm360, %v3294, %v3290
    %v3296 = vlaneseq
    %v3297 = vshrl.u32 %v3296, 7
    %v3298 = vsub.s32 %v362, %v3297
    %v3299 = vrot.slane %v3228, %v3298
    %v3300 = vsel %vm367, %v3299, %v3295
    %v3301 = vlaneseq
    %v3302 = vshrl.u32 %v3301, 7
    %v3303 = vsub.s32 %v369, %v3302
    %v3304 = vrot.slane %v3231, %v3303
    %v3305 = vsel %vm374, %v3304, %v3300
    %v3306 = vlaneseq
    %v3307 = vshrl.u32 %v3306, 7
    %v3308 = vsub.s32 %v350, %v3307
    %v3309 = vrot.slane %v3234, %v3308
    %v3310 = vlaneseq
    %v3311 = vshrl.u32 %v3310, 7
    %v3312 = vsub.s32 %v355, %v3311
    %v3313 = vrot.slane %v3237, %v3312
    %v3314 = vsel %vm360, %v3313, %v3309
    %v3315 = vlaneseq
    %v3316 = vshrl.u32 %v3315, 7
    %v3317 = vsub.s32 %v362, %v3316
    %v3318 = vrot.slane %v3240, %v3317
    %v3319 = vsel %vm367, %v3318, %v3314
    %v3320 = vlaneseq
    %v3321 = vshrl.u32 %v3320, 7
    %v3322 = vsub.s32 %v369, %v3321
    %v3323 = vrot.slane %v3243, %v3322
    %v3324 = vsel %vm374, %v3323, %v3319
    %v3325 = vlaneseq
    %v3326 = vshrl.u32 %v3325, 7
    %v3327 = vsub.s32 %v350, %v3326
    %v3328 = vrot.slane %v3246, %v3327
    %v3329 = vlaneseq
    %v3330 = vshrl.u32 %v3329, 7
    %v3331 = vsub.s32 %v355, %v3330
    %v3332 = vrot.slane %v3249, %v3331
    %v3333 = vsel %vm360, %v3332, %v3328
    %v3334 = vlaneseq
    %v3335 = vshrl.u32 %v3334, 7
    %v3336 = vsub.s32 %v362, %v3335
    %v3337 = vrot.slane %v3252, %v3336
    %v3338 = vsel %vm367, %v3337, %v3333
    %v3339 = vlaneseq
    %v3340 = vshrl.u32 %v3339, 7
    %v3341 = vsub.s32 %v369, %v3340
    %v3342 = vrot.slane %v3255, %v3341
    %v3343 = vsel %vm374, %v3342, %v3338
    %v3344 = vlaneseq
    %v3345 = vshrl.u32 %v3344, 7
    %v3346 = vsub.s32 %v350, %v3345
    %v3347 = vrot.slane %v3258, %v3346
    %v3348 = vlaneseq
    %v3349 = vshrl.u32 %v3348, 7
    %v3350 = vsub.s32 %v355, %v3349
    %v3351 = vrot.slane %v3261, %v3350
    %v3352 = vsel %vm360, %v3351, %v3347
    %v3353 = vlaneseq
    %v3354 = vshrl.u32 %v3353, 7
    %v3355 = vsub.s32 %v362, %v3354
    %v3356 = vrot.slane %v3264, %v3355
    %v3357 = vsel %vm367, %v3356, %v3352
    %v3358 = vlaneseq
    %v3359 = vshrl.u32 %v3358, 7
    %v3360 = vsub.s32 %v369, %v3359
    %v3361 = vrot.slane %v3267, %v3360
    %v3362 = vsel %vm374, %v3361, %v3357
    %v3363 = vsel %vm433, %v3324, %v3305
    %v3364 = vsel %vm435, %v3343, %v3363
    %v3365 = vsel %vm437, %v3362, %v3364
    %v3367 = vadd.f32 %v3270, %v3365
    %v3368 = vtanh.pop %v3367
    %s3369 = scalar_lea.vmem [#allocation12], 24
    %3370 = vst.msk [vmem:[%s3369] sm:$0xf] %vm85, %v3368
    %v3371 = vmul.f32 %v3368, %v447
    %v3372 = vsel %vm85, %v3371, 0.0
    %3373 = vadd.xlane.f32.xlu0 %v3372
    %v3374 = vpop.xlane.xlu0 %3373
    %v3375 = vadd.f32 %v3374, %v457
    %v3376 = vtanh.pop %v3375
    %3378 = vset.pattern.permute.xlu0 0
    %3379 = vperm.xlu0 %3378, %v3376
    %v3380 = vpop.permute.xlu0 %3379
    %v3382 = vmul.f32 %v3380, %v3368
    %v3383 = vlaneseq
    %v3384 = vshrl.u32 %v3383, 7
    %v3385 = vsub.s32 0, %v3384
    %v3386 = vrot.slane %v3382, %v3385
    %3388 = vbcast.lane.b32.xlu0 %v3386, 256
    %v3389 = vpop.permute.xlu0 %3388
    %s3391 = sor.u32 256, 8
    %3392 = vbcast.lane.b32.xlu0 %v3386, %s3391
    %v3393 = vpop.permute.xlu0 %3392
    %s3395 = sor.u32 256, 16
    %3396 = vbcast.lane.b32.xlu0 %v3386, %s3395
    %v3397 = vpop.permute.xlu0 %3396
    %s3399 = sor.u32 256, 24
    %3400 = vbcast.lane.b32.xlu0 %v3386, %s3399
    %v3401 = vpop.permute.xlu0 %3400
    %v3402 = vlaneseq
    %v3403 = vshrl.u32 %v3402, 7
    %v3404 = vsub.s32 1, %v3403
    %v3405 = vrot.slane %v3382, %v3404
    %3407 = vbcast.lane.b32.xlu0 %v3405, 256
    %v3408 = vpop.permute.xlu0 %3407
    %s3410 = sor.u32 256, 8
    %3411 = vbcast.lane.b32.xlu0 %v3405, %s3410
    %v3412 = vpop.permute.xlu0 %3411
    %s3414 = sor.u32 256, 16
    %3415 = vbcast.lane.b32.xlu0 %v3405, %s3414
    %v3416 = vpop.permute.xlu0 %3415
    %s3418 = sor.u32 256, 24
    %3419 = vbcast.lane.b32.xlu0 %v3405, %s3418
    %v3420 = vpop.permute.xlu0 %3419
    %v3421 = vlaneseq
    %v3422 = vshrl.u32 %v3421, 7
    %v3423 = vsub.s32 2, %v3422
    %v3424 = vrot.slane %v3382, %v3423
    %3426 = vbcast.lane.b32.xlu0 %v3424, 256
    %v3427 = vpop.permute.xlu0 %3426
    %s3429 = sor.u32 256, 8
    %3430 = vbcast.lane.b32.xlu0 %v3424, %s3429
    %v3431 = vpop.permute.xlu0 %3430
    %s3433 = sor.u32 256, 16
    %3434 = vbcast.lane.b32.xlu0 %v3424, %s3433
    %v3435 = vpop.permute.xlu0 %3434
    %s3437 = sor.u32 256, 24
    %3438 = vbcast.lane.b32.xlu0 %v3424, %s3437
    %v3439 = vpop.permute.xlu0 %3438
    %v3440 = vlaneseq
    %v3441 = vshrl.u32 %v3440, 7
    %v3442 = vsub.s32 3, %v3441
    %v3443 = vrot.slane %v3382, %v3442
    %3445 = vbcast.lane.b32.xlu0 %v3443, 256
    %v3446 = vpop.permute.xlu0 %3445
    %s3448 = sor.u32 256, 8
    %3449 = vbcast.lane.b32.xlu0 %v3443, %s3448
    %v3450 = vpop.permute.xlu0 %3449
    %s3452 = sor.u32 256, 16
    %3453 = vbcast.lane.b32.xlu0 %v3443, %s3452
    %v3454 = vpop.permute.xlu0 %3453
    %s3456 = sor.u32 256, 24
    %3457 = vbcast.lane.b32.xlu0 %v3443, %s3456
    %v3458 = vpop.permute.xlu0 %3457
    %v3459 = vmul.f32 %v3389, %v3187
    %v3460 = vmul.f32 %v3393, %v3187
    %v3461 = vmul.f32 %v3397, %v3187
    %v3462 = vmul.f32 %v3401, %v3187
    %v3463 = vmul.f32 %v3408, %v3191
    %v3464 = vmul.f32 %v3412, %v3191
    %v3465 = vmul.f32 %v3416, %v3191
    %v3466 = vmul.f32 %v3420, %v3191
    %v3467 = vmul.f32 %v3427, %v3195
    %v3468 = vmul.f32 %v3431, %v3195
    %v3469 = vmul.f32 %v3435, %v3195
    %v3470 = vmul.f32 %v3439, %v3195
    %v3471 = vmul.f32 %v3446, %v3199
    %v3472 = vmul.f32 %v3450, %v3199
    %v3473 = vmul.f32 %v3454, %v3199
    %v3474 = vmul.f32 %v3458, %v3199
    %v3475 = vadd.f32 %v3055, %v3459
    %v3476 = vadd.f32 %v3056, %v3460
    %v3477 = vadd.f32 %v3057, %v3461
    %v3478 = vadd.f32 %v3058, %v3462
    %v3479 = vadd.f32 %v3059, %v3463
    %v3480 = vadd.f32 %v3060, %v3464
    %v3481 = vadd.f32 %v3061, %v3465
    %v3482 = vadd.f32 %v3062, %v3466
    %v3483 = vadd.f32 %v3063, %v3467
    %v3484 = vadd.f32 %v3064, %v3468
    %v3485 = vadd.f32 %v3065, %v3469
    %v3486 = vadd.f32 %v3066, %v3470
    %v3487 = vadd.f32 %v3067, %v3471
    %v3488 = vadd.f32 %v3068, %v3472
    %v3489 = vadd.f32 %v3069, %v3473
    %v3490 = vadd.f32 %v3070, %v3474
    %v3491 = vmax.f32 %v3475, -1.0
    %v3492 = vmax.f32 %v3476, -1.0
    %v3493 = vmax.f32 %v3477, -1.0
    %v3494 = vmax.f32 %v3478, -1.0
    %v3495 = vmax.f32 %v3479, -1.0
    %v3496 = vmax.f32 %v3480, -1.0
    %v3497 = vmax.f32 %v3481, -1.0
    %v3498 = vmax.f32 %v3482, -1.0
    %v3499 = vmax.f32 %v3483, -1.0
    %v3500 = vmax.f32 %v3484, -1.0
    %v3501 = vmax.f32 %v3485, -1.0
    %v3502 = vmax.f32 %v3486, -1.0
    %v3503 = vmax.f32 %v3487, -1.0
    %v3504 = vmax.f32 %v3488, -1.0
    %v3505 = vmax.f32 %v3489, -1.0
    %v3506 = vmax.f32 %v3490, -1.0
    %v3507 = vmin.f32 %v3491, 1.0
    %v3508 = vmin.f32 %v3492, 1.0
    %v3509 = vmin.f32 %v3493, 1.0
    %v3510 = vmin.f32 %v3494, 1.0
    %v3511 = vmin.f32 %v3495, 1.0
    %v3512 = vmin.f32 %v3496, 1.0
    %v3513 = vmin.f32 %v3497, 1.0
    %v3514 = vmin.f32 %v3498, 1.0
    %v3515 = vmin.f32 %v3499, 1.0
    %v3516 = vmin.f32 %v3500, 1.0
    %v3517 = vmin.f32 %v3501, 1.0
    %v3518 = vmin.f32 %v3502, 1.0
    %v3519 = vmin.f32 %v3503, 1.0
    %v3520 = vmin.f32 %v3504, 1.0
    %v3521 = vmin.f32 %v3505, 1.0
    %v3522 = vmin.f32 %v3506, 1.0
    %3523 = vst.msk [vmem:[#allocation15] sm:$0xff] %vm133, %v3507
    %3524 = vst.msk [vmem:[#allocation15 + $0x8] sm:$0xff] %vm133, %v3508
    %3525 = vst.msk [vmem:[#allocation15 + $0x10] sm:$0xff] %vm133, %v3509
    %3526 = vst.msk [vmem:[#allocation15 + $0x18] sm:$0xff] %vm133, %v3510
    %3527 = vst.msk [vmem:[#allocation15 + $0x20] sm:$0xff] %vm133, %v3511
    %3528 = vst.msk [vmem:[#allocation15 + $0x28] sm:$0xff] %vm133, %v3512
    %3529 = vst.msk [vmem:[#allocation15 + $0x30] sm:$0xff] %vm133, %v3513
    %3530 = vst.msk [vmem:[#allocation15 + $0x38] sm:$0xff] %vm133, %v3514
    %3531 = vst.msk [vmem:[#allocation15 + $0x40] sm:$0xff] %vm133, %v3515
    %3532 = vst.msk [vmem:[#allocation15 + $0x48] sm:$0xff] %vm133, %v3516
    %3533 = vst.msk [vmem:[#allocation15 + $0x50] sm:$0xff] %vm133, %v3517
    %3534 = vst.msk [vmem:[#allocation15 + $0x58] sm:$0xff] %vm133, %v3518
    %3535 = vst.msk [vmem:[#allocation15 + $0x60] sm:$0xff] %vm133, %v3519
    %3536 = vst.msk [vmem:[#allocation15 + $0x68] sm:$0xff] %vm133, %v3520
    %3537 = vst.msk [vmem:[#allocation15 + $0x70] sm:$0xff] %vm133, %v3521
    %3538 = vst.msk [vmem:[#allocation15 + $0x78] sm:$0xff] %vm133, %v3522
    %3539 = vst.msk [vmem:[#allocation13] sm:$0xf] %vm85, %v3368
    %v3540 = vld [vmem:[#allocation13] sm:$0xf]
    %v3541 = vld [vmem:[#allocation15] sm:$0xff]
    %v3542 = vld [vmem:[#allocation15 + $0x8] sm:$0xff]
    %v3543 = vld [vmem:[#allocation15 + $0x10] sm:$0xff]
    %v3544 = vld [vmem:[#allocation15 + $0x18] sm:$0xff]
    %v3545 = vld [vmem:[#allocation15 + $0x20] sm:$0xff]
    %v3546 = vld [vmem:[#allocation15 + $0x28] sm:$0xff]
    %v3547 = vld [vmem:[#allocation15 + $0x30] sm:$0xff]
    %v3548 = vld [vmem:[#allocation15 + $0x38] sm:$0xff]
    %v3549 = vld [vmem:[#allocation15 + $0x40] sm:$0xff]
    %v3550 = vld [vmem:[#allocation15 + $0x48] sm:$0xff]
    %v3551 = vld [vmem:[#allocation15 + $0x50] sm:$0xff]
    %v3552 = vld [vmem:[#allocation15 + $0x58] sm:$0xff]
    %v3553 = vld [vmem:[#allocation15 + $0x60] sm:$0xff]
    %v3554 = vld [vmem:[#allocation15 + $0x68] sm:$0xff]
    %v3555 = vld [vmem:[#allocation15 + $0x70] sm:$0xff]
    %v3556 = vld [vmem:[#allocation15 + $0x78] sm:$0xff]
    %v3558 = vsel %vm133, %v3540, 0
    %3560 = vmatprep.subr.mxu0 0.0
    %3561 = vmatpush1.msra.mxu0 0.0
    %3562 = vmatprep.subr.mxu0 0.0
    %3563 = vmatpush1.msra.mxu0 0.0
    %3564 = vmatprep.subr.mxu0 0.0
    %3565 = vmatpush1.msra.mxu0 0.0
    %3566 = vmatprep.subr.mxu0 0.0
    %3567 = vmatpush1.msra.mxu0 0.0
    %3568 = vmatprep.subr.mxu0 0.0
    %3569 = vmatpush1.msra.mxu0 0.0
    %3570 = vmatprep.subr.mxu0 0.0
    %3571 = vmatpush1.msra.mxu0 0.0
    %3572 = vmatprep.subr.mxu0 0.0
    %3573 = vmatpush1.msra.mxu0 0.0
    %3574 = vmatprep.subr.mxu0 0.0
    %3575 = vmatpush1.msra.mxu0 0.0
    %3576 = vmatprep.subr.mxu0 0.0
    %3577 = vmatpush1.msra.mxu0 0.0
    %3578 = vmatprep.subr.mxu0 0.0
    %3579 = vmatpush1.msra.mxu0 0.0
    %3580 = vmatprep.subr.mxu0 0.0
    %3581 = vmatpush1.msra.mxu0 0.0
    %3582 = vmatprep.subr.mxu0 0.0
    %3583 = vmatpush1.msra.mxu0 0.0
    %3584 = vmatprep.subr.mxu0 0.0
    %3585 = vmatpush1.msra.mxu0 %v109
    %3586 = vmatprep.subr.mxu0 0.0
    %3587 = vmatpush1.msra.mxu0 %v108
    %3588 = vmatprep.subr.mxu0 0.0
    %3589 = vmatpush1.msra.mxu0 %v107
    %3590 = vmatprep.subr.mxu0 0.0
    %3591 = vmatpush1.msra.mxu0 %v106
    %3592 = vmatprep.subr.mxu0 0.0
    %3593 = vmatpush2.msra.mxu0 0.0
    %3594 = vmatprep.subr.mxu0 0.0
    %3595 = vmatpush2.msra.mxu0 0.0
    %3596 = vmatprep.subr.mxu0 0.0
    %3597 = vmatpush2.msra.mxu0 0.0
    %3598 = vmatprep.subr.mxu0 0.0
    %3599 = vmatpush2.msra.mxu0 0.0
    %3600 = vmatprep.subr.mxu0 0.0
    %3601 = vmatpush2.msra.mxu0 0.0
    %3602 = vmatprep.subr.mxu0 0.0
    %3603 = vmatpush2.msra.mxu0 0.0
    %3604 = vmatprep.subr.mxu0 0.0
    %3605 = vmatpush2.msra.mxu0 0.0
    %3606 = vmatprep.subr.mxu0 0.0
    %3607 = vmatpush2.msra.mxu0 0.0
    %3608 = vmatprep.subr.mxu0 0.0
    %3609 = vmatpush2.msra.mxu0 0.0
    %3610 = vmatprep.subr.mxu0 0.0
    %3611 = vmatpush2.msra.mxu0 0.0
    %3612 = vmatprep.subr.mxu0 0.0
    %3613 = vmatpush2.msra.mxu0 0.0
    %3614 = vmatprep.subr.mxu0 0.0
    %3615 = vmatpush2.msra.mxu0 0.0
    %3616 = vmatprep.subr.mxu0 0.0
    %3617 = vmatpush2.msra.mxu0 0.0
    %3618 = vmatprep.subr.mxu0 0.0
    %3619 = vmatpush2.msra.mxu0 0.0
    %3620 = vmatprep.subr.mxu0 0.0
    %3621 = vmatpush2.msra.mxu0 0.0
    %3622 = vmatprep.subr.mxu0 0.0
    %3623 = vmatpush2.msra.mxu0 0.0
    %3624 = vmatprep.mubr.f32.mxu0 0.0
    %3625 = vmatmul.mubr.f32.gmra.mxu0 %v3558
    %v3626 = vpop.f32.mrf.mxu0
    %v3627 = vadd.f32 0.0, %v3626
    %v3628 = vpop.f32.mrf.mxu0
    %3629 = vdwg.mxu0
    %v3630 = vmul.f32 %v110, %v3541
    %v3631 = vmul.f32 %v111, %v3542
    %v3632 = vmul.f32 %v112, %v3543
    %v3633 = vmul.f32 %v113, %v3544
    %v3634 = vmul.f32 %v110, %v3545
    %v3635 = vmul.f32 %v111, %v3546
    %v3636 = vmul.f32 %v112, %v3547
    %v3637 = vmul.f32 %v113, %v3548
    %v3638 = vmul.f32 %v110, %v3549
    %v3639 = vmul.f32 %v111, %v3550
    %v3640 = vmul.f32 %v112, %v3551
    %v3641 = vmul.f32 %v113, %v3552
    %v3642 = vmul.f32 %v110, %v3553
    %v3643 = vmul.f32 %v111, %v3554
    %v3644 = vmul.f32 %v112, %v3555
    %v3645 = vmul.f32 %v113, %v3556
    %v3647 = vunpack.c.l.s4 1966171168
    %v3648 = vunpack.c.0.s8 %v3647
    %v3649 = vlaneseq
    %v3650 = vshrl.u32 %v3649, 7
    %v3651 = vsub.s32 %v3648, %v3650
    %v3652 = vrot.slane %v3540, %v3651
    %v3653 = vcombine.high %v3652, %v3652
    %v3655 = vunpack.c.l.s4 1966171168
    %v3656 = vunpack.c.0.s8 %v3655
    %v3657 = vlaneseq
    %v3658 = vshrl.u32 %v3657, 7
    %v3659 = vsub.s32 %v3656, %v3658
    %v3660 = vrot.slane %v3652, %v3659
    %v3662 = vunpack.c.l.s4 1966171168
    %v3663 = vunpack.c.0.s8 %v3662
    %v3664 = vlaneseq
    %v3665 = vshrl.u32 %v3664, 7
    %v3666 = vsub.s32 %v3663, %v3665
    %v3667 = vrot.slane %v3653, %v3666
    %v3668 = vcombine.high %v3660, %v3660
    %v3669 = vcombine.high %v3667, %v3667
    %v3670 = vlaneseq
    %v3671 = vshrl.u32 %v3670, 7
    %v3672 = vsub.s32 0, %v3671
    %v3673 = vrot.slane %v3660, %v3672
    %v3674 = vlaneseq
    %v3675 = vshrl.u32 %v3674, 7
    %v3676 = vsub.s32 0, %v3675
    %v3677 = vrot.slane %v3667, %v3676
    %v3678 = vlaneseq
    %v3679 = vshrl.u32 %v3678, 7
    %v3680 = vsub.s32 0, %v3679
    %v3681 = vrot.slane %v3668, %v3680
    %v3682 = vlaneseq
    %v3683 = vshrl.u32 %v3682, 7
    %v3684 = vsub.s32 0, %v3683
    %v3685 = vrot.slane %v3669, %v3684
    %v3690 = vmul.f32 %v3630, %v3673
    %v3691 = vmul.f32 %v3631, %v3673
    %v3692 = vmul.f32 %v3632, %v3673
    %v3693 = vmul.f32 %v3633, %v3673
    %v3694 = vmul.f32 %v3634, %v3677
    %v3695 = vmul.f32 %v3635, %v3677
    %v3696 = vmul.f32 %v3636, %v3677
    %v3697 = vmul.f32 %v3637, %v3677
    %v3698 = vmul.f32 %v3638, %v3681
    %v3699 = vmul.f32 %v3639, %v3681
    %v3700 = vmul.f32 %v3640, %v3681
    %v3701 = vmul.f32 %v3641, %v3681
    %v3702 = vmul.f32 %v3642, %v3685
    %v3703 = vmul.f32 %v3643, %v3685
    %v3704 = vmul.f32 %v3644, %v3685
    %v3705 = vmul.f32 %v3645, %v3685
    %v3706 = vsel %vm133, %v3690, 0.0
    %3707 = vadd.xlane.f32.xlu0 %v3706
    %v3708 = vpop.xlane.xlu0 %3707
    %v3709 = vsel %vm133, %v3691, 0.0
    %3710 = vadd.xlane.f32.xlu0 %v3709
    %v3711 = vpop.xlane.xlu0 %3710
    %v3712 = vsel %vm133, %v3692, 0.0
    %3713 = vadd.xlane.f32.xlu0 %v3712
    %v3714 = vpop.xlane.xlu0 %3713
    %v3715 = vsel %vm133, %v3693, 0.0
    %3716 = vadd.xlane.f32.xlu0 %v3715
    %v3717 = vpop.xlane.xlu0 %3716
    %v3718 = vsel %vm133, %v3694, 0.0
    %3719 = vadd.xlane.f32.xlu0 %v3718
    %v3720 = vpop.xlane.xlu0 %3719
    %v3721 = vsel %vm133, %v3695, 0.0
    %3722 = vadd.xlane.f32.xlu0 %v3721
    %v3723 = vpop.xlane.xlu0 %3722
    %v3724 = vsel %vm133, %v3696, 0.0
    %3725 = vadd.xlane.f32.xlu0 %v3724
    %v3726 = vpop.xlane.xlu0 %3725
    %v3727 = vsel %vm133, %v3697, 0.0
    %3728 = vadd.xlane.f32.xlu0 %v3727
    %v3729 = vpop.xlane.xlu0 %3728
    %v3730 = vsel %vm133, %v3698, 0.0
    %3731 = vadd.xlane.f32.xlu0 %v3730
    %v3732 = vpop.xlane.xlu0 %3731
    %v3733 = vsel %vm133, %v3699, 0.0
    %3734 = vadd.xlane.f32.xlu0 %v3733
    %v3735 = vpop.xlane.xlu0 %3734
    %v3736 = vsel %vm133, %v3700, 0.0
    %3737 = vadd.xlane.f32.xlu0 %v3736
    %v3738 = vpop.xlane.xlu0 %3737
    %v3739 = vsel %vm133, %v3701, 0.0
    %3740 = vadd.xlane.f32.xlu0 %v3739
    %v3741 = vpop.xlane.xlu0 %3740
    %v3742 = vsel %vm133, %v3702, 0.0
    %3743 = vadd.xlane.f32.xlu0 %v3742
    %v3744 = vpop.xlane.xlu0 %3743
    %v3745 = vsel %vm133, %v3703, 0.0
    %3746 = vadd.xlane.f32.xlu0 %v3745
    %v3747 = vpop.xlane.xlu0 %3746
    %v3748 = vsel %vm133, %v3704, 0.0
    %3749 = vadd.xlane.f32.xlu0 %v3748
    %v3750 = vpop.xlane.xlu0 %3749
    %v3751 = vsel %vm133, %v3705, 0.0
    %3752 = vadd.xlane.f32.xlu0 %v3751
    %v3753 = vpop.xlane.xlu0 %3752
    %s3754 = scalar_lea.vmem [#allocation4], 28
    %v3755 = vld [vmem:[%s3754] sm:$0xf]
    %v3756 = vadd.f32 %v3755, %v3627
    %v3773 = vlaneseq
    %v3774 = vshrl.u32 %v3773, 7
    %v3775 = vsub.s32 %v350, %v3774
    %v3776 = vrot.slane %v3708, %v3775
    %v3777 = vlaneseq
    %v3778 = vshrl.u32 %v3777, 7
    %v3779 = vsub.s32 %v355, %v3778
    %v3780 = vrot.slane %v3711, %v3779
    %v3781 = vsel %vm360, %v3780, %v3776
    %v3782 = vlaneseq
    %v3783 = vshrl.u32 %v3782, 7
    %v3784 = vsub.s32 %v362, %v3783
    %v3785 = vrot.slane %v3714, %v3784
    %v3786 = vsel %vm367, %v3785, %v3781
    %v3787 = vlaneseq
    %v3788 = vshrl.u32 %v3787, 7
    %v3789 = vsub.s32 %v369, %v3788
    %v3790 = vrot.slane %v3717, %v3789
    %v3791 = vsel %vm374, %v3790, %v3786
    %v3792 = vlaneseq
    %v3793 = vshrl.u32 %v3792, 7
    %v3794 = vsub.s32 %v350, %v3793
    %v3795 = vrot.slane %v3720, %v3794
    %v3796 = vlaneseq
    %v3797 = vshrl.u32 %v3796, 7
    %v3798 = vsub.s32 %v355, %v3797
    %v3799 = vrot.slane %v3723, %v3798
    %v3800 = vsel %vm360, %v3799, %v3795
    %v3801 = vlaneseq
    %v3802 = vshrl.u32 %v3801, 7
    %v3803 = vsub.s32 %v362, %v3802
    %v3804 = vrot.slane %v3726, %v3803
    %v3805 = vsel %vm367, %v3804, %v3800
    %v3806 = vlaneseq
    %v3807 = vshrl.u32 %v3806, 7
    %v3808 = vsub.s32 %v369, %v3807
    %v3809 = vrot.slane %v3729, %v3808
    %v3810 = vsel %vm374, %v3809, %v3805
    %v3811 = vlaneseq
    %v3812 = vshrl.u32 %v3811, 7
    %v3813 = vsub.s32 %v350, %v3812
    %v3814 = vrot.slane %v3732, %v3813
    %v3815 = vlaneseq
    %v3816 = vshrl.u32 %v3815, 7
    %v3817 = vsub.s32 %v355, %v3816
    %v3818 = vrot.slane %v3735, %v3817
    %v3819 = vsel %vm360, %v3818, %v3814
    %v3820 = vlaneseq
    %v3821 = vshrl.u32 %v3820, 7
    %v3822 = vsub.s32 %v362, %v3821
    %v3823 = vrot.slane %v3738, %v3822
    %v3824 = vsel %vm367, %v3823, %v3819
    %v3825 = vlaneseq
    %v3826 = vshrl.u32 %v3825, 7
    %v3827 = vsub.s32 %v369, %v3826
    %v3828 = vrot.slane %v3741, %v3827
    %v3829 = vsel %vm374, %v3828, %v3824
    %v3830 = vlaneseq
    %v3831 = vshrl.u32 %v3830, 7
    %v3832 = vsub.s32 %v350, %v3831
    %v3833 = vrot.slane %v3744, %v3832
    %v3834 = vlaneseq
    %v3835 = vshrl.u32 %v3834, 7
    %v3836 = vsub.s32 %v355, %v3835
    %v3837 = vrot.slane %v3747, %v3836
    %v3838 = vsel %vm360, %v3837, %v3833
    %v3839 = vlaneseq
    %v3840 = vshrl.u32 %v3839, 7
    %v3841 = vsub.s32 %v362, %v3840
    %v3842 = vrot.slane %v3750, %v3841
    %v3843 = vsel %vm367, %v3842, %v3838
    %v3844 = vlaneseq
    %v3845 = vshrl.u32 %v3844, 7
    %v3846 = vsub.s32 %v369, %v3845
    %v3847 = vrot.slane %v3753, %v3846
    %v3848 = vsel %vm374, %v3847, %v3843
    %v3849 = vsel %vm433, %v3810, %v3791
    %v3850 = vsel %vm435, %v3829, %v3849
    %v3851 = vsel %vm437, %v3848, %v3850
    %v3853 = vadd.f32 %v3756, %v3851
    %v3854 = vtanh.pop %v3853
    %s3855 = scalar_lea.vmem [#allocation12], 28
    %3856 = vst.msk [vmem:[%s3855] sm:$0xf] %vm85, %v3854
    %v3857 = vmul.f32 %v3854, %v447
    %v3858 = vsel %vm85, %v3857, 0.0
    %3859 = vadd.xlane.f32.xlu0 %v3858
    %v3860 = vpop.xlane.xlu0 %3859
    %v3861 = vadd.f32 %v3860, %v457
    %v3862 = vtanh.pop %v3861
    %3864 = vset.pattern.permute.xlu0 0
    %3865 = vperm.xlu0 %3864, %v3862
    %v3866 = vpop.permute.xlu0 %3865
    %v3868 = vmul.f32 %v3866, %v3854
    %v3869 = vlaneseq
    %v3870 = vshrl.u32 %v3869, 7
    %v3871 = vsub.s32 0, %v3870
    %v3872 = vrot.slane %v3868, %v3871
    %3874 = vbcast.lane.b32.xlu0 %v3872, 256
    %v3875 = vpop.permute.xlu0 %3874
    %s3877 = sor.u32 256, 8
    %3878 = vbcast.lane.b32.xlu0 %v3872, %s3877
    %v3879 = vpop.permute.xlu0 %3878
    %s3881 = sor.u32 256, 16
    %3882 = vbcast.lane.b32.xlu0 %v3872, %s3881
    %v3883 = vpop.permute.xlu0 %3882
    %s3885 = sor.u32 256, 24
    %3886 = vbcast.lane.b32.xlu0 %v3872, %s3885
    %v3887 = vpop.permute.xlu0 %3886
    %v3888 = vlaneseq
    %v3889 = vshrl.u32 %v3888, 7
    %v3890 = vsub.s32 1, %v3889
    %v3891 = vrot.slane %v3868, %v3890
    %3893 = vbcast.lane.b32.xlu0 %v3891, 256
    %v3894 = vpop.permute.xlu0 %3893
    %s3896 = sor.u32 256, 8
    %3897 = vbcast.lane.b32.xlu0 %v3891, %s3896
    %v3898 = vpop.permute.xlu0 %3897
    %s3900 = sor.u32 256, 16
    %3901 = vbcast.lane.b32.xlu0 %v3891, %s3900
    %v3902 = vpop.permute.xlu0 %3901
    %s3904 = sor.u32 256, 24
    %3905 = vbcast.lane.b32.xlu0 %v3891, %s3904
    %v3906 = vpop.permute.xlu0 %3905
    %v3907 = vlaneseq
    %v3908 = vshrl.u32 %v3907, 7
    %v3909 = vsub.s32 2, %v3908
    %v3910 = vrot.slane %v3868, %v3909
    %3912 = vbcast.lane.b32.xlu0 %v3910, 256
    %v3913 = vpop.permute.xlu0 %3912
    %s3915 = sor.u32 256, 8
    %3916 = vbcast.lane.b32.xlu0 %v3910, %s3915
    %v3917 = vpop.permute.xlu0 %3916
    %s3919 = sor.u32 256, 16
    %3920 = vbcast.lane.b32.xlu0 %v3910, %s3919
    %v3921 = vpop.permute.xlu0 %3920
    %s3923 = sor.u32 256, 24
    %3924 = vbcast.lane.b32.xlu0 %v3910, %s3923
    %v3925 = vpop.permute.xlu0 %3924
    %v3926 = vlaneseq
    %v3927 = vshrl.u32 %v3926, 7
    %v3928 = vsub.s32 3, %v3927
    %v3929 = vrot.slane %v3868, %v3928
    %3931 = vbcast.lane.b32.xlu0 %v3929, 256
    %v3932 = vpop.permute.xlu0 %3931
    %s3934 = sor.u32 256, 8
    %3935 = vbcast.lane.b32.xlu0 %v3929, %s3934
    %v3936 = vpop.permute.xlu0 %3935
    %s3938 = sor.u32 256, 16
    %3939 = vbcast.lane.b32.xlu0 %v3929, %s3938
    %v3940 = vpop.permute.xlu0 %3939
    %s3942 = sor.u32 256, 24
    %3943 = vbcast.lane.b32.xlu0 %v3929, %s3942
    %v3944 = vpop.permute.xlu0 %3943
    %v3945 = vmul.f32 %v3875, %v3673
    %v3946 = vmul.f32 %v3879, %v3673
    %v3947 = vmul.f32 %v3883, %v3673
    %v3948 = vmul.f32 %v3887, %v3673
    %v3949 = vmul.f32 %v3894, %v3677
    %v3950 = vmul.f32 %v3898, %v3677
    %v3951 = vmul.f32 %v3902, %v3677
    %v3952 = vmul.f32 %v3906, %v3677
    %v3953 = vmul.f32 %v3913, %v3681
    %v3954 = vmul.f32 %v3917, %v3681
    %v3955 = vmul.f32 %v3921, %v3681
    %v3956 = vmul.f32 %v3925, %v3681
    %v3957 = vmul.f32 %v3932, %v3685
    %v3958 = vmul.f32 %v3936, %v3685
    %v3959 = vmul.f32 %v3940, %v3685
    %v3960 = vmul.f32 %v3944, %v3685
    %v3961 = vadd.f32 %v3541, %v3945
    %v3962 = vadd.f32 %v3542, %v3946
    %v3963 = vadd.f32 %v3543, %v3947
    %v3964 = vadd.f32 %v3544, %v3948
    %v3965 = vadd.f32 %v3545, %v3949
    %v3966 = vadd.f32 %v3546, %v3950
    %v3967 = vadd.f32 %v3547, %v3951
    %v3968 = vadd.f32 %v3548, %v3952
    %v3969 = vadd.f32 %v3549, %v3953
    %v3970 = vadd.f32 %v3550, %v3954
    %v3971 = vadd.f32 %v3551, %v3955
    %v3972 = vadd.f32 %v3552, %v3956
    %v3973 = vadd.f32 %v3553, %v3957
    %v3974 = vadd.f32 %v3554, %v3958
    %v3975 = vadd.f32 %v3555, %v3959
    %v3976 = vadd.f32 %v3556, %v3960
    %v3977 = vmax.f32 %v3961, -1.0
    %v3978 = vmax.f32 %v3962, -1.0
    %v3979 = vmax.f32 %v3963, -1.0
    %v3980 = vmax.f32 %v3964, -1.0
    %v3981 = vmax.f32 %v3965, -1.0
    %v3982 = vmax.f32 %v3966, -1.0
    %v3983 = vmax.f32 %v3967, -1.0
    %v3984 = vmax.f32 %v3968, -1.0
    %v3985 = vmax.f32 %v3969, -1.0
    %v3986 = vmax.f32 %v3970, -1.0
    %v3987 = vmax.f32 %v3971, -1.0
    %v3988 = vmax.f32 %v3972, -1.0
    %v3989 = vmax.f32 %v3973, -1.0
    %v3990 = vmax.f32 %v3974, -1.0
    %v3991 = vmax.f32 %v3975, -1.0
    %v3992 = vmax.f32 %v3976, -1.0
    %v3993 = vmin.f32 %v3977, 1.0
    %v3994 = vmin.f32 %v3978, 1.0
    %v3995 = vmin.f32 %v3979, 1.0
    %v3996 = vmin.f32 %v3980, 1.0
    %v3997 = vmin.f32 %v3981, 1.0
    %v3998 = vmin.f32 %v3982, 1.0
    %v3999 = vmin.f32 %v3983, 1.0
    %v4000 = vmin.f32 %v3984, 1.0
    %v4001 = vmin.f32 %v3985, 1.0
    %v4002 = vmin.f32 %v3986, 1.0
    %v4003 = vmin.f32 %v3987, 1.0
    %v4004 = vmin.f32 %v3988, 1.0
    %v4005 = vmin.f32 %v3989, 1.0
    %v4006 = vmin.f32 %v3990, 1.0
    %v4007 = vmin.f32 %v3991, 1.0
    %v4008 = vmin.f32 %v3992, 1.0
    %4009 = vst.msk [vmem:[#allocation15] sm:$0xff] %vm133, %v3993
    %4010 = vst.msk [vmem:[#allocation15 + $0x8] sm:$0xff] %vm133, %v3994
    %4011 = vst.msk [vmem:[#allocation15 + $0x10] sm:$0xff] %vm133, %v3995
    %4012 = vst.msk [vmem:[#allocation15 + $0x18] sm:$0xff] %vm133, %v3996
    %4013 = vst.msk [vmem:[#allocation15 + $0x20] sm:$0xff] %vm133, %v3997
    %4014 = vst.msk [vmem:[#allocation15 + $0x28] sm:$0xff] %vm133, %v3998
    %4015 = vst.msk [vmem:[#allocation15 + $0x30] sm:$0xff] %vm133, %v3999
    %4016 = vst.msk [vmem:[#allocation15 + $0x38] sm:$0xff] %vm133, %v4000
    %4017 = vst.msk [vmem:[#allocation15 + $0x40] sm:$0xff] %vm133, %v4001
    %4018 = vst.msk [vmem:[#allocation15 + $0x48] sm:$0xff] %vm133, %v4002
    %4019 = vst.msk [vmem:[#allocation15 + $0x50] sm:$0xff] %vm133, %v4003
    %4020 = vst.msk [vmem:[#allocation15 + $0x58] sm:$0xff] %vm133, %v4004
    %4021 = vst.msk [vmem:[#allocation15 + $0x60] sm:$0xff] %vm133, %v4005
    %4022 = vst.msk [vmem:[#allocation15 + $0x68] sm:$0xff] %vm133, %v4006
    %4023 = vst.msk [vmem:[#allocation15 + $0x70] sm:$0xff] %vm133, %v4007
    %4024 = vst.msk [vmem:[#allocation15 + $0x78] sm:$0xff] %vm133, %v4008
    %4025 = vst.msk [vmem:[#allocation13] sm:$0xf] %vm85, %v3854
    // Predicated region
    $region46: #{tpu_custom_call.1} parent=1 // pred_check
      _
    $region47: #{tpu_custom_call.1} parent=1 // pred_check_branch
      %4027 = sbr.rel (0) target = $region49
    $region48: #{tpu_custom_call.1} parent=1 // pred_region
      %s4029 = ssub.s32 512, 512
      %4030 = vsyncadd [#allocation6], %s4029
      %s4031 = sshll.u32 [#allocation12], 4
      %s4032 = int_to_ptr.vmem [resolvable:$true] %s4031
      %4037 = dma.vmem_to_hbm [thread:$0]  %s4032, 512, %s7, [#allocation6], 64, 64, 4
    $region49: #{tpu_custom_call.1} parent=1 // pred_fallthru
      _
    // Predicated region
    $region50: #{tpu_custom_call.1} parent=1 // pred_check
      _
    $region51: #{tpu_custom_call.1} parent=1 // pred_check_branch
      %4039 = sbr.rel (0) target = $region53
    $region52: #{tpu_custom_call.1} parent=1 // pred_region
      %s4041 = ssub.s32 64, 64
      %4042 = vsyncadd [#allocation14], %s4041
      %s4044 = sshll.u32 [#allocation13], 4
      %s4045 = int_to_ptr.vmem [resolvable:$true] %s4044
      %4047 = dma.vmem_to_hbm [thread:$0]  %s4045, 64, %s8, [#allocation14]
    $region53: #{tpu_custom_call.1} parent=1 // pred_fallthru
      _
    // Predicated region
    $region54: #{tpu_custom_call.1} parent=1 // pred_check
      _
    $region55: #{tpu_custom_call.1} parent=1 // pred_check_branch
      %4049 = sbr.rel (0) target = $region57
    $region56: #{tpu_custom_call.1} parent=1 // pred_region
      %s4051 = ssub.s32 2048, 2048
      %4052 = vsyncadd [#allocation14], %s4051
      %s4053 = sshll.u32 [#allocation15], 4
      %s4054 = int_to_ptr.vmem [resolvable:$true] %s4053
      %4059 = dma.vmem_to_hbm [thread:$0]  %s4054, 2048, %s9, [#allocation14], 128, 128, 8
    $region57: #{tpu_custom_call.1} parent=1 // pred_fallthru
      _
    // Predicated region
    $region58: #{tpu_custom_call.1} parent=1 // pred_check
      _
    $region59: #{tpu_custom_call.1} parent=1 // pred_check_branch
      %4061 = sbr.rel (0) target = $region61
    $region60: #{tpu_custom_call.1} parent=1 // pred_region
      %4062 = dma.done [#allocation6], 512
    $region61: #{tpu_custom_call.1} parent=1 // pred_fallthru
      _
    // Predicated region
    $region62: #{tpu_custom_call.1} parent=1 // pred_check
      _
    $region63: #{tpu_custom_call.1} parent=1 // pred_check_branch
      %4064 = sbr.rel (0) target = $region65
    $region64: #{tpu_custom_call.1} parent=1 // pred_region
      %4065 = dma.done [#allocation14], 64
    $region65: #{tpu_custom_call.1} parent=1 // pred_fallthru
      _
    // Predicated region
    $region66: #{tpu_custom_call.1} parent=1 // pred_check
      _
    $region67: #{tpu_custom_call.1} parent=1 // pred_check_branch
      %4067 = sbr.rel (0) target = $region69
    $region68: #{tpu_custom_call.1} parent=1 // pred_region
      %4068 = dma.done [#allocation14], 2048
    $region69: #{tpu_custom_call.1} parent=1 // pred_fallthru
      _
    %4069 = vsyncpa [#allocation5], 1
    %4070 = vsyncpa [#allocation8], 1
    %4071 = vsyncpa [#allocation11], 1
    %4072 = vsyncpa [#allocation6], 1
    %4073 = vsyncpa [#allocation14], 1
  %4074 = vsyncmov [#allocation2]
  %s4075 = vpop.sfrf %4074
  %p4076 = scmp.eq.s32.totalorder %s4075, 0
  %p4077 = pneg %p4076
  %4079 = shalt.err (%p4077)

</llo_original>
